<compile_context>
chip_gen: v6e
topology: v6e:2x2x1
jax: 0.10.0
libtpu: 0.0.40
codegen_flags: <defaults>
</compile_context>

<pallas_src>
import math
import functools

import jax
import jax.numpy as jnp
from jax import lax
from jax.experimental import pallas as pl
from jax.experimental.pallas import tpu as pltpu


MXU_DTYPE = jnp.bfloat16          # narrow MXU inputs (v5e/v6e/v7x); f32 accumulate
NEG_INF = -1e9
LN_EPS = 1e-6
VMEM_LIMIT = 32 * 1024 * 1024     # explicit, safe on v5e/v6e/v7x

_CPARAMS = pltpu.CompilerParams(
    dimension_semantics=("parallel",),
    vmem_limit_bytes=VMEM_LIMIT,
)


def _row_tile(m, target=256):
    """Largest row tile <= target that divides m and is a multiple of 8 (or full m)."""
    if m <= target:
        return m
    for tm in range(target, 7, -8):
        if tm % 8 == 0 and m % tm == 0:
            return tm
    return m


# ----------------------------------------------------------------------------
# In-kernel helpers (all math in f32 on the VPU/EUP)
# ----------------------------------------------------------------------------

def _ln_f32(x, g, b, eps=LN_EPS):
    # Annotated-Transformer LayerNorm: unbiased std (n-1), eps added to std (not var).
    d = x.shape[-1]
    mean = jnp.mean(x, axis=-1, keepdims=True)
    var = jnp.sum((x - mean) ** 2, axis=-1, keepdims=True) * (1.0 / (d - 1))
    inv = 1.0 / (jnp.sqrt(var) + eps)
    return g * (x - mean) * inv + b


# ----------------------------------------------------------------------------
# Fused attention sublayer kernel:  out = x + Wo(MHA(LN(x), kv, kv, mask)) per batch
# ----------------------------------------------------------------------------

def _attn_sublayer_kernel(*refs, num_heads, scale, self_attn):
    if self_attn:
        (x_ref, mask_ref, g_ref, beta_ref,
         wq_ref, bq_ref, wkv_ref, bkv_ref, wo_ref, bo_ref, o_ref) = refs
        kv_ref = None
    else:
        (x_ref, kv_ref, mask_ref, g_ref, beta_ref,
         wq_ref, bq_ref, wkv_ref, bkv_ref, wo_ref, bo_ref, o_ref) = refs

    x = x_ref[0].astype(jnp.float32)                      # (Tq, D)
    d_model = x.shape[-1]
    dk = d_model // num_heads

    # Pre-norm sublayer: normalize the query/residual input only.
    n = _ln_f32(x, g_ref[...], beta_ref[...])

    # Self-attn: K/V come from the same normalized x.  Cross-attn: memory is used raw.
    kv_src = n if self_attn else kv_ref[0].astype(jnp.float32)

    q = jnp.dot(n.astype(MXU_DTYPE), wq_ref[...],
                preferred_element_type=jnp.float32) + bq_ref[...]          # (Tq, D)
    kv = jnp.dot(kv_src.astype(MXU_DTYPE), wkv_ref[...],
                 preferred_element_type=jnp.float32) + bkv_ref[...]        # (Tk, 2D)

    tq = q.shape[0]
    tk = kv.shape[0]

    # Fold 1/sqrt(dk) into q (O(Tq*D) instead of O(h*Tq*Tk)).
    q_lo = (q * scale).astype(MXU_DTYPE)
    kv_lo = kv.astype(MXU_DTYPE)

    # Mask is (Mq, Tk) with Mq in {1, Tq}; broadcast once, reused by every head.
    keep = jnp.broadcast_to(mask_ref[0], (tq, tk)) > 0

    head_outs = []
    for i in range(num_heads):
        qh = q_lo[:, i * dk:(i + 1) * dk]                              # (Tq, dk)
        kh = kv_lo[:, i * dk:(i + 1) * dk]                             # (Tk, dk)
        vh = kv_lo[:, d_model + i * dk:d_model + (i + 1) * dk]         # (Tk, dk)
        # q @ k^T without an explicit transpose of k.
        s = lax.dot_general(qh, kh, (((1,), (1,)), ((), ())),
                            preferred_element_type=jnp.float32)        # (Tq, Tk)
        s = jnp.where(keep, s, NEG_INF)
        s = s - jnp.max(s, axis=-1, keepdims=True)
        p = jnp.exp(s)
        p = p * pl.reciprocal(jnp.sum(p, axis=-1, keepdims=True), approx=True)
        head_outs.append(jnp.dot(p.astype(MXU_DTYPE), vh,
                                 preferred_element_type=jnp.float32))  # (Tq, dk)
    attn = jnp.concatenate(head_outs, axis=-1)                         # (Tq, D)

    # Output projection + bias + residual, all fused into this kernel's epilogue.
    y = jnp.dot(attn.astype(MXU_DTYPE), wo_ref[...],
                preferred_element_type=jnp.float32) + bo_ref[...]
    o_ref[0] = (x + y).astype(o_ref.dtype)


def attention_sublayer(x, kv, mask, p, *, num_heads, self_attn):
    """x: (B, Tq, D) residual/query source; kv: (B, Tk, D) memory (cross only);
    mask: (B, Mq, Tk) with Mq in {1, Tq}; >0 = keep."""
    B, Tq, D = x.shape
    Mq, Tk = mask.shape[1], mask.shape[2]
    scale = 1.0 / math.sqrt(D // num_heads)

    b_map = lambda b: (b, 0, 0)
    const = lambda b: (0, 0)

    in_specs = [pl.BlockSpec((1, Tq, D), b_map)]
    operands = [x]
    if not self_attn:
        in_specs.append(pl.BlockSpec((1, Tk, D), b_map))
        operands.append(kv)
    in_specs += [
        pl.BlockSpec((1, Mq, Tk), b_map),
        pl.BlockSpec((1, D), const), pl.BlockSpec((1, D), const),      # LN gamma/beta
        pl.BlockSpec((D, D), const), pl.BlockSpec((1, D), const),      # Wq, bq
        pl.BlockSpec((D, 2 * D), const), pl.BlockSpec((1, 2 * D), const),  # fused Wkv, bkv
        pl.BlockSpec((D, D), const), pl.BlockSpec((1, D), const),      # Wo, bo
    ]
    operands += [
        mask,
        p["ln_g"].reshape(1, D), p["ln_b"].reshape(1, D),
        p["wq"], p["bq"].reshape(1, D),
        p["wkv"], p["bkv"].reshape(1, 2 * D),
        p["wo"], p["bo"].reshape(1, D),
    ]

    kernel = functools.partial(_attn_sublayer_kernel, num_heads=num_heads,
                               scale=scale, self_attn=self_attn)
    # TODO(synk): for production sequence lengths, tile Tk with an online-softmax
    # (flash) accumulator so the (Tq, Tk) score block fits v7x's 64 MiB VMEM.
    return pl.pallas_call(
        kernel,
        grid=(B,),
        in_specs=in_specs,
        out_specs=pl.BlockSpec((1, Tq, D), b_map),
        out_shape=jax.ShapeDtypeStruct((B, Tq, D), x.dtype),
        compiler_params=_CPARAMS,
    )(*operands)


# ----------------------------------------------------------------------------
# Fused FFN sublayer kernel:  out = x + W2(relu(W1(LN(x)) + b1)) + b2, row-tiled
# ----------------------------------------------------------------------------

def _ffn_sublayer_kernel(x_ref, g_ref, beta_ref, w1_ref, b1_ref, w2_ref, b2_ref, o_ref):
    x = x_ref[...].astype(jnp.float32)                                 # (tm, D)
    n = _ln_f32(x, g_ref[...], beta_ref[...])
    h1 = jnp.dot(n.astype(MXU_DTYPE), w1_ref[...],
                 preferred_element_type=jnp.float32) + b1_ref[...]
    h1 = jnp.maximum(h1, 0.0)
    y = jnp.dot(h1.astype(MXU_DTYPE), w2_ref[...],
                preferred_element_type=jnp.float32) + b2_ref[...]
    o_ref[...] = (x + y).astype(o_ref.dtype)


def ffn_sublayer(x, p):
    B, T, D = x.shape
    M = B * T
    d_ff = p["w1"].shape[1]
    tm = _row_tile(M)
    const = lambda i: (0, 0)
    y = pl.pallas_call(
        _ffn_sublayer_kernel,
        grid=(M // tm,),
        in_specs=[
            pl.BlockSpec((tm, D), lambda i: (i, 0)),
            pl.BlockSpec((1, D), const), pl.BlockSpec((1, D), const),
            pl.BlockSpec((D, d_ff), const), pl.BlockSpec((1, d_ff), const),
            pl.BlockSpec((d_ff, D), const), pl.BlockSpec((1, D), const),
        ],
        out_specs=pl.BlockSpec((tm, D), lambda i: (i, 0)),
        out_shape=jax.ShapeDtypeStruct((M, D), x.dtype),
        compiler_params=_CPARAMS,
    )(x.reshape(M, D),
      p["ln_g"].reshape(1, D), p["ln_b"].reshape(1, D),
      p["w1"], p["b1"].reshape(1, d_ff),
      p["w2"], p["b2"].reshape(1, D))
    return y.reshape(B, T, D)


# ----------------------------------------------------------------------------
# Final LayerNorm (encoder / decoder stack output), row-tiled
# ----------------------------------------------------------------------------

def _layernorm_kernel(x_ref, g_ref, b_ref, o_ref):
    x = x_ref[...].astype(jnp.float32)
    o_ref[...] = _ln_f32(x, g_ref[...], b_ref[...]).astype(o_ref.dtype)


def layer_norm(x, p):
    B, T, D = x.shape
    M = B * T
    tm = _row_tile(M)
    const = lambda i: (0, 0)
    y = pl.pallas_call(
        _layernorm_kernel,
        grid=(M // tm,),
        in_specs=[pl.BlockSpec((tm, D), lambda i: (i, 0)),
                  pl.BlockSpec((1, D), const), pl.BlockSpec((1, D), const)],
        out_specs=pl.BlockSpec((tm, D), lambda i: (i, 0)),
        out_shape=jax.ShapeDtypeStruct((M, D), x.dtype),
        compiler_params=_CPARAMS,
    )(x.reshape(M, D), p["g"].reshape(1, D), p["b"].reshape(1, D))
    return y.reshape(B, T, D)


# ----------------------------------------------------------------------------
# Glue (plain JAX): embeddings, positional encoding, layer wiring
# ----------------------------------------------------------------------------

def positional_encoding(max_len, d_model):
    pos = jnp.arange(max_len, dtype=jnp.float32)[:, None]
    div = jnp.exp(jnp.arange(0, d_model, 2, dtype=jnp.float32) * (-math.log(10000.0) / d_model))
    pe = jnp.zeros((max_len, d_model), jnp.float32)
    pe = pe.at[:, 0::2].set(jnp.sin(pos * div))
    pe = pe.at[:, 1::2].set(jnp.cos(pos * div))
    return pe


def embed(emb_table, tokens, pe, d_model):
    # TODO(synk): token gather + PE add kept as plain-JAX glue (cheap, gather-bound).
    x = jnp.take(emb_table, tokens, axis=0) * math.sqrt(d_model)
    T = tokens.shape[1]
    return x + pe[None, :T, :]
    # Dropout in src_embed / sublayers is identity at inference time.


def encoder_layer(p, x, src_mask, h):
    x = attention_sublayer(x, None, src_mask, p["self_attn"], num_heads=h, self_attn=True)
    x = ffn_sublayer(x, p["ffn"])
    return x


def decoder_layer(p, x, memory, src_mask, tgt_mask, h):
    x = attention_sublayer(x, None, tgt_mask, p["self_attn"], num_heads=h, self_attn=True)
    x = attention_sublayer(x, memory, src_mask, p["cross_attn"], num_heads=h, self_attn=False)
    x = ffn_sublayer(x, p["ffn"])
    return x


def encode(params, pe, src, src_mask, d_model, h):
    x = embed(params["src_emb"], src, pe, d_model)
    for lp in params["enc_layers"]:
        x = encoder_layer(lp, x, src_mask, h)
    return layer_norm(x, params["enc_norm"])


def decode(params, pe, memory, src_mask, tgt, tgt_mask, d_model, h):
    x = embed(params["tgt_emb"], tgt, pe, d_model)
    for lp in params["dec_layers"]:
        x = decoder_layer(lp, x, memory, src_mask, tgt_mask, h)
    return layer_norm(x, params["dec_norm"])


def encoder_decoder_forward(params, pe, src, tgt, src_mask, tgt_mask, *, d_model, h):
    """EncoderDecoder.forward: decode(encode(src, src_mask), src_mask, tgt, tgt_mask)."""
    memory = encode(params, pe, src, src_mask, d_model, h)
    return decode(params, pe, memory, src_mask, tgt, tgt_mask, d_model, h)


# TODO(synk): the `generator` (Linear + log_softmax) is a member of EncoderDecoder but is
# never invoked in its forward(); it is therefore intentionally not part of this kernel path.


# ----------------------------------------------------------------------------
# Deterministic parameter initialization (matmul weights stored in bf16 for the MXU)
# ----------------------------------------------------------------------------

def init_params(key, src_vocab, tgt_vocab, d_model, d_ff, h, N):
    kit = iter(jax.random.split(key, 512))

    def lin(din, dout):
        k1, k2 = jax.random.split(next(kit))
        lim = 1.0 / math.sqrt(din)
        w = jax.random.uniform(k1, (din, dout), jnp.float32, -lim, lim).astype(MXU_DTYPE)
        b = jax.random.uniform(k2, (dout,), jnp.float32, -lim, lim)
        return w, b

    def attn_params():
        wq, bq = lin(d_model, d_model)
        wk, bk = lin(d_model, d_model)
        wv, bv = lin(d_model, d_model)
        wo, bo = lin(d_model, d_model)
        return {
            "wq": wq, "bq": bq,
            "wkv": jnp.concatenate([wk, wv], axis=1),    # fused K/V projection
            "bkv": jnp.concatenate([bk, bv], axis=0),
            "wo": wo, "bo": bo,
            "ln_g": jnp.ones((d_model,), jnp.float32),
            "ln_b": jnp.zeros((d_model,), jnp.float32),
        }

    def ffn_params():
        w1, b1 = lin(d_model, d_ff)
        w2, b2 = lin(d_ff, d_model)
        return {"w1": w1, "b1": b1, "w2": w2, "b2": b2,
                "ln_g": jnp.ones((d_model,), jnp.float32),
                "ln_b": jnp.zeros((d_model,), jnp.float32)}

    def ln_params():
        return {"g": jnp.ones((d_model,), jnp.float32),
                "b": jnp.zeros((d_model,), jnp.float32)}

    return {
        "src_emb": jax.random.normal(next(kit), (src_vocab, d_model), jnp.float32),
        "tgt_emb": jax.random.normal(next(kit), (tgt_vocab, d_model), jnp.float32),
        "enc_layers": [{"self_attn": attn_params(), "ffn": ffn_params()} for _ in range(N)],
        "enc_norm": ln_params(),
        "dec_layers": [{"self_attn": attn_params(), "cross_attn": attn_params(),
                        "ffn": ffn_params()} for _ in range(N)],
        "dec_norm": ln_params(),
    }


# ----------------------------------------------------------------------------
# Main
# ----------------------------------------------------------------------------

if __name__ == "__main__":
    B, S_SRC, S_TGT = 2, 8, 8
    D_MODEL, D_FF, H, N_LAYERS = 32, 64, 4, 2
    SRC_VOCAB, TGT_VOCAB = 16, 16

    root = jax.random.PRNGKey(0)
    k_params, k_src, k_tgt = jax.random.split(root, 3)

    params = init_params(k_params, SRC_VOCAB, TGT_VOCAB, D_MODEL, D_FF, H, N_LAYERS)
    pe = positional_encoding(64, D_MODEL)

    src = jax.random.randint(k_src, (B, S_SRC), 0, SRC_VOCAB, dtype=jnp.int32)
    tgt = jax.random.randint(k_tgt, (B, S_TGT), 0, TGT_VOCAB, dtype=jnp.int32)

    src_mask = jnp.ones((B, 1, S_SRC), jnp.float32)                       # padding mask
    tgt_mask = jnp.tril(jnp.ones((S_TGT, S_TGT), jnp.float32))[None]      # subsequent mask
    tgt_mask = jnp.broadcast_to(tgt_mask, (B, S_TGT, S_TGT))

    fwd = jax.jit(functools.partial(encoder_decoder_forward, d_model=D_MODEL, h=H))
    out = fwd(params, pe, src, tgt, src_mask, tgt_mask)
    out = jax.block_until_ready(out)

    assert out.shape == (B, S_TGT, D_MODEL), out.shape
    assert bool(jnp.all(jnp.isfinite(out)))
    print("KERNEL_OK")
</pallas_src>

<mosaic_0001>
module attributes {stable_mosaic.version = 11 : i64} {
  func.func @_attn_sublayer_kernel(%arg0: i32, %arg1: memref<1x8x32xf32, #tpu.memory_space<vmem>>, %arg2: memref<1x8x8xf32, #tpu.memory_space<vmem>>, %arg3: memref<1x32xf32, #tpu.memory_space<vmem>>, %arg4: memref<1x32xf32, #tpu.memory_space<vmem>>, %arg5: memref<32x32xbf16, #tpu.memory_space<vmem>>, %arg6: memref<1x32xf32, #tpu.memory_space<vmem>>, %arg7: memref<32x64xbf16, #tpu.memory_space<vmem>>, %arg8: memref<1x64xf32, #tpu.memory_space<vmem>>, %arg9: memref<32x32xbf16, #tpu.memory_space<vmem>>, %arg10: memref<1x32xf32, #tpu.memory_space<vmem>>, %arg11: memref<1x8x32xf32, #tpu.memory_space<vmem>>) attributes {dimension_semantics = [#tpu.dimension_semantics<parallel>], iteration_bounds = array<i64: 2>, scalar_prefetch = 0 : i64, scratch_operands = 0 : i64, tpu.core_type = #tpu.core_type<tc>, window_params = [{transform_indices = @transform_0, window_bounds = array<i64: 1, 8, 32>}, {transform_indices = @transform_1, window_bounds = array<i64: 1, 8, 8>}, {pipeline_mode = #tpu.pipeline_mode<synchronous>, transform_indices = @transform_2, window_bounds = array<i64: 1, 32>}, {pipeline_mode = #tpu.pipeline_mode<synchronous>, transform_indices = @transform_3, window_bounds = array<i64: 1, 32>}, {pipeline_mode = #tpu.pipeline_mode<synchronous>, transform_indices = @transform_4, window_bounds = array<i64: 32, 32>}, {pipeline_mode = #tpu.pipeline_mode<synchronous>, transform_indices = @transform_5, window_bounds = array<i64: 1, 32>}, {pipeline_mode = #tpu.pipeline_mode<synchronous>, transform_indices = @transform_6, window_bounds = array<i64: 32, 64>}, {pipeline_mode = #tpu.pipeline_mode<synchronous>, transform_indices = @transform_7, window_bounds = array<i64: 1, 64>}, {pipeline_mode = #tpu.pipeline_mode<synchronous>, transform_indices = @transform_8, window_bounds = array<i64: 32, 32>}, {pipeline_mode = #tpu.pipeline_mode<synchronous>, transform_indices = @transform_9, window_bounds = array<i64: 1, 32>}, {transform_indices = @transform_10, window_bounds = array<i64: 1, 8, 32>}]} {
    %c0 = arith.constant 0 : index
    %c0_0 = arith.constant 0 : index
    %c0_1 = arith.constant 0 : index
    %0 = vector.load %arg1[%c0, %c0_0, %c0_1] : memref<1x8x32xf32, #tpu.memory_space<vmem>>, vector<1x8x32xf32>
    %1 = vector.shape_cast %0 : vector<1x8x32xf32> to vector<8x32xf32>
    %c0_2 = arith.constant 0 : index
    %c0_3 = arith.constant 0 : index
    %2 = vector.load %arg3[%c0_2, %c0_3] : memref<1x32xf32, #tpu.memory_space<vmem>>, vector<1x32xf32>
    %c0_4 = arith.constant 0 : index
    %c0_5 = arith.constant 0 : index
    %3 = vector.load %arg4[%c0_4, %c0_5] : memref<1x32xf32, #tpu.memory_space<vmem>>, vector<1x32xf32>
    %cst = arith.constant dense<0.000000e+00> : vector<8xf32>
    %4 = vector.multi_reduction <add>, %1, %cst [1] : vector<8x32xf32> to vector<8xf32>
    %5 = vector.shape_cast %4 : vector<8xf32> to vector<8x1xf32>
    %cst_6 = arith.constant 3.200000e+01 : f32
    %6 = vector.broadcast %cst_6 : f32 to vector<8x1xf32>
    %7 = arith.divf %5, %6 : vector<8x1xf32>
    %8 = vector.broadcast %7 : vector<8x1xf32> to vector<8x32xf32>
    %9 = arith.subf %1, %8 : vector<8x32xf32>
    %10 = arith.mulf %9, %9 : vector<8x32xf32>
    %cst_7 = arith.constant dense<0.000000e+00> : vector<8xf32>
    %11 = vector.multi_reduction <add>, %10, %cst_7 [1] : vector<8x32xf32> to vector<8xf32>
    %12 = vector.shape_cast %11 : vector<8xf32> to vector<8x1xf32>
    %cst_8 = arith.constant 0.0322580636 : f32
    %13 = vector.broadcast %cst_8 : f32 to vector<8x1xf32>
    %14 = arith.mulf %12, %13 : vector<8x1xf32>
    %15 = math.sqrt %14 : vector<8x1xf32>
    %cst_9 = arith.constant 9.99999997E-7 : f32
    %16 = vector.broadcast %cst_9 : f32 to vector<8x1xf32>
    %17 = arith.addf %15, %16 : vector<8x1xf32>
    %cst_10 = arith.constant 1.000000e+00 : f32
    %18 = vector.broadcast %cst_10 : f32 to vector<8x1xf32>
    %19 = arith.divf %18, %17 : vector<8x1xf32>
    %20 = vector.broadcast %7 : vector<8x1xf32> to vector<8x32xf32>
    %21 = arith.subf %1, %20 : vector<8x32xf32>
    %22 = vector.broadcast %2 : vector<1x32xf32> to vector<8x32xf32>
    %23 = arith.mulf %22, %21 : vector<8x32xf32>
    %24 = vector.broadcast %19 : vector<8x1xf32> to vector<8x32xf32>
    %25 = arith.mulf %23, %24 : vector<8x32xf32>
    %26 = vector.broadcast %3 : vector<1x32xf32> to vector<8x32xf32>
    %27 = arith.addf %25, %26 : vector<8x32xf32>
    %28 = arith.truncf %27 : vector<8x32xf32> to vector<8x32xbf16>
    %c0_11 = arith.constant 0 : index
    %c0_12 = arith.constant 0 : index
    %29 = vector.load %arg5[%c0_11, %c0_12] : memref<32x32xbf16, #tpu.memory_space<vmem>>, vector<32x32xbf16>
    %cst_13 = arith.constant dense<0.000000e+00> : vector<8x32xf32>
    %30 = tpu.matmul %28, %29, %cst_13 {dimension_numbers = #tpu.dot_dimension_numbers<[1], [0], [0], [1], [0, 0, 1, 1], [], []>} : vector<8x32xbf16>, vector<32x32xbf16>, vector<8x32xf32> -> vector<8x32xf32>
    %c0_14 = arith.constant 0 : index
    %c0_15 = arith.constant 0 : index
    %31 = vector.load %arg6[%c0_14, %c0_15] : memref<1x32xf32, #tpu.memory_space<vmem>>, vector<1x32xf32>
    %32 = vector.broadcast %31 : vector<1x32xf32> to vector<8x32xf32>
    %33 = arith.addf %30, %32 : vector<8x32xf32>
    %34 = arith.truncf %27 : vector<8x32xf32> to vector<8x32xbf16>
    %c0_16 = arith.constant 0 : index
    %c0_17 = arith.constant 0 : index
    %35 = vector.load %arg7[%c0_16, %c0_17] : memref<32x64xbf16, #tpu.memory_space<vmem>>, vector<32x64xbf16>
    %cst_18 = arith.constant dense<0.000000e+00> : vector<8x64xf32>
    %36 = tpu.matmul %34, %35, %cst_18 {dimension_numbers = #tpu.dot_dimension_numbers<[1], [0], [0], [1], [0, 0, 1, 1], [], []>} : vector<8x32xbf16>, vector<32x64xbf16>, vector<8x64xf32> -> vector<8x64xf32>
    %c0_19 = arith.constant 0 : index
    %c0_20 = arith.constant 0 : index
    %37 = vector.load %arg8[%c0_19, %c0_20] : memref<1x64xf32, #tpu.memory_space<vmem>>, vector<1x64xf32>
    %38 = vector.broadcast %37 : vector<1x64xf32> to vector<8x64xf32>
    %39 = arith.addf %36, %38 : vector<8x64xf32>
    %cst_21 = arith.constant 0.353553385 : f32
    %40 = vector.broadcast %cst_21 : f32 to vector<8x32xf32>
    %41 = arith.mulf %33, %40 : vector<8x32xf32>
    %42 = arith.truncf %41 : vector<8x32xf32> to vector<8x32xbf16>
    %43 = arith.truncf %39 : vector<8x64xf32> to vector<8x64xbf16>
    %c0_22 = arith.constant 0 : index
    %c0_23 = arith.constant 0 : index
    %c0_24 = arith.constant 0 : index
    %44 = vector.load %arg2[%c0_22, %c0_23, %c0_24] : memref<1x8x8xf32, #tpu.memory_space<vmem>>, vector<1x8x8xf32>
    %45 = vector.shape_cast %44 : vector<1x8x8xf32> to vector<8x8xf32>
    %cst_25 = arith.constant 0.000000e+00 : f32
    %46 = vector.broadcast %cst_25 : f32 to vector<8x8xf32>
    %47 = arith.cmpf ogt, %45, %46 : vector<8x8xf32>
    %48 = vector.extract_strided_slice %42 {offsets = [0, 0], sizes = [8, 8], strides = [1, 1]} : vector<8x32xbf16> to vector<8x8xbf16>
    %49 = vector.extract_strided_slice %43 {offsets = [0, 0], sizes = [8, 8], strides = [1, 1]} : vector<8x64xbf16> to vector<8x8xbf16>
    %50 = vector.extract_strided_slice %43 {offsets = [0, 32], sizes = [8, 8], strides = [1, 1]} : vector<8x64xbf16> to vector<8x8xbf16>
    %cst_26 = arith.constant dense<0.000000e+00> : vector<8x8xf32>
    %51 = tpu.matmul %48, %49, %cst_26 {dimension_numbers = #tpu.dot_dimension_numbers<[1], [1], [0], [0], [0, 0, 1, 0], [], []>} : vector<8x8xbf16>, vector<8x8xbf16>, vector<8x8xf32> -> vector<8x8xf32>
    %cst_27 = arith.constant -1.000000e+09 : f32
    %52 = vector.broadcast %cst_27 : f32 to vector<8x8xf32>
    %53 = arith.select %47, %51, %52 : vector<8x8xi1>, vector<8x8xf32>
    %cst_28 = arith.constant dense<0xFF800000> : vector<8xf32>
    %54 = vector.multi_reduction <maximumf>, %53, %cst_28 [1] : vector<8x8xf32> to vector<8xf32>
    %55 = vector.shape_cast %54 : vector<8xf32> to vector<8x1xf32>
    %56 = vector.broadcast %55 : vector<8x1xf32> to vector<8x8xf32>
    %57 = arith.subf %53, %56 : vector<8x8xf32>
    %58 = math.exp %57 : vector<8x8xf32>
    %cst_29 = arith.constant dense<0.000000e+00> : vector<8xf32>
    %59 = vector.multi_reduction <add>, %58, %cst_29 [1] : vector<8x8xf32> to vector<8xf32>
    %60 = vector.shape_cast %59 : vector<8xf32> to vector<8x1xf32>
    %61 = tpu.reciprocal %60 {approx = true} : vector<8x1xf32> -> vector<8x1xf32>
    %62 = vector.broadcast %61 : vector<8x1xf32> to vector<8x8xf32>
    %63 = arith.mulf %58, %62 : vector<8x8xf32>
    %64 = arith.truncf %63 : vector<8x8xf32> to vector<8x8xbf16>
    %cst_30 = arith.constant dense<0.000000e+00> : vector<8x8xf32>
    %65 = tpu.matmul %64, %50, %cst_30 {dimension_numbers = #tpu.dot_dimension_numbers<[1], [0], [0], [1], [0, 0, 1, 1], [], []>} : vector<8x8xbf16>, vector<8x8xbf16>, vector<8x8xf32> -> vector<8x8xf32>
    %66 = vector.extract_strided_slice %42 {offsets = [0, 8], sizes = [8, 8], strides = [1, 1]} : vector<8x32xbf16> to vector<8x8xbf16>
    %67 = vector.extract_strided_slice %43 {offsets = [0, 8], sizes = [8, 8], strides = [1, 1]} : vector<8x64xbf16> to vector<8x8xbf16>
    %68 = vector.extract_strided_slice %43 {offsets = [0, 40], sizes = [8, 8], strides = [1, 1]} : vector<8x64xbf16> to vector<8x8xbf16>
    %cst_31 = arith.constant dense<0.000000e+00> : vector<8x8xf32>
    %69 = tpu.matmul %66, %67, %cst_31 {dimension_numbers = #tpu.dot_dimension_numbers<[1], [1], [0], [0], [0, 0, 1, 0], [], []>} : vector<8x8xbf16>, vector<8x8xbf16>, vector<8x8xf32> -> vector<8x8xf32>
    %cst_32 = arith.constant -1.000000e+09 : f32
    %70 = vector.broadcast %cst_32 : f32 to vector<8x8xf32>
    %71 = arith.select %47, %69, %70 : vector<8x8xi1>, vector<8x8xf32>
    %cst_33 = arith.constant dense<0xFF800000> : vector<8xf32>
    %72 = vector.multi_reduction <maximumf>, %71, %cst_33 [1] : vector<8x8xf32> to vector<8xf32>
    %73 = vector.shape_cast %72 : vector<8xf32> to vector<8x1xf32>
    %74 = vector.broadcast %73 : vector<8x1xf32> to vector<8x8xf32>
    %75 = arith.subf %71, %74 : vector<8x8xf32>
    %76 = math.exp %75 : vector<8x8xf32>
    %cst_34 = arith.constant dense<0.000000e+00> : vector<8xf32>
    %77 = vector.multi_reduction <add>, %76, %cst_34 [1] : vector<8x8xf32> to vector<8xf32>
    %78 = vector.shape_cast %77 : vector<8xf32> to vector<8x1xf32>
    %79 = tpu.reciprocal %78 {approx = true} : vector<8x1xf32> -> vector<8x1xf32>
    %80 = vector.broadcast %79 : vector<8x1xf32> to vector<8x8xf32>
    %81 = arith.mulf %76, %80 : vector<8x8xf32>
    %82 = arith.truncf %81 : vector<8x8xf32> to vector<8x8xbf16>
    %cst_35 = arith.constant dense<0.000000e+00> : vector<8x8xf32>
    %83 = tpu.matmul %82, %68, %cst_35 {dimension_numbers = #tpu.dot_dimension_numbers<[1], [0], [0], [1], [0, 0, 1, 1], [], []>} : vector<8x8xbf16>, vector<8x8xbf16>, vector<8x8xf32> -> vector<8x8xf32>
    %84 = vector.extract_strided_slice %42 {offsets = [0, 16], sizes = [8, 8], strides = [1, 1]} : vector<8x32xbf16> to vector<8x8xbf16>
    %85 = vector.extract_strided_slice %43 {offsets = [0, 16], sizes = [8, 8], strides = [1, 1]} : vector<8x64xbf16> to vector<8x8xbf16>
    %86 = vector.extract_strided_slice %43 {offsets = [0, 48], sizes = [8, 8], strides = [1, 1]} : vector<8x64xbf16> to vector<8x8xbf16>
    %cst_36 = arith.constant dense<0.000000e+00> : vector<8x8xf32>
    %87 = tpu.matmul %84, %85, %cst_36 {dimension_numbers = #tpu.dot_dimension_numbers<[1], [1], [0], [0], [0, 0, 1, 0], [], []>} : vector<8x8xbf16>, vector<8x8xbf16>, vector<8x8xf32> -> vector<8x8xf32>
    %cst_37 = arith.constant -1.000000e+09 : f32
    %88 = vector.broadcast %cst_37 : f32 to vector<8x8xf32>
    %89 = arith.select %47, %87, %88 : vector<8x8xi1>, vector<8x8xf32>
    %cst_38 = arith.constant dense<0xFF800000> : vector<8xf32>
    %90 = vector.multi_reduction <maximumf>, %89, %cst_38 [1] : vector<8x8xf32> to vector<8xf32>
    %91 = vector.shape_cast %90 : vector<8xf32> to vector<8x1xf32>
    %92 = vector.broadcast %91 : vector<8x1xf32> to vector<8x8xf32>
    %93 = arith.subf %89, %92 : vector<8x8xf32>
    %94 = math.exp %93 : vector<8x8xf32>
    %cst_39 = arith.constant dense<0.000000e+00> : vector<8xf32>
    %95 = vector.multi_reduction <add>, %94, %cst_39 [1] : vector<8x8xf32> to vector<8xf32>
    %96 = vector.shape_cast %95 : vector<8xf32> to vector<8x1xf32>
    %97 = tpu.reciprocal %96 {approx = true} : vector<8x1xf32> -> vector<8x1xf32>
    %98 = vector.broadcast %97 : vector<8x1xf32> to vector<8x8xf32>
    %99 = arith.mulf %94, %98 : vector<8x8xf32>
    %100 = arith.truncf %99 : vector<8x8xf32> to vector<8x8xbf16>
    %cst_40 = arith.constant dense<0.000000e+00> : vector<8x8xf32>
    %101 = tpu.matmul %100, %86, %cst_40 {dimension_numbers = #tpu.dot_dimension_numbers<[1], [0], [0], [1], [0, 0, 1, 1], [], []>} : vector<8x8xbf16>, vector<8x8xbf16>, vector<8x8xf32> -> vector<8x8xf32>
    %102 = vector.extract_strided_slice %42 {offsets = [0, 24], sizes = [8, 8], strides = [1, 1]} : vector<8x32xbf16> to vector<8x8xbf16>
    %103 = vector.extract_strided_slice %43 {offsets = [0, 24], sizes = [8, 8], strides = [1, 1]} : vector<8x64xbf16> to vector<8x8xbf16>
    %104 = vector.extract_strided_slice %43 {offsets = [0, 56], sizes = [8, 8], strides = [1, 1]} : vector<8x64xbf16> to vector<8x8xbf16>
    %cst_41 = arith.constant dense<0.000000e+00> : vector<8x8xf32>
    %105 = tpu.matmul %102, %103, %cst_41 {dimension_numbers = #tpu.dot_dimension_numbers<[1], [1], [0], [0], [0, 0, 1, 0], [], []>} : vector<8x8xbf16>, vector<8x8xbf16>, vector<8x8xf32> -> vector<8x8xf32>
    %cst_42 = arith.constant -1.000000e+09 : f32
    %106 = vector.broadcast %cst_42 : f32 to vector<8x8xf32>
    %107 = arith.select %47, %105, %106 : vector<8x8xi1>, vector<8x8xf32>
    %cst_43 = arith.constant dense<0xFF800000> : vector<8xf32>
    %108 = vector.multi_reduction <maximumf>, %107, %cst_43 [1] : vector<8x8xf32> to vector<8xf32>
    %109 = vector.shape_cast %108 : vector<8xf32> to vector<8x1xf32>
    %110 = vector.broadcast %109 : vector<8x1xf32> to vector<8x8xf32>
    %111 = arith.subf %107, %110 : vector<8x8xf32>
    %112 = math.exp %111 : vector<8x8xf32>
    %cst_44 = arith.constant dense<0.000000e+00> : vector<8xf32>
    %113 = vector.multi_reduction <add>, %112, %cst_44 [1] : vector<8x8xf32> to vector<8xf32>
    %114 = vector.shape_cast %113 : vector<8xf32> to vector<8x1xf32>
    %115 = tpu.reciprocal %114 {approx = true} : vector<8x1xf32> -> vector<8x1xf32>
    %116 = vector.broadcast %115 : vector<8x1xf32> to vector<8x8xf32>
    %117 = arith.mulf %112, %116 : vector<8x8xf32>
    %118 = arith.truncf %117 : vector<8x8xf32> to vector<8x8xbf16>
    %cst_45 = arith.constant dense<0.000000e+00> : vector<8x8xf32>
    %119 = tpu.matmul %118, %104, %cst_45 {dimension_numbers = #tpu.dot_dimension_numbers<[1], [0], [0], [1], [0, 0, 1, 1], [], []>} : vector<8x8xbf16>, vector<8x8xbf16>, vector<8x8xf32> -> vector<8x8xf32>
    %120 = tpu.concatenate %65, %83, %101, %119 in 1 : vector<8x8xf32>, vector<8x8xf32>, vector<8x8xf32>, vector<8x8xf32> -> vector<8x32xf32>
    %121 = arith.truncf %120 : vector<8x32xf32> to vector<8x32xbf16>
    %c0_46 = arith.constant 0 : index
    %c0_47 = arith.constant 0 : index
    %122 = vector.load %arg9[%c0_46, %c0_47] : memref<32x32xbf16, #tpu.memory_space<vmem>>, vector<32x32xbf16>
    %cst_48 = arith.constant dense<0.000000e+00> : vector<8x32xf32>
    %123 = tpu.matmul %121, %122, %cst_48 {dimension_numbers = #tpu.dot_dimension_numbers<[1], [0], [0], [1], [0, 0, 1, 1], [], []>} : vector<8x32xbf16>, vector<32x32xbf16>, vector<8x32xf32> -> vector<8x32xf32>
    %c0_49 = arith.constant 0 : index
    %c0_50 = arith.constant 0 : index
    %124 = vector.load %arg10[%c0_49, %c0_50] : memref<1x32xf32, #tpu.memory_space<vmem>>, vector<1x32xf32>
    %125 = vector.broadcast %124 : vector<1x32xf32> to vector<8x32xf32>
    %126 = arith.addf %123, %125 : vector<8x32xf32>
    %127 = arith.addf %1, %126 : vector<8x32xf32>
    %c0_51 = arith.constant 0 : index
    %c0_52 = arith.constant 0 : index
    %c0_53 = arith.constant 0 : index
    %128 = vector.load %arg11[%c0_51, %c0_52, %c0_53] : memref<1x8x32xf32, #tpu.memory_space<vmem>>, vector<1x8x32xf32>
    %129 = vector.shape_cast %128 : vector<1x8x32xf32> to vector<8x32xf32>
    %130 = vector.shape_cast %127 : vector<8x32xf32> to vector<1x8x32xf32>
    tpu.vector_store %arg11[%c0_51, %c0_52, %c0_53], %130 {strides = array<i32>} : memref<1x8x32xf32, #tpu.memory_space<vmem>>, vector<1x8x32xf32>,
    return
  }
  func.func @transform_0(%arg0: i32) -> (i32, i32, i32) {
    %c0_i32 = arith.constant 0 : i32
    %c0_i32_0 = arith.constant 0 : i32
    %c0_i32_1 = arith.constant 0 : i32
    return %arg0, %c0_i32, %c0_i32_0 : i32, i32, i32
  }
  func.func @transform_1(%arg0: i32) -> (i32, i32, i32) {
    %c0_i32 = arith.constant 0 : i32
    %c0_i32_0 = arith.constant 0 : i32
    %c0_i32_1 = arith.constant 0 : i32
    return %arg0, %c0_i32, %c0_i32_0 : i32, i32, i32
  }
  func.func @transform_2(%arg0: i32) -> (i32, i32) {
    %c0_i32 = arith.constant 0 : i32
    %c0_i32_0 = arith.constant 0 : i32
    %c0_i32_1 = arith.constant 0 : i32
    return %c0_i32, %c0_i32_0 : i32, i32
  }
  func.func @transform_3(%arg0: i32) -> (i32, i32) {
    %c0_i32 = arith.constant 0 : i32
    %c0_i32_0 = arith.constant 0 : i32
    %c0_i32_1 = arith.constant 0 : i32
    return %c0_i32, %c0_i32_0 : i32, i32
  }
  func.func @transform_4(%arg0: i32) -> (i32, i32) {
    %c0_i32 = arith.constant 0 : i32
    %c0_i32_0 = arith.constant 0 : i32
    %c0_i32_1 = arith.constant 0 : i32
    return %c0_i32, %c0_i32_0 : i32, i32
  }
  func.func @transform_5(%arg0: i32) -> (i32, i32) {
    %c0_i32 = arith.constant 0 : i32
    %c0_i32_0 = arith.constant 0 : i32
    %c0_i32_1 = arith.constant 0 : i32
    return %c0_i32, %c0_i32_0 : i32, i32
  }
  func.func @transform_6(%arg0: i32) -> (i32, i32) {
    %c0_i32 = arith.constant 0 : i32
    %c0_i32_0 = arith.constant 0 : i32
    %c0_i32_1 = arith.constant 0 : i32
    return %c0_i32, %c0_i32_0 : i32, i32
  }
  func.func @transform_7(%arg0: i32) -> (i32, i32) {
    %c0_i32 = arith.constant 0 : i32
    %c0_i32_0 = arith.constant 0 : i32
    %c0_i32_1 = arith.constant 0 : i32
    return %c0_i32, %c0_i32_0 : i32, i32
  }
  func.func @transform_8(%arg0: i32) -> (i32, i32) {
    %c0_i32 = arith.constant 0 : i32
    %c0_i32_0 = arith.constant 0 : i32
    %c0_i32_1 = arith.constant 0 : i32
    return %c0_i32, %c0_i32_0 : i32, i32
  }
  func.func @transform_9(%arg0: i32) -> (i32, i32) {
    %c0_i32 = arith.constant 0 : i32
    %c0_i32_0 = arith.constant 0 : i32
    %c0_i32_1 = arith.constant 0 : i32
    return %c0_i32, %c0_i32_0 : i32, i32
  }
  func.func @transform_10(%arg0: i32) -> (i32, i32, i32) {
    %c0_i32 = arith.constant 0 : i32
    %c0_i32_0 = arith.constant 0 : i32
    %c0_i32_1 = arith.constant 0 : i32
    return %arg0, %c0_i32, %c0_i32_0 : i32, i32, i32
  }
}

module attributes {stable_mosaic.version = 11 : i64} {
  func.func @_attn_sublayer_kernel(%arg0: i32, %arg1: memref<1x8x32xf32, #tpu.memory_space<vmem>>, %arg2: memref<1x1x8xf32, #tpu.memory_space<vmem>>, %arg3: memref<1x32xf32, #tpu.memory_space<vmem>>, %arg4: memref<1x32xf32, #tpu.memory_space<vmem>>, %arg5: memref<32x32xbf16, #tpu.memory_space<vmem>>, %arg6: memref<1x32xf32, #tpu.memory_space<vmem>>, %arg7: memref<32x64xbf16, #tpu.memory_space<vmem>>, %arg8: memref<1x64xf32, #tpu.memory_space<vmem>>, %arg9: memref<32x32xbf16, #tpu.memory_space<vmem>>, %arg10: memref<1x32xf32, #tpu.memory_space<vmem>>, %arg11: memref<1x8x32xf32, #tpu.memory_space<vmem>>) attributes {dimension_semantics = [#tpu.dimension_semantics<parallel>], iteration_bounds = array<i64: 2>, scalar_prefetch = 0 : i64, scratch_operands = 0 : i64, tpu.core_type = #tpu.core_type<tc>, window_params = [{transform_indices = @transform_0, window_bounds = array<i64: 1, 8, 32>}, {transform_indices = @transform_1, window_bounds = array<i64: 1, 1, 8>}, {pipeline_mode = #tpu.pipeline_mode<synchronous>, transform_indices = @transform_2, window_bounds = array<i64: 1, 32>}, {pipeline_mode = #tpu.pipeline_mode<synchronous>, transform_indices = @transform_3, window_bounds = array<i64: 1, 32>}, {pipeline_mode = #tpu.pipeline_mode<synchronous>, transform_indices = @transform_4, window_bounds = array<i64: 32, 32>}, {pipeline_mode = #tpu.pipeline_mode<synchronous>, transform_indices = @transform_5, window_bounds = array<i64: 1, 32>}, {pipeline_mode = #tpu.pipeline_mode<synchronous>, transform_indices = @transform_6, window_bounds = array<i64: 32, 64>}, {pipeline_mode = #tpu.pipeline_mode<synchronous>, transform_indices = @transform_7, window_bounds = array<i64: 1, 64>}, {pipeline_mode = #tpu.pipeline_mode<synchronous>, transform_indices = @transform_8, window_bounds = array<i64: 32, 32>}, {pipeline_mode = #tpu.pipeline_mode<synchronous>, transform_indices = @transform_9, window_bounds = array<i64: 1, 32>}, {transform_indices = @transform_10, window_bounds = array<i64: 1, 8, 32>}]} {
    %c0 = arith.constant 0 : index
    %c0_0 = arith.constant 0 : index
    %c0_1 = arith.constant 0 : index
    %0 = vector.load %arg1[%c0, %c0_0, %c0_1] : memref<1x8x32xf32, #tpu.memory_space<vmem>>, vector<1x8x32xf32>
    %1 = vector.shape_cast %0 : vector<1x8x32xf32> to vector<8x32xf32>
    %c0_2 = arith.constant 0 : index
    %c0_3 = arith.constant 0 : index
    %2 = vector.load %arg3[%c0_2, %c0_3] : memref<1x32xf32, #tpu.memory_space<vmem>>, vector<1x32xf32>
    %c0_4 = arith.constant 0 : index
    %c0_5 = arith.constant 0 : index
    %3 = vector.load %arg4[%c0_4, %c0_5] : memref<1x32xf32, #tpu.memory_space<vmem>>, vector<1x32xf32>
    %cst = arith.constant dense<0.000000e+00> : vector<8xf32>
    %4 = vector.multi_reduction <add>, %1, %cst [1] : vector<8x32xf32> to vector<8xf32>
    %5 = vector.shape_cast %4 : vector<8xf32> to vector<8x1xf32>
    %cst_6 = arith.constant 3.200000e+01 : f32
    %6 = vector.broadcast %cst_6 : f32 to vector<8x1xf32>
    %7 = arith.divf %5, %6 : vector<8x1xf32>
    %8 = vector.broadcast %7 : vector<8x1xf32> to vector<8x32xf32>
    %9 = arith.subf %1, %8 : vector<8x32xf32>
    %10 = arith.mulf %9, %9 : vector<8x32xf32>
    %cst_7 = arith.constant dense<0.000000e+00> : vector<8xf32>
    %11 = vector.multi_reduction <add>, %10, %cst_7 [1] : vector<8x32xf32> to vector<8xf32>
    %12 = vector.shape_cast %11 : vector<8xf32> to vector<8x1xf32>
    %cst_8 = arith.constant 0.0322580636 : f32
    %13 = vector.broadcast %cst_8 : f32 to vector<8x1xf32>
    %14 = arith.mulf %12, %13 : vector<8x1xf32>
    %15 = math.sqrt %14 : vector<8x1xf32>
    %cst_9 = arith.constant 9.99999997E-7 : f32
    %16 = vector.broadcast %cst_9 : f32 to vector<8x1xf32>
    %17 = arith.addf %15, %16 : vector<8x1xf32>
    %cst_10 = arith.constant 1.000000e+00 : f32
    %18 = vector.broadcast %cst_10 : f32 to vector<8x1xf32>
    %19 = arith.divf %18, %17 : vector<8x1xf32>
    %20 = vector.broadcast %7 : vector<8x1xf32> to vector<8x32xf32>
    %21 = arith.subf %1, %20 : vector<8x32xf32>
    %22 = vector.broadcast %2 : vector<1x32xf32> to vector<8x32xf32>
    %23 = arith.mulf %22, %21 : vector<8x32xf32>
    %24 = vector.broadcast %19 : vector<8x1xf32> to vector<8x32xf32>
    %25 = arith.mulf %23, %24 : vector<8x32xf32>
    %26 = vector.broadcast %3 : vector<1x32xf32> to vector<8x32xf32>
    %27 = arith.addf %25, %26 : vector<8x32xf32>
    %28 = arith.truncf %27 : vector<8x32xf32> to vector<8x32xbf16>
    %c0_11 = arith.constant 0 : index
    %c0_12 = arith.constant 0 : index
    %29 = vector.load %arg5[%c0_11, %c0_12] : memref<32x32xbf16, #tpu.memory_space<vmem>>, vector<32x32xbf16>
    %cst_13 = arith.constant dense<0.000000e+00> : vector<8x32xf32>
    %30 = tpu.matmul %28, %29, %cst_13 {dimension_numbers = #tpu.dot_dimension_numbers<[1], [0], [0], [1], [0, 0, 1, 1], [], []>} : vector<8x32xbf16>, vector<32x32xbf16>, vector<8x32xf32> -> vector<8x32xf32>
    %c0_14 = arith.constant 0 : index
    %c0_15 = arith.constant 0 : index
    %31 = vector.load %arg6[%c0_14, %c0_15] : memref<1x32xf32, #tpu.memory_space<vmem>>, vector<1x32xf32>
    %32 = vector.broadcast %31 : vector<1x32xf32> to vector<8x32xf32>
    %33 = arith.addf %30, %32 : vector<8x32xf32>
    %34 = arith.truncf %27 : vector<8x32xf32> to vector<8x32xbf16>
    %c0_16 = arith.constant 0 : index
    %c0_17 = arith.constant 0 : index
    %35 = vector.load %arg7[%c0_16, %c0_17] : memref<32x64xbf16, #tpu.memory_space<vmem>>, vector<32x64xbf16>
    %cst_18 = arith.constant dense<0.000000e+00> : vector<8x64xf32>
    %36 = tpu.matmul %34, %35, %cst_18 {dimension_numbers = #tpu.dot_dimension_numbers<[1], [0], [0], [1], [0, 0, 1, 1], [], []>} : vector<8x32xbf16>, vector<32x64xbf16>, vector<8x64xf32> -> vector<8x64xf32>
    %c0_19 = arith.constant 0 : index
    %c0_20 = arith.constant 0 : index
    %37 = vector.load %arg8[%c0_19, %c0_20] : memref<1x64xf32, #tpu.memory_space<vmem>>, vector<1x64xf32>
    %38 = vector.broadcast %37 : vector<1x64xf32> to vector<8x64xf32>
    %39 = arith.addf %36, %38 : vector<8x64xf32>
    %cst_21 = arith.constant 0.353553385 : f32
    %40 = vector.broadcast %cst_21 : f32 to vector<8x32xf32>
    %41 = arith.mulf %33, %40 : vector<8x32xf32>
    %42 = arith.truncf %41 : vector<8x32xf32> to vector<8x32xbf16>
    %43 = arith.truncf %39 : vector<8x64xf32> to vector<8x64xbf16>
    %c0_22 = arith.constant 0 : index
    %c0_23 = arith.constant 0 : index
    %c0_24 = arith.constant 0 : index
    %44 = vector.load %arg2[%c0_22, %c0_23, %c0_24] : memref<1x1x8xf32, #tpu.memory_space<vmem>>, vector<1x1x8xf32>
    %45 = vector.shape_cast %44 : vector<1x1x8xf32> to vector<1x8xf32>
    %46 = vector.shape_cast %45 : vector<1x8xf32> to vector<1x8xf32>
    %47 = vector.broadcast %46 : vector<1x8xf32> to vector<8x8xf32>
    %cst_25 = arith.constant 0.000000e+00 : f32
    %48 = vector.broadcast %cst_25 : f32 to vector<8x8xf32>
    %49 = arith.cmpf ogt, %47, %48 : vector<8x8xf32>
    %50 = vector.extract_strided_slice %42 {offsets = [0, 0], sizes = [8, 8], strides = [1, 1]} : vector<8x32xbf16> to vector<8x8xbf16>
    %51 = vector.extract_strided_slice %43 {offsets = [0, 0], sizes = [8, 8], strides = [1, 1]} : vector<8x64xbf16> to vector<8x8xbf16>
    %52 = vector.extract_strided_slice %43 {offsets = [0, 32], sizes = [8, 8], strides = [1, 1]} : vector<8x64xbf16> to vector<8x8xbf16>
    %cst_26 = arith.constant dense<0.000000e+00> : vector<8x8xf32>
    %53 = tpu.matmul %50, %51, %cst_26 {dimension_numbers = #tpu.dot_dimension_numbers<[1], [1], [0], [0], [0, 0, 1, 0], [], []>} : vector<8x8xbf16>, vector<8x8xbf16>, vector<8x8xf32> -> vector<8x8xf32>
    %cst_27 = arith.constant -1.000000e+09 : f32
    %54 = vector.broadcast %cst_27 : f32 to vector<8x8xf32>
    %55 = arith.select %49, %53, %54 : vector<8x8xi1>, vector<8x8xf32>
    %cst_28 = arith.constant dense<0xFF800000> : vector<8xf32>
    %56 = vector.multi_reduction <maximumf>, %55, %cst_28 [1] : vector<8x8xf32> to vector<8xf32>
    %57 = vector.shape_cast %56 : vector<8xf32> to vector<8x1xf32>
    %58 = vector.broadcast %57 : vector<8x1xf32> to vector<8x8xf32>
    %59 = arith.subf %55, %58 : vector<8x8xf32>
    %60 = math.exp %59 : vector<8x8xf32>
    %cst_29 = arith.constant dense<0.000000e+00> : vector<8xf32>
    %61 = vector.multi_reduction <add>, %60, %cst_29 [1] : vector<8x8xf32> to vector<8xf32>
    %62 = vector.shape_cast %61 : vector<8xf32> to vector<8x1xf32>
    %63 = tpu.reciprocal %62 {approx = true} : vector<8x1xf32> -> vector<8x1xf32>
    %64 = vector.broadcast %63 : vector<8x1xf32> to vector<8x8xf32>
    %65 = arith.mulf %60, %64 : vector<8x8xf32>
    %66 = arith.truncf %65 : vector<8x8xf32> to vector<8x8xbf16>
    %cst_30 = arith.constant dense<0.000000e+00> : vector<8x8xf32>
    %67 = tpu.matmul %66, %52, %cst_30 {dimension_numbers = #tpu.dot_dimension_numbers<[1], [0], [0], [1], [0, 0, 1, 1], [], []>} : vector<8x8xbf16>, vector<8x8xbf16>, vector<8x8xf32> -> vector<8x8xf32>
    %68 = vector.extract_strided_slice %42 {offsets = [0, 8], sizes = [8, 8], strides = [1, 1]} : vector<8x32xbf16> to vector<8x8xbf16>
    %69 = vector.extract_strided_slice %43 {offsets = [0, 8], sizes = [8, 8], strides = [1, 1]} : vector<8x64xbf16> to vector<8x8xbf16>
    %70 = vector.extract_strided_slice %43 {offsets = [0, 40], sizes = [8, 8], strides = [1, 1]} : vector<8x64xbf16> to vector<8x8xbf16>
    %cst_31 = arith.constant dense<0.000000e+00> : vector<8x8xf32>
    %71 = tpu.matmul %68, %69, %cst_31 {dimension_numbers = #tpu.dot_dimension_numbers<[1], [1], [0], [0], [0, 0, 1, 0], [], []>} : vector<8x8xbf16>, vector<8x8xbf16>, vector<8x8xf32> -> vector<8x8xf32>
    %cst_32 = arith.constant -1.000000e+09 : f32
    %72 = vector.broadcast %cst_32 : f32 to vector<8x8xf32>
    %73 = arith.select %49, %71, %72 : vector<8x8xi1>, vector<8x8xf32>
    %cst_33 = arith.constant dense<0xFF800000> : vector<8xf32>
    %74 = vector.multi_reduction <maximumf>, %73, %cst_33 [1] : vector<8x8xf32> to vector<8xf32>
    %75 = vector.shape_cast %74 : vector<8xf32> to vector<8x1xf32>
    %76 = vector.broadcast %75 : vector<8x1xf32> to vector<8x8xf32>
    %77 = arith.subf %73, %76 : vector<8x8xf32>
    %78 = math.exp %77 : vector<8x8xf32>
    %cst_34 = arith.constant dense<0.000000e+00> : vector<8xf32>
    %79 = vector.multi_reduction <add>, %78, %cst_34 [1] : vector<8x8xf32> to vector<8xf32>
    %80 = vector.shape_cast %79 : vector<8xf32> to vector<8x1xf32>
    %81 = tpu.reciprocal %80 {approx = true} : vector<8x1xf32> -> vector<8x1xf32>
    %82 = vector.broadcast %81 : vector<8x1xf32> to vector<8x8xf32>
    %83 = arith.mulf %78, %82 : vector<8x8xf32>
    %84 = arith.truncf %83 : vector<8x8xf32> to vector<8x8xbf16>
    %cst_35 = arith.constant dense<0.000000e+00> : vector<8x8xf32>
    %85 = tpu.matmul %84, %70, %cst_35 {dimension_numbers = #tpu.dot_dimension_numbers<[1], [0], [0], [1], [0, 0, 1, 1], [], []>} : vector<8x8xbf16>, vector<8x8xbf16>, vector<8x8xf32> -> vector<8x8xf32>
    %86 = vector.extract_strided_slice %42 {offsets = [0, 16], sizes = [8, 8], strides = [1, 1]} : vector<8x32xbf16> to vector<8x8xbf16>
    %87 = vector.extract_strided_slice %43 {offsets = [0, 16], sizes = [8, 8], strides = [1, 1]} : vector<8x64xbf16> to vector<8x8xbf16>
    %88 = vector.extract_strided_slice %43 {offsets = [0, 48], sizes = [8, 8], strides = [1, 1]} : vector<8x64xbf16> to vector<8x8xbf16>
    %cst_36 = arith.constant dense<0.000000e+00> : vector<8x8xf32>
    %89 = tpu.matmul %86, %87, %cst_36 {dimension_numbers = #tpu.dot_dimension_numbers<[1], [1], [0], [0], [0, 0, 1, 0], [], []>} : vector<8x8xbf16>, vector<8x8xbf16>, vector<8x8xf32> -> vector<8x8xf32>
    %cst_37 = arith.constant -1.000000e+09 : f32
    %90 = vector.broadcast %cst_37 : f32 to vector<8x8xf32>
    %91 = arith.select %49, %89, %90 : vector<8x8xi1>, vector<8x8xf32>
    %cst_38 = arith.constant dense<0xFF800000> : vector<8xf32>
    %92 = vector.multi_reduction <maximumf>, %91, %cst_38 [1] : vector<8x8xf32> to vector<8xf32>
    %93 = vector.shape_cast %92 : vector<8xf32> to vector<8x1xf32>
    %94 = vector.broadcast %93 : vector<8x1xf32> to vector<8x8xf32>
    %95 = arith.subf %91, %94 : vector<8x8xf32>
    %96 = math.exp %95 : vector<8x8xf32>
    %cst_39 = arith.constant dense<0.000000e+00> : vector<8xf32>
    %97 = vector.multi_reduction <add>, %96, %cst_39 [1] : vector<8x8xf32> to vector<8xf32>
    %98 = vector.shape_cast %97 : vector<8xf32> to vector<8x1xf32>
    %99 = tpu.reciprocal %98 {approx = true} : vector<8x1xf32> -> vector<8x1xf32>
    %100 = vector.broadcast %99 : vector<8x1xf32> to vector<8x8xf32>
    %101 = arith.mulf %96, %100 : vector<8x8xf32>
    %102 = arith.truncf %101 : vector<8x8xf32> to vector<8x8xbf16>
    %cst_40 = arith.constant dense<0.000000e+00> : vector<8x8xf32>
    %103 = tpu.matmul %102, %88, %cst_40 {dimension_numbers = #tpu.dot_dimension_numbers<[1], [0], [0], [1], [0, 0, 1, 1], [], []>} : vector<8x8xbf16>, vector<8x8xbf16>, vector<8x8xf32> -> vector<8x8xf32>
    %104 = vector.extract_strided_slice %42 {offsets = [0, 24], sizes = [8, 8], strides = [1, 1]} : vector<8x32xbf16> to vector<8x8xbf16>
    %105 = vector.extract_strided_slice %43 {offsets = [0, 24], sizes = [8, 8], strides = [1, 1]} : vector<8x64xbf16> to vector<8x8xbf16>
    %106 = vector.extract_strided_slice %43 {offsets = [0, 56], sizes = [8, 8], strides = [1, 1]} : vector<8x64xbf16> to vector<8x8xbf16>
    %cst_41 = arith.constant dense<0.000000e+00> : vector<8x8xf32>
    %107 = tpu.matmul %104, %105, %cst_41 {dimension_numbers = #tpu.dot_dimension_numbers<[1], [1], [0], [0], [0, 0, 1, 0], [], []>} : vector<8x8xbf16>, vector<8x8xbf16>, vector<8x8xf32> -> vector<8x8xf32>
    %cst_42 = arith.constant -1.000000e+09 : f32
    %108 = vector.broadcast %cst_42 : f32 to vector<8x8xf32>
    %109 = arith.select %49, %107, %108 : vector<8x8xi1>, vector<8x8xf32>
    %cst_43 = arith.constant dense<0xFF800000> : vector<8xf32>
    %110 = vector.multi_reduction <maximumf>, %109, %cst_43 [1] : vector<8x8xf32> to vector<8xf32>
    %111 = vector.shape_cast %110 : vector<8xf32> to vector<8x1xf32>
    %112 = vector.broadcast %111 : vector<8x1xf32> to vector<8x8xf32>
    %113 = arith.subf %109, %112 : vector<8x8xf32>
    %114 = math.exp %113 : vector<8x8xf32>
    %cst_44 = arith.constant dense<0.000000e+00> : vector<8xf32>
    %115 = vector.multi_reduction <add>, %114, %cst_44 [1] : vector<8x8xf32> to vector<8xf32>
    %116 = vector.shape_cast %115 : vector<8xf32> to vector<8x1xf32>
    %117 = tpu.reciprocal %116 {approx = true} : vector<8x1xf32> -> vector<8x1xf32>
    %118 = vector.broadcast %117 : vector<8x1xf32> to vector<8x8xf32>
    %119 = arith.mulf %114, %118 : vector<8x8xf32>
    %120 = arith.truncf %119 : vector<8x8xf32> to vector<8x8xbf16>
    %cst_45 = arith.constant dense<0.000000e+00> : vector<8x8xf32>
    %121 = tpu.matmul %120, %106, %cst_45 {dimension_numbers = #tpu.dot_dimension_numbers<[1], [0], [0], [1], [0, 0, 1, 1], [], []>} : vector<8x8xbf16>, vector<8x8xbf16>, vector<8x8xf32> -> vector<8x8xf32>
    %122 = tpu.concatenate %67, %85, %103, %121 in 1 : vector<8x8xf32>, vector<8x8xf32>, vector<8x8xf32>, vector<8x8xf32> -> vector<8x32xf32>
    %123 = arith.truncf %122 : vector<8x32xf32> to vector<8x32xbf16>
    %c0_46 = arith.constant 0 : index
    %c0_47 = arith.constant 0 : index
    %124 = vector.load %arg9[%c0_46, %c0_47] : memref<32x32xbf16, #tpu.memory_space<vmem>>, vector<32x32xbf16>
    %cst_48 = arith.constant dense<0.000000e+00> : vector<8x32xf32>
    %125 = tpu.matmul %123, %124, %cst_48 {dimension_numbers = #tpu.dot_dimension_numbers<[1], [0], [0], [1], [0, 0, 1, 1], [], []>} : vector<8x32xbf16>, vector<32x32xbf16>, vector<8x32xf32> -> vector<8x32xf32>
    %c0_49 = arith.constant 0 : index
    %c0_50 = arith.constant 0 : index
    %126 = vector.load %arg10[%c0_49, %c0_50] : memref<1x32xf32, #tpu.memory_space<vmem>>, vector<1x32xf32>
    %127 = vector.broadcast %126 : vector<1x32xf32> to vector<8x32xf32>
    %128 = arith.addf %125, %127 : vector<8x32xf32>
    %129 = arith.addf %1, %128 : vector<8x32xf32>
    %c0_51 = arith.constant 0 : index
    %c0_52 = arith.constant 0 : index
    %c0_53 = arith.constant 0 : index
    %130 = vector.load %arg11[%c0_51, %c0_52, %c0_53] : memref<1x8x32xf32, #tpu.memory_space<vmem>>, vector<1x8x32xf32>
    %131 = vector.shape_cast %130 : vector<1x8x32xf32> to vector<8x32xf32>
    %132 = vector.shape_cast %129 : vector<8x32xf32> to vector<1x8x32xf32>
    tpu.vector_store %arg11[%c0_51, %c0_52, %c0_53], %132 {strides = array<i32>} : memref<1x8x32xf32, #tpu.memory_space<vmem>>, vector<1x8x32xf32>,
    return
  }
  func.func @transform_0(%arg0: i32) -> (i32, i32, i32) {
    %c0_i32 = arith.constant 0 : i32
    %c0_i32_0 = arith.constant 0 : i32
    %c0_i32_1 = arith.constant 0 : i32
    return %arg0, %c0_i32, %c0_i32_0 : i32, i32, i32
  }
  func.func @transform_1(%arg0: i32) -> (i32, i32, i32) {
    %c0_i32 = arith.constant 0 : i32
    %c0_i32_0 = arith.constant 0 : i32
    %c0_i32_1 = arith.constant 0 : i32
    return %arg0, %c0_i32, %c0_i32_0 : i32, i32, i32
  }
  func.func @transform_2(%arg0: i32) -> (i32, i32) {
    %c0_i32 = arith.constant 0 : i32
    %c0_i32_0 = arith.constant 0 : i32
    %c0_i32_1 = arith.constant 0 : i32
    return %c0_i32, %c0_i32_0 : i32, i32
  }
  func.func @transform_3(%arg0: i32) -> (i32, i32) {
    %c0_i32 = arith.constant 0 : i32
    %c0_i32_0 = arith.constant 0 : i32
    %c0_i32_1 = arith.constant 0 : i32
    return %c0_i32, %c0_i32_0 : i32, i32
  }
  func.func @transform_4(%arg0: i32) -> (i32, i32) {
    %c0_i32 = arith.constant 0 : i32
    %c0_i32_0 = arith.constant 0 : i32
    %c0_i32_1 = arith.constant 0 : i32
    return %c0_i32, %c0_i32_0 : i32, i32
  }
  func.func @transform_5(%arg0: i32) -> (i32, i32) {
    %c0_i32 = arith.constant 0 : i32
    %c0_i32_0 = arith.constant 0 : i32
    %c0_i32_1 = arith.constant 0 : i32
    return %c0_i32, %c0_i32_0 : i32, i32
  }
  func.func @transform_6(%arg0: i32) -> (i32, i32) {
    %c0_i32 = arith.constant 0 : i32
    %c0_i32_0 = arith.constant 0 : i32
    %c0_i32_1 = arith.constant 0 : i32
    return %c0_i32, %c0_i32_0 : i32, i32
  }
  func.func @transform_7(%arg0: i32) -> (i32, i32) {
    %c0_i32 = arith.constant 0 : i32
    %c0_i32_0 = arith.constant 0 : i32
    %c0_i32_1 = arith.constant 0 : i32
    return %c0_i32, %c0_i32_0 : i32, i32
  }
  func.func @transform_8(%arg0: i32) -> (i32, i32) {
    %c0_i32 = arith.constant 0 : i32
    %c0_i32_0 = arith.constant 0 : i32
    %c0_i32_1 = arith.constant 0 : i32
    return %c0_i32, %c0_i32_0 : i32, i32
  }
  func.func @transform_9(%arg0: i32) -> (i32, i32) {
    %c0_i32 = arith.constant 0 : i32
    %c0_i32_0 = arith.constant 0 : i32
    %c0_i32_1 = arith.constant 0 : i32
    return %c0_i32, %c0_i32_0 : i32, i32
  }
  func.func @transform_10(%arg0: i32) -> (i32, i32, i32) {
    %c0_i32 = arith.constant 0 : i32
    %c0_i32_0 = arith.constant 0 : i32
    %c0_i32_1 = arith.constant 0 : i32
    return %arg0, %c0_i32, %c0_i32_0 : i32, i32, i32
  }
}

module attributes {stable_mosaic.version = 11 : i64} {
  func.func @_ffn_sublayer_kernel(%arg0: i32, %arg1: memref<16x32xf32, #tpu.memory_space<vmem>>, %arg2: memref<1x32xf32, #tpu.memory_space<vmem>>, %arg3: memref<1x32xf32, #tpu.memory_space<vmem>>, %arg4: memref<32x64xbf16, #tpu.memory_space<vmem>>, %arg5: memref<1x64xf32, #tpu.memory_space<vmem>>, %arg6: memref<64x32xbf16, #tpu.memory_space<vmem>>, %arg7: memref<1x32xf32, #tpu.memory_space<vmem>>, %arg8: memref<16x32xf32, #tpu.memory_space<vmem>>) attributes {dimension_semantics = [#tpu.dimension_semantics<parallel>], iteration_bounds = array<i64: 1>, scalar_prefetch = 0 : i64, scratch_operands = 0 : i64, tpu.core_type = #tpu.core_type<tc>, window_params = [{transform_indices = @transform_0, window_bounds = array<i64: 16, 32>}, {pipeline_mode = #tpu.pipeline_mode<synchronous>, transform_indices = @transform_1, window_bounds = array<i64: 1, 32>}, {pipeline_mode = #tpu.pipeline_mode<synchronous>, transform_indices = @transform_2, window_bounds = array<i64: 1, 32>}, {pipeline_mode = #tpu.pipeline_mode<synchronous>, transform_indices = @transform_3, window_bounds = array<i64: 32, 64>}, {pipeline_mode = #tpu.pipeline_mode<synchronous>, transform_indices = @transform_4, window_bounds = array<i64: 1, 64>}, {pipeline_mode = #tpu.pipeline_mode<synchronous>, transform_indices = @transform_5, window_bounds = array<i64: 64, 32>}, {pipeline_mode = #tpu.pipeline_mode<synchronous>, transform_indices = @transform_6, window_bounds = array<i64: 1, 32>}, {transform_indices = @transform_7, window_bounds = array<i64: 16, 32>}]} {
    %c0 = arith.constant 0 : index
    %c0_0 = arith.constant 0 : index
    %0 = vector.load %arg1[%c0, %c0_0] : memref<16x32xf32, #tpu.memory_space<vmem>>, vector<16x32xf32>
    %c0_1 = arith.constant 0 : index
    %c0_2 = arith.constant 0 : index
    %1 = vector.load %arg2[%c0_1, %c0_2] : memref<1x32xf32, #tpu.memory_space<vmem>>, vector<1x32xf32>
    %c0_3 = arith.constant 0 : index
    %c0_4 = arith.constant 0 : index
    %2 = vector.load %arg3[%c0_3, %c0_4] : memref<1x32xf32, #tpu.memory_space<vmem>>, vector<1x32xf32>
    %cst = arith.constant dense<0.000000e+00> : vector<16xf32>
    %3 = vector.multi_reduction <add>, %0, %cst [1] : vector<16x32xf32> to vector<16xf32>
    %4 = vector.shape_cast %3 : vector<16xf32> to vector<16x1xf32>
    %cst_5 = arith.constant 3.200000e+01 : f32
    %5 = vector.broadcast %cst_5 : f32 to vector<16x1xf32>
    %6 = arith.divf %4, %5 : vector<16x1xf32>
    %7 = vector.broadcast %6 : vector<16x1xf32> to vector<16x32xf32>
    %8 = arith.subf %0, %7 : vector<16x32xf32>
    %9 = arith.mulf %8, %8 : vector<16x32xf32>
    %cst_6 = arith.constant dense<0.000000e+00> : vector<16xf32>
    %10 = vector.multi_reduction <add>, %9, %cst_6 [1] : vector<16x32xf32> to vector<16xf32>
    %11 = vector.shape_cast %10 : vector<16xf32> to vector<16x1xf32>
    %cst_7 = arith.constant 0.0322580636 : f32
    %12 = vector.broadcast %cst_7 : f32 to vector<16x1xf32>
    %13 = arith.mulf %11, %12 : vector<16x1xf32>
    %14 = math.sqrt %13 : vector<16x1xf32>
    %cst_8 = arith.constant 9.99999997E-7 : f32
    %15 = vector.broadcast %cst_8 : f32 to vector<16x1xf32>
    %16 = arith.addf %14, %15 : vector<16x1xf32>
    %cst_9 = arith.constant 1.000000e+00 : f32
    %17 = vector.broadcast %cst_9 : f32 to vector<16x1xf32>
    %18 = arith.divf %17, %16 : vector<16x1xf32>
    %19 = vector.broadcast %6 : vector<16x1xf32> to vector<16x32xf32>
    %20 = arith.subf %0, %19 : vector<16x32xf32>
    %21 = vector.broadcast %1 : vector<1x32xf32> to vector<16x32xf32>
    %22 = arith.mulf %21, %20 : vector<16x32xf32>
    %23 = vector.broadcast %18 : vector<16x1xf32> to vector<16x32xf32>
    %24 = arith.mulf %22, %23 : vector<16x32xf32>
    %25 = vector.broadcast %2 : vector<1x32xf32> to vector<16x32xf32>
    %26 = arith.addf %24, %25 : vector<16x32xf32>
    %27 = arith.truncf %26 : vector<16x32xf32> to vector<16x32xbf16>
    %c0_10 = arith.constant 0 : index
    %c0_11 = arith.constant 0 : index
    %28 = vector.load %arg4[%c0_10, %c0_11] : memref<32x64xbf16, #tpu.memory_space<vmem>>, vector<32x64xbf16>
    %cst_12 = arith.constant dense<0.000000e+00> : vector<16x64xf32>
    %29 = tpu.matmul %27, %28, %cst_12 {dimension_numbers = #tpu.dot_dimension_numbers<[1], [0], [0], [1], [0, 0, 1, 1], [], []>} : vector<16x32xbf16>, vector<32x64xbf16>, vector<16x64xf32> -> vector<16x64xf32>
    %c0_13 = arith.constant 0 : index
    %c0_14 = arith.constant 0 : index
    %30 = vector.load %arg5[%c0_13, %c0_14] : memref<1x64xf32, #tpu.memory_space<vmem>>, vector<1x64xf32>
    %31 = vector.broadcast %30 : vector<1x64xf32> to vector<16x64xf32>
    %32 = arith.addf %29, %31 : vector<16x64xf32>
    %cst_15 = arith.constant 0.000000e+00 : f32
    %33 = vector.broadcast %cst_15 : f32 to vector<16x64xf32>
    %34 = arith.maximumf %32, %33 : vector<16x64xf32>
    %35 = arith.truncf %34 : vector<16x64xf32> to vector<16x64xbf16>
    %c0_16 = arith.constant 0 : index
    %c0_17 = arith.constant 0 : index
    %36 = vector.load %arg6[%c0_16, %c0_17] : memref<64x32xbf16, #tpu.memory_space<vmem>>, vector<64x32xbf16>
    %cst_18 = arith.constant dense<0.000000e+00> : vector<16x32xf32>
    %37 = tpu.matmul %35, %36, %cst_18 {dimension_numbers = #tpu.dot_dimension_numbers<[1], [0], [0], [1], [0, 0, 1, 1], [], []>} : vector<16x64xbf16>, vector<64x32xbf16>, vector<16x32xf32> -> vector<16x32xf32>
    %c0_19 = arith.constant 0 : index
    %c0_20 = arith.constant 0 : index
    %38 = vector.load %arg7[%c0_19, %c0_20] : memref<1x32xf32, #tpu.memory_space<vmem>>, vector<1x32xf32>
    %39 = vector.broadcast %38 : vector<1x32xf32> to vector<16x32xf32>
    %40 = arith.addf %37, %39 : vector<16x32xf32>
    %41 = arith.addf %0, %40 : vector<16x32xf32>
    %c0_21 = arith.constant 0 : index
    %c0_22 = arith.constant 0 : index
    %42 = vector.load %arg8[%c0_21, %c0_22] : memref<16x32xf32, #tpu.memory_space<vmem>>, vector<16x32xf32>
    tpu.vector_store %arg8[%c0_21, %c0_22], %41 {strides = array<i32>} : memref<16x32xf32, #tpu.memory_space<vmem>>, vector<16x32xf32>,
    return
  }
  func.func @transform_0(%arg0: i32) -> (i32, i32) {
    %c0_i32 = arith.constant 0 : i32
    %c0_i32_0 = arith.constant 0 : i32
    return %arg0, %c0_i32 : i32, i32
  }
  func.func @transform_1(%arg0: i32) -> (i32, i32) {
    %c0_i32 = arith.constant 0 : i32
    %c0_i32_0 = arith.constant 0 : i32
    %c0_i32_1 = arith.constant 0 : i32
    return %c0_i32, %c0_i32_0 : i32, i32
  }
  func.func @transform_2(%arg0: i32) -> (i32, i32) {
    %c0_i32 = arith.constant 0 : i32
    %c0_i32_0 = arith.constant 0 : i32
    %c0_i32_1 = arith.constant 0 : i32
    return %c0_i32, %c0_i32_0 : i32, i32
  }
  func.func @transform_3(%arg0: i32) -> (i32, i32) {
    %c0_i32 = arith.constant 0 : i32
    %c0_i32_0 = arith.constant 0 : i32
    %c0_i32_1 = arith.constant 0 : i32
    return %c0_i32, %c0_i32_0 : i32, i32
  }
  func.func @transform_4(%arg0: i32) -> (i32, i32) {
    %c0_i32 = arith.constant 0 : i32
    %c0_i32_0 = arith.constant 0 : i32
    %c0_i32_1 = arith.constant 0 : i32
    return %c0_i32, %c0_i32_0 : i32, i32
  }
  func.func @transform_5(%arg0: i32) -> (i32, i32) {
    %c0_i32 = arith.constant 0 : i32
    %c0_i32_0 = arith.constant 0 : i32
    %c0_i32_1 = arith.constant 0 : i32
    return %c0_i32, %c0_i32_0 : i32, i32
  }
  func.func @transform_6(%arg0: i32) -> (i32, i32) {
    %c0_i32 = arith.constant 0 : i32
    %c0_i32_0 = arith.constant 0 : i32
    %c0_i32_1 = arith.constant 0 : i32
    return %c0_i32, %c0_i32_0 : i32, i32
  }
  func.func @transform_7(%arg0: i32) -> (i32, i32) {
    %c0_i32 = arith.constant 0 : i32
    %c0_i32_0 = arith.constant 0 : i32
    return %arg0, %c0_i32 : i32, i32
  }
}

module attributes {stable_mosaic.version = 11 : i64} {
  func.func @_layernorm_kernel(%arg0: i32, %arg1: memref<16x32xf32, #tpu.memory_space<vmem>>, %arg2: memref<1x32xf32, #tpu.memory_space<vmem>>, %arg3: memref<1x32xf32, #tpu.memory_space<vmem>>, %arg4: memref<16x32xf32, #tpu.memory_space<vmem>>) attributes {dimension_semantics = [#tpu.dimension_semantics<parallel>], iteration_bounds = array<i64: 1>, scalar_prefetch = 0 : i64, scratch_operands = 0 : i64, tpu.core_type = #tpu.core_type<tc>, window_params = [{transform_indices = @transform_0, window_bounds = array<i64: 16, 32>}, {pipeline_mode = #tpu.pipeline_mode<synchronous>, transform_indices = @transform_1, window_bounds = array<i64: 1, 32>}, {pipeline_mode = #tpu.pipeline_mode<synchronous>, transform_indices = @transform_2, window_bounds = array<i64: 1, 32>}, {transform_indices = @transform_3, window_bounds = array<i64: 16, 32>}]} {
    %c0 = arith.constant 0 : index
    %c0_0 = arith.constant 0 : index
    %0 = vector.load %arg1[%c0, %c0_0] : memref<16x32xf32, #tpu.memory_space<vmem>>, vector<16x32xf32>
    %c0_1 = arith.constant 0 : index
    %c0_2 = arith.constant 0 : index
    %1 = vector.load %arg2[%c0_1, %c0_2] : memref<1x32xf32, #tpu.memory_space<vmem>>, vector<1x32xf32>
    %c0_3 = arith.constant 0 : index
    %c0_4 = arith.constant 0 : index
    %2 = vector.load %arg3[%c0_3, %c0_4] : memref<1x32xf32, #tpu.memory_space<vmem>>, vector<1x32xf32>
    %cst = arith.constant dense<0.000000e+00> : vector<16xf32>
    %3 = vector.multi_reduction <add>, %0, %cst [1] : vector<16x32xf32> to vector<16xf32>
    %4 = vector.shape_cast %3 : vector<16xf32> to vector<16x1xf32>
    %cst_5 = arith.constant 3.200000e+01 : f32
    %5 = vector.broadcast %cst_5 : f32 to vector<16x1xf32>
    %6 = arith.divf %4, %5 : vector<16x1xf32>
    %7 = vector.broadcast %6 : vector<16x1xf32> to vector<16x32xf32>
    %8 = arith.subf %0, %7 : vector<16x32xf32>
    %9 = arith.mulf %8, %8 : vector<16x32xf32>
    %cst_6 = arith.constant dense<0.000000e+00> : vector<16xf32>
    %10 = vector.multi_reduction <add>, %9, %cst_6 [1] : vector<16x32xf32> to vector<16xf32>
    %11 = vector.shape_cast %10 : vector<16xf32> to vector<16x1xf32>
    %cst_7 = arith.constant 0.0322580636 : f32
    %12 = vector.broadcast %cst_7 : f32 to vector<16x1xf32>
    %13 = arith.mulf %11, %12 : vector<16x1xf32>
    %14 = math.sqrt %13 : vector<16x1xf32>
    %cst_8 = arith.constant 9.99999997E-7 : f32
    %15 = vector.broadcast %cst_8 : f32 to vector<16x1xf32>
    %16 = arith.addf %14, %15 : vector<16x1xf32>
    %cst_9 = arith.constant 1.000000e+00 : f32
    %17 = vector.broadcast %cst_9 : f32 to vector<16x1xf32>
    %18 = arith.divf %17, %16 : vector<16x1xf32>
    %19 = vector.broadcast %6 : vector<16x1xf32> to vector<16x32xf32>
    %20 = arith.subf %0, %19 : vector<16x32xf32>
    %21 = vector.broadcast %1 : vector<1x32xf32> to vector<16x32xf32>
    %22 = arith.mulf %21, %20 : vector<16x32xf32>
    %23 = vector.broadcast %18 : vector<16x1xf32> to vector<16x32xf32>
    %24 = arith.mulf %22, %23 : vector<16x32xf32>
    %25 = vector.broadcast %2 : vector<1x32xf32> to vector<16x32xf32>
    %26 = arith.addf %24, %25 : vector<16x32xf32>
    %c0_10 = arith.constant 0 : index
    %c0_11 = arith.constant 0 : index
    %27 = vector.load %arg4[%c0_10, %c0_11] : memref<16x32xf32, #tpu.memory_space<vmem>>, vector<16x32xf32>
    tpu.vector_store %arg4[%c0_10, %c0_11], %26 {strides = array<i32>} : memref<16x32xf32, #tpu.memory_space<vmem>>, vector<16x32xf32>,
    return
  }
  func.func @transform_0(%arg0: i32) -> (i32, i32) {
    %c0_i32 = arith.constant 0 : i32
    %c0_i32_0 = arith.constant 0 : i32
    return %arg0, %c0_i32 : i32, i32
  }
  func.func @transform_1(%arg0: i32) -> (i32, i32) {
    %c0_i32 = arith.constant 0 : i32
    %c0_i32_0 = arith.constant 0 : i32
    %c0_i32_1 = arith.constant 0 : i32
    return %c0_i32, %c0_i32_0 : i32, i32
  }
  func.func @transform_2(%arg0: i32) -> (i32, i32) {
    %c0_i32 = arith.constant 0 : i32
    %c0_i32_0 = arith.constant 0 : i32
    %c0_i32_1 = arith.constant 0 : i32
    return %c0_i32, %c0_i32_0 : i32, i32
  }
  func.func @transform_3(%arg0: i32) -> (i32, i32) {
    %c0_i32 = arith.constant 0 : i32
    %c0_i32_0 = arith.constant 0 : i32
    return %arg0, %c0_i32 : i32, i32
  }
}

module attributes {stable_mosaic.version = 11 : i64} {
  func.func @_layernorm_kernel(%arg0: i32, %arg1: memref<16x32xf32, #tpu.memory_space<vmem>>, %arg2: memref<1x32xf32, #tpu.memory_space<vmem>>, %arg3: memref<1x32xf32, #tpu.memory_space<vmem>>, %arg4: memref<16x32xf32, #tpu.memory_space<vmem>>) attributes {dimension_semantics = [#tpu.dimension_semantics<parallel>], iteration_bounds = array<i64: 1>, scalar_prefetch = 0 : i64, scratch_operands = 0 : i64, tpu.core_type = #tpu.core_type<tc>, window_params = [{transform_indices = @transform_0, window_bounds = array<i64: 16, 32>}, {pipeline_mode = #tpu.pipeline_mode<synchronous>, transform_indices = @transform_1, window_bounds = array<i64: 1, 32>}, {pipeline_mode = #tpu.pipeline_mode<synchronous>, transform_indices = @transform_2, window_bounds = array<i64: 1, 32>}, {transform_indices = @transform_3, window_bounds = array<i64: 16, 32>}]} {
    %c0 = arith.constant 0 : index
    %c0_0 = arith.constant 0 : index
    %0 = vector.load %arg1[%c0, %c0_0] : memref<16x32xf32, #tpu.memory_space<vmem>>, vector<16x32xf32>
    %c0_1 = arith.constant 0 : index
    %c0_2 = arith.constant 0 : index
    %1 = vector.load %arg2[%c0_1, %c0_2] : memref<1x32xf32, #tpu.memory_space<vmem>>, vector<1x32xf32>
    %c0_3 = arith.constant 0 : index
    %c0_4 = arith.constant 0 : index
    %2 = vector.load %arg3[%c0_3, %c0_4] : memref<1x32xf32, #tpu.memory_space<vmem>>, vector<1x32xf32>
    %cst = arith.constant dense<0.000000e+00> : vector<16xf32>
    %3 = vector.multi_reduction <add>, %0, %cst [1] : vector<16x32xf32> to vector<16xf32>
    %4 = vector.shape_cast %3 : vector<16xf32> to vector<16x1xf32>
    %cst_5 = arith.constant 3.200000e+01 : f32
    %5 = vector.broadcast %cst_5 : f32 to vector<16x1xf32>
    %6 = arith.divf %4, %5 : vector<16x1xf32>
    %7 = vector.broadcast %6 : vector<16x1xf32> to vector<16x32xf32>
    %8 = arith.subf %0, %7 : vector<16x32xf32>
    %9 = arith.mulf %8, %8 : vector<16x32xf32>
    %cst_6 = arith.constant dense<0.000000e+00> : vector<16xf32>
    %10 = vector.multi_reduction <add>, %9, %cst_6 [1] : vector<16x32xf32> to vector<16xf32>
    %11 = vector.shape_cast %10 : vector<16xf32> to vector<16x1xf32>
    %cst_7 = arith.constant 0.0322580636 : f32
    %12 = vector.broadcast %cst_7 : f32 to vector<16x1xf32>
    %13 = arith.mulf %11, %12 : vector<16x1xf32>
    %14 = math.sqrt %13 : vector<16x1xf32>
    %cst_8 = arith.constant 9.99999997E-7 : f32
    %15 = vector.broadcast %cst_8 : f32 to vector<16x1xf32>
    %16 = arith.addf %14, %15 : vector<16x1xf32>
    %cst_9 = arith.constant 1.000000e+00 : f32
    %17 = vector.broadcast %cst_9 : f32 to vector<16x1xf32>
    %18 = arith.divf %17, %16 : vector<16x1xf32>
    %19 = vector.broadcast %6 : vector<16x1xf32> to vector<16x32xf32>
    %20 = arith.subf %0, %19 : vector<16x32xf32>
    %21 = vector.broadcast %1 : vector<1x32xf32> to vector<16x32xf32>
    %22 = arith.mulf %21, %20 : vector<16x32xf32>
    %23 = vector.broadcast %18 : vector<16x1xf32> to vector<16x32xf32>
    %24 = arith.mulf %22, %23 : vector<16x32xf32>
    %25 = vector.broadcast %2 : vector<1x32xf32> to vector<16x32xf32>
    %26 = arith.addf %24, %25 : vector<16x32xf32>
    %c0_10 = arith.constant 0 : index
    %c0_11 = arith.constant 0 : index
    %27 = vector.load %arg4[%c0_10, %c0_11] : memref<16x32xf32, #tpu.memory_space<vmem>>, vector<16x32xf32>
    tpu.vector_store %arg4[%c0_10, %c0_11], %26 {strides = array<i32>} : memref<16x32xf32, #tpu.memory_space<vmem>>, vector<16x32xf32>,
    return
  }
  func.func @transform_0(%arg0: i32) -> (i32, i32) {
    %c0_i32 = arith.constant 0 : i32
    %c0_i32_0 = arith.constant 0 : i32
    return %arg0, %c0_i32 : i32, i32
  }
  func.func @transform_1(%arg0: i32) -> (i32, i32) {
    %c0_i32 = arith.constant 0 : i32
    %c0_i32_0 = arith.constant 0 : i32
    %c0_i32_1 = arith.constant 0 : i32
    return %c0_i32, %c0_i32_0 : i32, i32
  }
  func.func @transform_2(%arg0: i32) -> (i32, i32) {
    %c0_i32 = arith.constant 0 : i32
    %c0_i32_0 = arith.constant 0 : i32
    %c0_i32_1 = arith.constant 0 : i32
    return %c0_i32, %c0_i32_0 : i32, i32
  }
  func.func @transform_3(%arg0: i32) -> (i32, i32) {
    %c0_i32 = arith.constant 0 : i32
    %c0_i32_0 = arith.constant 0 : i32
    return %arg0, %c0_i32 : i32, i32
  }
}

module attributes {stable_mosaic.version = 11 : i64} {
  func.func @_attn_sublayer_kernel(%arg0: i32, %arg1: memref<1x8x32xf32, #tpu.memory_space<vmem>>, %arg2: memref<1x8x32xf32, #tpu.memory_space<vmem>>, %arg3: memref<1x1x8xf32, #tpu.memory_space<vmem>>, %arg4: memref<1x32xf32, #tpu.memory_space<vmem>>, %arg5: memref<1x32xf32, #tpu.memory_space<vmem>>, %arg6: memref<32x32xbf16, #tpu.memory_space<vmem>>, %arg7: memref<1x32xf32, #tpu.memory_space<vmem>>, %arg8: memref<32x64xbf16, #tpu.memory_space<vmem>>, %arg9: memref<1x64xf32, #tpu.memory_space<vmem>>, %arg10: memref<32x32xbf16, #tpu.memory_space<vmem>>, %arg11: memref<1x32xf32, #tpu.memory_space<vmem>>, %arg12: memref<1x8x32xf32, #tpu.memory_space<vmem>>) attributes {dimension_semantics = [#tpu.dimension_semantics<parallel>], iteration_bounds = array<i64: 2>, scalar_prefetch = 0 : i64, scratch_operands = 0 : i64, tpu.core_type = #tpu.core_type<tc>, window_params = [{transform_indices = @transform_0, window_bounds = array<i64: 1, 8, 32>}, {transform_indices = @transform_1, window_bounds = array<i64: 1, 8, 32>}, {transform_indices = @transform_2, window_bounds = array<i64: 1, 1, 8>}, {pipeline_mode = #tpu.pipeline_mode<synchronous>, transform_indices = @transform_3, window_bounds = array<i64: 1, 32>}, {pipeline_mode = #tpu.pipeline_mode<synchronous>, transform_indices = @transform_4, window_bounds = array<i64: 1, 32>}, {pipeline_mode = #tpu.pipeline_mode<synchronous>, transform_indices = @transform_5, window_bounds = array<i64: 32, 32>}, {pipeline_mode = #tpu.pipeline_mode<synchronous>, transform_indices = @transform_6, window_bounds = array<i64: 1, 32>}, {pipeline_mode = #tpu.pipeline_mode<synchronous>, transform_indices = @transform_7, window_bounds = array<i64: 32, 64>}, {pipeline_mode = #tpu.pipeline_mode<synchronous>, transform_indices = @transform_8, window_bounds = array<i64: 1, 64>}, {pipeline_mode = #tpu.pipeline_mode<synchronous>, transform_indices = @transform_9, window_bounds = array<i64: 32, 32>}, {pipeline_mode = #tpu.pipeline_mode<synchronous>, transform_indices = @transform_10, window_bounds = array<i64: 1, 32>}, {transform_indices = @transform_11, window_bounds = array<i64: 1, 8, 32>}]} {
    %c0 = arith.constant 0 : index
    %c0_0 = arith.constant 0 : index
    %c0_1 = arith.constant 0 : index
    %0 = vector.load %arg1[%c0, %c0_0, %c0_1] : memref<1x8x32xf32, #tpu.memory_space<vmem>>, vector<1x8x32xf32>
    %1 = vector.shape_cast %0 : vector<1x8x32xf32> to vector<8x32xf32>
    %c0_2 = arith.constant 0 : index
    %c0_3 = arith.constant 0 : index
    %2 = vector.load %arg4[%c0_2, %c0_3] : memref<1x32xf32, #tpu.memory_space<vmem>>, vector<1x32xf32>
    %c0_4 = arith.constant 0 : index
    %c0_5 = arith.constant 0 : index
    %3 = vector.load %arg5[%c0_4, %c0_5] : memref<1x32xf32, #tpu.memory_space<vmem>>, vector<1x32xf32>
    %cst = arith.constant dense<0.000000e+00> : vector<8xf32>
    %4 = vector.multi_reduction <add>, %1, %cst [1] : vector<8x32xf32> to vector<8xf32>
    %5 = vector.shape_cast %4 : vector<8xf32> to vector<8x1xf32>
    %cst_6 = arith.constant 3.200000e+01 : f32
    %6 = vector.broadcast %cst_6 : f32 to vector<8x1xf32>
    %7 = arith.divf %5, %6 : vector<8x1xf32>
    %8 = vector.broadcast %7 : vector<8x1xf32> to vector<8x32xf32>
    %9 = arith.subf %1, %8 : vector<8x32xf32>
    %10 = arith.mulf %9, %9 : vector<8x32xf32>
    %cst_7 = arith.constant dense<0.000000e+00> : vector<8xf32>
    %11 = vector.multi_reduction <add>, %10, %cst_7 [1] : vector<8x32xf32> to vector<8xf32>
    %12 = vector.shape_cast %11 : vector<8xf32> to vector<8x1xf32>
    %cst_8 = arith.constant 0.0322580636 : f32
    %13 = vector.broadcast %cst_8 : f32 to vector<8x1xf32>
    %14 = arith.mulf %12, %13 : vector<8x1xf32>
    %15 = math.sqrt %14 : vector<8x1xf32>
    %cst_9 = arith.constant 9.99999997E-7 : f32
    %16 = vector.broadcast %cst_9 : f32 to vector<8x1xf32>
    %17 = arith.addf %15, %16 : vector<8x1xf32>
    %cst_10 = arith.constant 1.000000e+00 : f32
    %18 = vector.broadcast %cst_10 : f32 to vector<8x1xf32>
    %19 = arith.divf %18, %17 : vector<8x1xf32>
    %20 = vector.broadcast %7 : vector<8x1xf32> to vector<8x32xf32>
    %21 = arith.subf %1, %20 : vector<8x32xf32>
    %22 = vector.broadcast %2 : vector<1x32xf32> to vector<8x32xf32>
    %23 = arith.mulf %22, %21 : vector<8x32xf32>
    %24 = vector.broadcast %19 : vector<8x1xf32> to vector<8x32xf32>
    %25 = arith.mulf %23, %24 : vector<8x32xf32>
    %26 = vector.broadcast %3 : vector<1x32xf32> to vector<8x32xf32>
    %27 = arith.addf %25, %26 : vector<8x32xf32>
    %c0_11 = arith.constant 0 : index
    %c0_12 = arith.constant 0 : index
    %c0_13 = arith.constant 0 : index
    %28 = vector.load %arg2[%c0_11, %c0_12, %c0_13] : memref<1x8x32xf32, #tpu.memory_space<vmem>>, vector<1x8x32xf32>
    %29 = vector.shape_cast %28 : vector<1x8x32xf32> to vector<8x32xf32>
    %30 = arith.truncf %27 : vector<8x32xf32> to vector<8x32xbf16>
    %c0_14 = arith.constant 0 : index
    %c0_15 = arith.constant 0 : index
    %31 = vector.load %arg6[%c0_14, %c0_15] : memref<32x32xbf16, #tpu.memory_space<vmem>>, vector<32x32xbf16>
    %cst_16 = arith.constant dense<0.000000e+00> : vector<8x32xf32>
    %32 = tpu.matmul %30, %31, %cst_16 {dimension_numbers = #tpu.dot_dimension_numbers<[1], [0], [0], [1], [0, 0, 1, 1], [], []>} : vector<8x32xbf16>, vector<32x32xbf16>, vector<8x32xf32> -> vector<8x32xf32>
    %c0_17 = arith.constant 0 : index
    %c0_18 = arith.constant 0 : index
    %33 = vector.load %arg7[%c0_17, %c0_18] : memref<1x32xf32, #tpu.memory_space<vmem>>, vector<1x32xf32>
    %34 = vector.broadcast %33 : vector<1x32xf32> to vector<8x32xf32>
    %35 = arith.addf %32, %34 : vector<8x32xf32>
    %36 = arith.truncf %29 : vector<8x32xf32> to vector<8x32xbf16>
    %c0_19 = arith.constant 0 : index
    %c0_20 = arith.constant 0 : index
    %37 = vector.load %arg8[%c0_19, %c0_20] : memref<32x64xbf16, #tpu.memory_space<vmem>>, vector<32x64xbf16>
    %cst_21 = arith.constant dense<0.000000e+00> : vector<8x64xf32>
    %38 = tpu.matmul %36, %37, %cst_21 {dimension_numbers = #tpu.dot_dimension_numbers<[1], [0], [0], [1], [0, 0, 1, 1], [], []>} : vector<8x32xbf16>, vector<32x64xbf16>, vector<8x64xf32> -> vector<8x64xf32>
    %c0_22 = arith.constant 0 : index
    %c0_23 = arith.constant 0 : index
    %39 = vector.load %arg9[%c0_22, %c0_23] : memref<1x64xf32, #tpu.memory_space<vmem>>, vector<1x64xf32>
    %40 = vector.broadcast %39 : vector<1x64xf32> to vector<8x64xf32>
    %41 = arith.addf %38, %40 : vector<8x64xf32>
    %cst_24 = arith.constant 0.353553385 : f32
    %42 = vector.broadcast %cst_24 : f32 to vector<8x32xf32>
    %43 = arith.mulf %35, %42 : vector<8x32xf32>
    %44 = arith.truncf %43 : vector<8x32xf32> to vector<8x32xbf16>
    %45 = arith.truncf %41 : vector<8x64xf32> to vector<8x64xbf16>
    %c0_25 = arith.constant 0 : index
    %c0_26 = arith.constant 0 : index
    %c0_27 = arith.constant 0 : index
    %46 = vector.load %arg3[%c0_25, %c0_26, %c0_27] : memref<1x1x8xf32, #tpu.memory_space<vmem>>, vector<1x1x8xf32>
    %47 = vector.shape_cast %46 : vector<1x1x8xf32> to vector<1x8xf32>
    %48 = vector.shape_cast %47 : vector<1x8xf32> to vector<1x8xf32>
    %49 = vector.broadcast %48 : vector<1x8xf32> to vector<8x8xf32>
    %cst_28 = arith.constant 0.000000e+00 : f32
    %50 = vector.broadcast %cst_28 : f32 to vector<8x8xf32>
    %51 = arith.cmpf ogt, %49, %50 : vector<8x8xf32>
    %52 = vector.extract_strided_slice %44 {offsets = [0, 0], sizes = [8, 8], strides = [1, 1]} : vector<8x32xbf16> to vector<8x8xbf16>
    %53 = vector.extract_strided_slice %45 {offsets = [0, 0], sizes = [8, 8], strides = [1, 1]} : vector<8x64xbf16> to vector<8x8xbf16>
    %54 = vector.extract_strided_slice %45 {offsets = [0, 32], sizes = [8, 8], strides = [1, 1]} : vector<8x64xbf16> to vector<8x8xbf16>
    %cst_29 = arith.constant dense<0.000000e+00> : vector<8x8xf32>
    %55 = tpu.matmul %52, %53, %cst_29 {dimension_numbers = #tpu.dot_dimension_numbers<[1], [1], [0], [0], [0, 0, 1, 0], [], []>} : vector<8x8xbf16>, vector<8x8xbf16>, vector<8x8xf32> -> vector<8x8xf32>
    %cst_30 = arith.constant -1.000000e+09 : f32
    %56 = vector.broadcast %cst_30 : f32 to vector<8x8xf32>
    %57 = arith.select %51, %55, %56 : vector<8x8xi1>, vector<8x8xf32>
    %cst_31 = arith.constant dense<0xFF800000> : vector<8xf32>
    %58 = vector.multi_reduction <maximumf>, %57, %cst_31 [1] : vector<8x8xf32> to vector<8xf32>
    %59 = vector.shape_cast %58 : vector<8xf32> to vector<8x1xf32>
    %60 = vector.broadcast %59 : vector<8x1xf32> to vector<8x8xf32>
    %61 = arith.subf %57, %60 : vector<8x8xf32>
    %62 = math.exp %61 : vector<8x8xf32>
    %cst_32 = arith.constant dense<0.000000e+00> : vector<8xf32>
    %63 = vector.multi_reduction <add>, %62, %cst_32 [1] : vector<8x8xf32> to vector<8xf32>
    %64 = vector.shape_cast %63 : vector<8xf32> to vector<8x1xf32>
    %65 = tpu.reciprocal %64 {approx = true} : vector<8x1xf32> -> vector<8x1xf32>
    %66 = vector.broadcast %65 : vector<8x1xf32> to vector<8x8xf32>
    %67 = arith.mulf %62, %66 : vector<8x8xf32>
    %68 = arith.truncf %67 : vector<8x8xf32> to vector<8x8xbf16>
    %cst_33 = arith.constant dense<0.000000e+00> : vector<8x8xf32>
    %69 = tpu.matmul %68, %54, %cst_33 {dimension_numbers = #tpu.dot_dimension_numbers<[1], [0], [0], [1], [0, 0, 1, 1], [], []>} : vector<8x8xbf16>, vector<8x8xbf16>, vector<8x8xf32> -> vector<8x8xf32>
    %70 = vector.extract_strided_slice %44 {offsets = [0, 8], sizes = [8, 8], strides = [1, 1]} : vector<8x32xbf16> to vector<8x8xbf16>
    %71 = vector.extract_strided_slice %45 {offsets = [0, 8], sizes = [8, 8], strides = [1, 1]} : vector<8x64xbf16> to vector<8x8xbf16>
    %72 = vector.extract_strided_slice %45 {offsets = [0, 40], sizes = [8, 8], strides = [1, 1]} : vector<8x64xbf16> to vector<8x8xbf16>
    %cst_34 = arith.constant dense<0.000000e+00> : vector<8x8xf32>
    %73 = tpu.matmul %70, %71, %cst_34 {dimension_numbers = #tpu.dot_dimension_numbers<[1], [1], [0], [0], [0, 0, 1, 0], [], []>} : vector<8x8xbf16>, vector<8x8xbf16>, vector<8x8xf32> -> vector<8x8xf32>
    %cst_35 = arith.constant -1.000000e+09 : f32
    %74 = vector.broadcast %cst_35 : f32 to vector<8x8xf32>
    %75 = arith.select %51, %73, %74 : vector<8x8xi1>, vector<8x8xf32>
    %cst_36 = arith.constant dense<0xFF800000> : vector<8xf32>
    %76 = vector.multi_reduction <maximumf>, %75, %cst_36 [1] : vector<8x8xf32> to vector<8xf32>
    %77 = vector.shape_cast %76 : vector<8xf32> to vector<8x1xf32>
    %78 = vector.broadcast %77 : vector<8x1xf32> to vector<8x8xf32>
    %79 = arith.subf %75, %78 : vector<8x8xf32>
    %80 = math.exp %79 : vector<8x8xf32>
    %cst_37 = arith.constant dense<0.000000e+00> : vector<8xf32>
    %81 = vector.multi_reduction <add>, %80, %cst_37 [1] : vector<8x8xf32> to vector<8xf32>
    %82 = vector.shape_cast %81 : vector<8xf32> to vector<8x1xf32>
    %83 = tpu.reciprocal %82 {approx = true} : vector<8x1xf32> -> vector<8x1xf32>
    %84 = vector.broadcast %83 : vector<8x1xf32> to vector<8x8xf32>
    %85 = arith.mulf %80, %84 : vector<8x8xf32>
    %86 = arith.truncf %85 : vector<8x8xf32> to vector<8x8xbf16>
    %cst_38 = arith.constant dense<0.000000e+00> : vector<8x8xf32>
    %87 = tpu.matmul %86, %72, %cst_38 {dimension_numbers = #tpu.dot_dimension_numbers<[1], [0], [0], [1], [0, 0, 1, 1], [], []>} : vector<8x8xbf16>, vector<8x8xbf16>, vector<8x8xf32> -> vector<8x8xf32>
    %88 = vector.extract_strided_slice %44 {offsets = [0, 16], sizes = [8, 8], strides = [1, 1]} : vector<8x32xbf16> to vector<8x8xbf16>
    %89 = vector.extract_strided_slice %45 {offsets = [0, 16], sizes = [8, 8], strides = [1, 1]} : vector<8x64xbf16> to vector<8x8xbf16>
    %90 = vector.extract_strided_slice %45 {offsets = [0, 48], sizes = [8, 8], strides = [1, 1]} : vector<8x64xbf16> to vector<8x8xbf16>
    %cst_39 = arith.constant dense<0.000000e+00> : vector<8x8xf32>
    %91 = tpu.matmul %88, %89, %cst_39 {dimension_numbers = #tpu.dot_dimension_numbers<[1], [1], [0], [0], [0, 0, 1, 0], [], []>} : vector<8x8xbf16>, vector<8x8xbf16>, vector<8x8xf32> -> vector<8x8xf32>
    %cst_40 = arith.constant -1.000000e+09 : f32
    %92 = vector.broadcast %cst_40 : f32 to vector<8x8xf32>
    %93 = arith.select %51, %91, %92 : vector<8x8xi1>, vector<8x8xf32>
    %cst_41 = arith.constant dense<0xFF800000> : vector<8xf32>
    %94 = vector.multi_reduction <maximumf>, %93, %cst_41 [1] : vector<8x8xf32> to vector<8xf32>
    %95 = vector.shape_cast %94 : vector<8xf32> to vector<8x1xf32>
    %96 = vector.broadcast %95 : vector<8x1xf32> to vector<8x8xf32>
    %97 = arith.subf %93, %96 : vector<8x8xf32>
    %98 = math.exp %97 : vector<8x8xf32>
    %cst_42 = arith.constant dense<0.000000e+00> : vector<8xf32>
    %99 = vector.multi_reduction <add>, %98, %cst_42 [1] : vector<8x8xf32> to vector<8xf32>
    %100 = vector.shape_cast %99 : vector<8xf32> to vector<8x1xf32>
    %101 = tpu.reciprocal %100 {approx = true} : vector<8x1xf32> -> vector<8x1xf32>
    %102 = vector.broadcast %101 : vector<8x1xf32> to vector<8x8xf32>
    %103 = arith.mulf %98, %102 : vector<8x8xf32>
    %104 = arith.truncf %103 : vector<8x8xf32> to vector<8x8xbf16>
    %cst_43 = arith.constant dense<0.000000e+00> : vector<8x8xf32>
    %105 = tpu.matmul %104, %90, %cst_43 {dimension_numbers = #tpu.dot_dimension_numbers<[1], [0], [0], [1], [0, 0, 1, 1], [], []>} : vector<8x8xbf16>, vector<8x8xbf16>, vector<8x8xf32> -> vector<8x8xf32>
    %106 = vector.extract_strided_slice %44 {offsets = [0, 24], sizes = [8, 8], strides = [1, 1]} : vector<8x32xbf16> to vector<8x8xbf16>
    %107 = vector.extract_strided_slice %45 {offsets = [0, 24], sizes = [8, 8], strides = [1, 1]} : vector<8x64xbf16> to vector<8x8xbf16>
    %108 = vector.extract_strided_slice %45 {offsets = [0, 56], sizes = [8, 8], strides = [1, 1]} : vector<8x64xbf16> to vector<8x8xbf16>
    %cst_44 = arith.constant dense<0.000000e+00> : vector<8x8xf32>
    %109 = tpu.matmul %106, %107, %cst_44 {dimension_numbers = #tpu.dot_dimension_numbers<[1], [1], [0], [0], [0, 0, 1, 0], [], []>} : vector<8x8xbf16>, vector<8x8xbf16>, vector<8x8xf32> -> vector<8x8xf32>
    %cst_45 = arith.constant -1.000000e+09 : f32
    %110 = vector.broadcast %cst_45 : f32 to vector<8x8xf32>
    %111 = arith.select %51, %109, %110 : vector<8x8xi1>, vector<8x8xf32>
    %cst_46 = arith.constant dense<0xFF800000> : vector<8xf32>
    %112 = vector.multi_reduction <maximumf>, %111, %cst_46 [1] : vector<8x8xf32> to vector<8xf32>
    %113 = vector.shape_cast %112 : vector<8xf32> to vector<8x1xf32>
    %114 = vector.broadcast %113 : vector<8x1xf32> to vector<8x8xf32>
    %115 = arith.subf %111, %114 : vector<8x8xf32>
    %116 = math.exp %115 : vector<8x8xf32>
    %cst_47 = arith.constant dense<0.000000e+00> : vector<8xf32>
    %117 = vector.multi_reduction <add>, %116, %cst_47 [1] : vector<8x8xf32> to vector<8xf32>
    %118 = vector.shape_cast %117 : vector<8xf32> to vector<8x1xf32>
    %119 = tpu.reciprocal %118 {approx = true} : vector<8x1xf32> -> vector<8x1xf32>
    %120 = vector.broadcast %119 : vector<8x1xf32> to vector<8x8xf32>
    %121 = arith.mulf %116, %120 : vector<8x8xf32>
    %122 = arith.truncf %121 : vector<8x8xf32> to vector<8x8xbf16>
    %cst_48 = arith.constant dense<0.000000e+00> : vector<8x8xf32>
    %123 = tpu.matmul %122, %108, %cst_48 {dimension_numbers = #tpu.dot_dimension_numbers<[1], [0], [0], [1], [0, 0, 1, 1], [], []>} : vector<8x8xbf16>, vector<8x8xbf16>, vector<8x8xf32> -> vector<8x8xf32>
    %124 = tpu.concatenate %69, %87, %105, %123 in 1 : vector<8x8xf32>, vector<8x8xf32>, vector<8x8xf32>, vector<8x8xf32> -> vector<8x32xf32>
    %125 = arith.truncf %124 : vector<8x32xf32> to vector<8x32xbf16>
    %c0_49 = arith.constant 0 : index
    %c0_50 = arith.constant 0 : index
    %126 = vector.load %arg10[%c0_49, %c0_50] : memref<32x32xbf16, #tpu.memory_space<vmem>>, vector<32x32xbf16>
    %cst_51 = arith.constant dense<0.000000e+00> : vector<8x32xf32>
    %127 = tpu.matmul %125, %126, %cst_51 {dimension_numbers = #tpu.dot_dimension_numbers<[1], [0], [0], [1], [0, 0, 1, 1], [], []>} : vector<8x32xbf16>, vector<32x32xbf16>, vector<8x32xf32> -> vector<8x32xf32>
    %c0_52 = arith.constant 0 : index
    %c0_53 = arith.constant 0 : index
    %128 = vector.load %arg11[%c0_52, %c0_53] : memref<1x32xf32, #tpu.memory_space<vmem>>, vector<1x32xf32>
    %129 = vector.broadcast %128 : vector<1x32xf32> to vector<8x32xf32>
    %130 = arith.addf %127, %129 : vector<8x32xf32>
    %131 = arith.addf %1, %130 : vector<8x32xf32>
    %c0_54 = arith.constant 0 : index
    %c0_55 = arith.constant 0 : index
    %c0_56 = arith.constant 0 : index
    %132 = vector.load %arg12[%c0_54, %c0_55, %c0_56] : memref<1x8x32xf32, #tpu.memory_space<vmem>>, vector<1x8x32xf32>
    %133 = vector.shape_cast %132 : vector<1x8x32xf32> to vector<8x32xf32>
    %134 = vector.shape_cast %131 : vector<8x32xf32> to vector<1x8x32xf32>
    tpu.vector_store %arg12[%c0_54, %c0_55, %c0_56], %134 {strides = array<i32>} : memref<1x8x32xf32, #tpu.memory_space<vmem>>, vector<1x8x32xf32>,
    return
  }
  func.func @transform_0(%arg0: i32) -> (i32, i32, i32) {
    %c0_i32 = arith.constant 0 : i32
    %c0_i32_0 = arith.constant 0 : i32
    %c0_i32_1 = arith.constant 0 : i32
    return %arg0, %c0_i32, %c0_i32_0 : i32, i32, i32
  }
  func.func @transform_1(%arg0: i32) -> (i32, i32, i32) {
    %c0_i32 = arith.constant 0 : i32
    %c0_i32_0 = arith.constant 0 : i32
    %c0_i32_1 = arith.constant 0 : i32
    return %arg0, %c0_i32, %c0_i32_0 : i32, i32, i32
  }
  func.func @transform_2(%arg0: i32) -> (i32, i32, i32) {
    %c0_i32 = arith.constant 0 : i32
    %c0_i32_0 = arith.constant 0 : i32
    %c0_i32_1 = arith.constant 0 : i32
    return %arg0, %c0_i32, %c0_i32_0 : i32, i32, i32
  }
  func.func @transform_3(%arg0: i32) -> (i32, i32) {
    %c0_i32 = arith.constant 0 : i32
    %c0_i32_0 = arith.constant 0 : i32
    %c0_i32_1 = arith.constant 0 : i32
    return %c0_i32, %c0_i32_0 : i32, i32
  }
  func.func @transform_4(%arg0: i32) -> (i32, i32) {
    %c0_i32 = arith.constant 0 : i32
    %c0_i32_0 = arith.constant 0 : i32
    %c0_i32_1 = arith.constant 0 : i32
    return %c0_i32, %c0_i32_0 : i32, i32
  }
  func.func @transform_5(%arg0: i32) -> (i32, i32) {
    %c0_i32 = arith.constant 0 : i32
    %c0_i32_0 = arith.constant 0 : i32
    %c0_i32_1 = arith.constant 0 : i32
    return %c0_i32, %c0_i32_0 : i32, i32
  }
  func.func @transform_6(%arg0: i32) -> (i32, i32) {
    %c0_i32 = arith.constant 0 : i32
    %c0_i32_0 = arith.constant 0 : i32
    %c0_i32_1 = arith.constant 0 : i32
    return %c0_i32, %c0_i32_0 : i32, i32
  }
  func.func @transform_7(%arg0: i32) -> (i32, i32) {
    %c0_i32 = arith.constant 0 : i32
    %c0_i32_0 = arith.constant 0 : i32
    %c0_i32_1 = arith.constant 0 : i32
    return %c0_i32, %c0_i32_0 : i32, i32
  }
  func.func @transform_8(%arg0: i32) -> (i32, i32) {
    %c0_i32 = arith.constant 0 : i32
    %c0_i32_0 = arith.constant 0 : i32
    %c0_i32_1 = arith.constant 0 : i32
    return %c0_i32, %c0_i32_0 : i32, i32
  }
  func.func @transform_9(%arg0: i32) -> (i32, i32) {
    %c0_i32 = arith.constant 0 : i32
    %c0_i32_0 = arith.constant 0 : i32
    %c0_i32_1 = arith.constant 0 : i32
    return %c0_i32, %c0_i32_0 : i32, i32
  }
  func.func @transform_10(%arg0: i32) -> (i32, i32) {
    %c0_i32 = arith.constant 0 : i32
    %c0_i32_0 = arith.constant 0 : i32
    %c0_i32_1 = arith.constant 0 : i32
    return %c0_i32, %c0_i32_0 : i32, i32
  }
  func.func @transform_11(%arg0: i32) -> (i32, i32, i32) {
    %c0_i32 = arith.constant 0 : i32
    %c0_i32_0 = arith.constant 0 : i32
    %c0_i32_1 = arith.constant 0 : i32
    return %arg0, %c0_i32, %c0_i32_0 : i32, i32, i32
  }
}

</mosaic_0001>

<llo_original>
// kernel: encoder_decoder_forward.16
$region0: #{encoder_decoder_forward.16}
  #allocation0 [shape = 'u32[]', space=smem, size = 0x4, offset = 0x4, fixed_abs, tag = 'smem constant byte address 0x4 - core index']
  #allocation1 [shape = 'u32[144,128]{1,0:T(1,128)}', space=vmem, size = 0x12000, scoped, tag = 'internal scratch']
  %s0 = inlined_call_operand.vmem [shape: f32[16,32], index: 0, kind: input, shape index: {}]
  %s1 = inlined_call_operand.vmem [shape: f32[1,32], index: 1, kind: input, shape index: {}]
  %s2 = inlined_call_operand.vmem [shape: f32[1,32], index: 2, kind: input, shape index: {}]
  %s3 = inlined_call_operand.vmem [shape: f32[16,32], index: 3, kind: output, shape index: {}]
  %s4 = sld [smem:[#allocation0]]
  $region22: #{encoder_decoder_forward.16} parent=0
    _
  %s6 = ssub.s32 1, %s4
  %s7 = scalar_select 0, %s6, %s4
  // Predicated region
  $region2: #{encoder_decoder_forward.16} parent=0 // pred_check
    _
  $region3: #{encoder_decoder_forward.16} parent=0 // pred_check_branch
    %9 = sbr.rel (0) target = $region5
  $region4: #{encoder_decoder_forward.16} parent=0 // pred_region
    _
  $region5: #{encoder_decoder_forward.16} parent=0 // pred_fallthru
    _
  // Predicated region
  $region6: #{encoder_decoder_forward.16} parent=0 // pred_check
    _
  $region7: #{encoder_decoder_forward.16} parent=0 // pred_check_branch
    %11 = sbr.rel (0) target = $region9
  $region8: #{encoder_decoder_forward.16} parent=0 // pred_region
    _
  $region9: #{encoder_decoder_forward.16} parent=0 // pred_fallthru
    _
  // Predicated region
  $region10: #{encoder_decoder_forward.16} parent=0 // pred_check
    _
  $region11: #{encoder_decoder_forward.16} parent=0 // pred_check_branch
    %13 = sbr.rel (0) target = $region13
  $region12: #{encoder_decoder_forward.16} parent=0 // pred_region
    _
  $region13: #{encoder_decoder_forward.16} parent=0 // pred_fallthru
    _
  %v14 = vld [vmem:[%s0] sm:$0xff]
  %v15 = vld [vmem:[%s0 + $0x8] sm:$0xff]
  %v16 = vld [vmem:[%s1] sm:$0x1]
  %v17 = vld [vmem:[%s2] sm:$0x1]
  %vm18 = vcmask 261120
  %v19 = vsel %vm18, %v14, 0.0
  %20 = vadd.xlane.f32.xlu0 %v19
  %v21 = vpop.xlane.xlu0 %20
  %v22 = vsel %vm18, %v15, 0.0
  %23 = vadd.xlane.f32.xlu0 %v22
  %v24 = vpop.xlane.xlu0 %23
  %v25 = vrcp.pop 32.0
  %v26 = vmul.f32 %v21, %v25
  %v27 = vmul.f32 %v24, %v25
  %v28 = vsub.f32 %v14, %v26
  %v29 = vsub.f32 %v15, %v27
  %v30 = vmul.f32 %v28, %v28
  %v31 = vmul.f32 %v29, %v29
  %v32 = vsel %vm18, %v30, 0.0
  %33 = vadd.xlane.f32.xlu0 %v32
  %v34 = vpop.xlane.xlu0 %33
  %v35 = vsel %vm18, %v31, 0.0
  %36 = vadd.xlane.f32.xlu0 %v35
  %v37 = vpop.xlane.xlu0 %36
  %v38 = vmul.f32 %v34, 0.032258064
  %v39 = vmul.f32 %v37, 0.032258064
  %v40 = vrsqrt.pop %v38
  %v41 = vmul.f32 %v38, %v40
  %vm42 = vcmp.eq.f32.partialorder %v38, inf
  %v43 = vsel %vm42, %v38, %v41
  %vm44 = vcmp.eq.f32.partialorder %v38, 0.0
  %v45 = vand.u32 %v38, 2147483648
  %v46 = vsel %vm44, %v45, %v43
  %v47 = vrsqrt.pop %v39
  %v48 = vmul.f32 %v39, %v47
  %vm49 = vcmp.eq.f32.partialorder %v39, inf
  %v50 = vsel %vm49, %v39, %v48
  %vm51 = vcmp.eq.f32.partialorder %v39, 0.0
  %v52 = vand.u32 %v39, 2147483648
  %v53 = vsel %vm51, %v52, %v50
  %v54 = vadd.f32 %v46, 1e-06
  %v55 = vadd.f32 %v53, 1e-06
  %v56 = vrcp.pop %v54
  %v57 = vmul.f32 1.0, %v56
  %v58 = vrcp.pop %v55
  %v59 = vmul.f32 1.0, %v58
  %v61 = vlaneseq
  %v62 = vshrl.u32 %v61, 7
  %v63 = vsub.s32 0, %v62
  %v64 = vrot.slane %v16, %v63
  %v66 = vmul.f32 %v64, %v28
  %v67 = vmul.f32 %v64, %v29
  %v68 = vmul.f32 %v66, %v57
  %v69 = vmul.f32 %v67, %v59
  %v71 = vlaneseq
  %v72 = vshrl.u32 %v71, 7
  %v73 = vsub.s32 0, %v72
  %v74 = vrot.slane %v17, %v73
  %v76 = vadd.f32 %v68, %v74
  %v77 = vadd.f32 %v69, %v74
  %78 = vst.msk [vmem:[%s3] sm:$0xff] %vm18, %v76
  %79 = vst.msk [vmem:[%s3 + $0x8] sm:$0xff] %vm18, %v77
  // Predicated region
  $region14: #{encoder_decoder_forward.16} parent=0 // pred_check
    _
  $region15: #{encoder_decoder_forward.16} parent=0 // pred_check_branch
    %81 = sbr.rel (0) target = $region17
  $region16: #{encoder_decoder_forward.16} parent=0 // pred_region
    _
  $region17: #{encoder_decoder_forward.16} parent=0 // pred_fallthru
    _
  // Predicated region
  $region18: #{encoder_decoder_forward.16} parent=0 // pred_check
    _
  $region19: #{encoder_decoder_forward.16} parent=0 // pred_check_branch
    %83 = sbr.rel (0) target = $region21
  $region20: #{encoder_decoder_forward.16} parent=0 // pred_region
    _
  $region21: #{encoder_decoder_forward.16} parent=0 // pred_fallthru
    _

// kernel: encoder_decoder_forward.13
$region0: #{encoder_decoder_forward.13}
  #allocation0 [shape = 'u32[]', space=smem, size = 0x4, offset = 0x4, fixed_abs, tag = 'smem constant byte address 0x4 - core index']
  #allocation1 [shape = 'u32[144,128]{1,0:T(1,128)}', space=vmem, size = 0x12000, scoped, tag = 'internal scratch']
  %s0 = inlined_call_operand.vmem [shape: f32[16,32], index: 0, kind: input, shape index: {}]
  %s1 = inlined_call_operand.vmem [shape: f32[1,32], index: 1, kind: input, shape index: {}]
  %s2 = inlined_call_operand.vmem [shape: f32[1,32], index: 2, kind: input, shape index: {}]
  %s3 = inlined_call_operand.vmem [shape: bf16[32,64], index: 3, kind: input, shape index: {}]
  %s4 = inlined_call_operand.vmem [shape: f32[1,64], index: 4, kind: input, shape index: {}]
  %s5 = inlined_call_operand.vmem [shape: bf16[64,32], index: 5, kind: input, shape index: {}]
  %s6 = inlined_call_operand.vmem [shape: f32[1,32], index: 6, kind: input, shape index: {}]
  %s7 = inlined_call_operand.vmem [shape: f32[16,32], index: 7, kind: output, shape index: {}]
  %s8 = sld [smem:[#allocation0]]
  $region38: #{encoder_decoder_forward.13} parent=0
    _
  %s10 = ssub.s32 1, %s8
  %s11 = scalar_select 0, %s10, %s8
  // Predicated region
  $region2: #{encoder_decoder_forward.13} parent=0 // pred_check
    _
  $region3: #{encoder_decoder_forward.13} parent=0 // pred_check_branch
    %13 = sbr.rel (0) target = $region5
  $region4: #{encoder_decoder_forward.13} parent=0 // pred_region
    _
  $region5: #{encoder_decoder_forward.13} parent=0 // pred_fallthru
    _
  // Predicated region
  $region6: #{encoder_decoder_forward.13} parent=0 // pred_check
    _
  $region7: #{encoder_decoder_forward.13} parent=0 // pred_check_branch
    %15 = sbr.rel (0) target = $region9
  $region8: #{encoder_decoder_forward.13} parent=0 // pred_region
    _
  $region9: #{encoder_decoder_forward.13} parent=0 // pred_fallthru
    _
  // Predicated region
  $region10: #{encoder_decoder_forward.13} parent=0 // pred_check
    _
  $region11: #{encoder_decoder_forward.13} parent=0 // pred_check_branch
    %17 = sbr.rel (0) target = $region13
  $region12: #{encoder_decoder_forward.13} parent=0 // pred_region
    _
  $region13: #{encoder_decoder_forward.13} parent=0 // pred_fallthru
    _
  // Predicated region
  $region14: #{encoder_decoder_forward.13} parent=0 // pred_check
    _
  $region15: #{encoder_decoder_forward.13} parent=0 // pred_check_branch
    %19 = sbr.rel (0) target = $region17
  $region16: #{encoder_decoder_forward.13} parent=0 // pred_region
    _
  $region17: #{encoder_decoder_forward.13} parent=0 // pred_fallthru
    _
  // Predicated region
  $region18: #{encoder_decoder_forward.13} parent=0 // pred_check
    _
  $region19: #{encoder_decoder_forward.13} parent=0 // pred_check_branch
    %21 = sbr.rel (0) target = $region21
  $region20: #{encoder_decoder_forward.13} parent=0 // pred_region
    _
  $region21: #{encoder_decoder_forward.13} parent=0 // pred_fallthru
    _
  // Predicated region
  $region22: #{encoder_decoder_forward.13} parent=0 // pred_check
    _
  $region23: #{encoder_decoder_forward.13} parent=0 // pred_check_branch
    %23 = sbr.rel (0) target = $region25
  $region24: #{encoder_decoder_forward.13} parent=0 // pred_region
    _
  $region25: #{encoder_decoder_forward.13} parent=0 // pred_fallthru
    _
  // Predicated region
  $region26: #{encoder_decoder_forward.13} parent=0 // pred_check
    _
  $region27: #{encoder_decoder_forward.13} parent=0 // pred_check_branch
    %25 = sbr.rel (0) target = $region29
  $region28: #{encoder_decoder_forward.13} parent=0 // pred_region
    _
  $region29: #{encoder_decoder_forward.13} parent=0 // pred_fallthru
    _
  %v27 = vld [vmem:[%s0] sm:$0xff]
  %v28 = vld [vmem:[%s0 + $0x8] sm:$0xff]
  %v29 = vld [vmem:[%s1] sm:$0x1]
  %v30 = vld [vmem:[%s2] sm:$0x1]
  %vm31 = vcmask 261120
  %v32 = vsel %vm31, %v27, 0.0
  %33 = vadd.xlane.f32.xlu0 %v32
  %v34 = vpop.xlane.xlu0 %33
  %v35 = vsel %vm31, %v28, 0.0
  %36 = vadd.xlane.f32.xlu0 %v35
  %v37 = vpop.xlane.xlu0 %36
  %v38 = vrcp.pop 32.0
  %v39 = vmul.f32 %v34, %v38
  %v40 = vmul.f32 %v37, %v38
  %v41 = vsub.f32 %v27, %v39
  %v42 = vsub.f32 %v28, %v40
  %v43 = vmul.f32 %v41, %v41
  %v44 = vmul.f32 %v42, %v42
  %v45 = vsel %vm31, %v43, 0.0
  %46 = vadd.xlane.f32.xlu0 %v45
  %v47 = vpop.xlane.xlu0 %46
  %v48 = vsel %vm31, %v44, 0.0
  %49 = vadd.xlane.f32.xlu0 %v48
  %v50 = vpop.xlane.xlu0 %49
  %v51 = vmul.f32 %v47, 0.032258064
  %v52 = vmul.f32 %v50, 0.032258064
  %v53 = vrsqrt.pop %v51
  %v54 = vmul.f32 %v51, %v53
  %vm55 = vcmp.eq.f32.partialorder %v51, inf
  %v56 = vsel %vm55, %v51, %v54
  %vm57 = vcmp.eq.f32.partialorder %v51, 0.0
  %v58 = vand.u32 %v51, 2147483648
  %v59 = vsel %vm57, %v58, %v56
  %v60 = vrsqrt.pop %v52
  %v61 = vmul.f32 %v52, %v60
  %vm62 = vcmp.eq.f32.partialorder %v52, inf
  %v63 = vsel %vm62, %v52, %v61
  %vm64 = vcmp.eq.f32.partialorder %v52, 0.0
  %v65 = vand.u32 %v52, 2147483648
  %v66 = vsel %vm64, %v65, %v63
  %v67 = vadd.f32 %v59, 1e-06
  %v68 = vadd.f32 %v66, 1e-06
  %v69 = vrcp.pop %v67
  %v70 = vmul.f32 1.0, %v69
  %v71 = vrcp.pop %v68
  %v72 = vmul.f32 1.0, %v71
  %v74 = vlaneseq
  %v75 = vshrl.u32 %v74, 7
  %v76 = vsub.s32 0, %v75
  %v77 = vrot.slane %v29, %v76
  %v79 = vmul.f32 %v77, %v41
  %v80 = vmul.f32 %v77, %v42
  %v81 = vmul.f32 %v79, %v70
  %v82 = vmul.f32 %v80, %v72
  %v84 = vlaneseq
  %v85 = vshrl.u32 %v84, 7
  %v86 = vsub.s32 0, %v85
  %v87 = vrot.slane %v30, %v86
  %v89 = vadd.f32 %v81, %v87
  %v90 = vadd.f32 %v82, %v87
  %v91 = vpack.c.bf16 %v90, %v89
  %v92 = vld [vmem:[%s3] sm:$0xf]
  %v93 = vld [vmem:[%s3 + $0x4] sm:$0xf]
  %v94 = vld [vmem:[%s3 + $0x8] sm:$0xf]
  %v95 = vld [vmem:[%s3 + $0xc] sm:$0xf]
  %v96 = vld [vmem:[%s4] sm:$0x1]
  %v98 = vlaneseq
  %v99 = vshrl.u32 %v98, 7
  %v100 = vsub.s32 0, %v99
  %v101 = vrot.slane %v96, %v100
  %v107 = vunpack.c.l.b16 %v92
  %v108 = vunpack.c.l.b16 %v93
  %v109 = vunpack.c.l.b16 %v94
  %v110 = vunpack.c.l.b16 %v95
  %v111 = vpack.c.b16 %v108, %v107
  %v112 = vpack.c.b16 %v110, %v109
  %v116 = vsel %vm31, %v91, 0
  %118 = vmatprep.subr.bf16.mxu0 0
  %119 = vmatpush1.bf16.msra.mxu0 0
  %120 = vmatprep.subr.bf16.mxu0 0
  %121 = vmatpush1.bf16.msra.mxu0 0
  %122 = vmatprep.subr.bf16.mxu0 0
  %123 = vmatpush1.bf16.msra.mxu0 0
  %124 = vmatprep.subr.bf16.mxu0 0
  %125 = vmatpush1.bf16.msra.mxu0 0
  %126 = vmatprep.subr.bf16.mxu0 0
  %127 = vmatpush1.bf16.msra.mxu0 0
  %128 = vmatprep.subr.bf16.mxu0 0
  %129 = vmatpush1.bf16.msra.mxu0 0
  %130 = vmatprep.subr.bf16.mxu0 0
  %131 = vmatpush1.bf16.msra.mxu0 %v112
  %132 = vmatprep.subr.bf16.mxu0 0
  %133 = vmatpush1.bf16.msra.mxu0 %v111
  %134 = vmatprep.subr.bf16.mxu0 0
  %135 = vmatpush2.bf16.msra.mxu0 0
  %136 = vmatprep.subr.bf16.mxu0 0
  %137 = vmatpush2.bf16.msra.mxu0 0
  %138 = vmatprep.subr.bf16.mxu0 0
  %139 = vmatpush2.bf16.msra.mxu0 0
  %140 = vmatprep.subr.bf16.mxu0 0
  %141 = vmatpush2.bf16.msra.mxu0 0
  %142 = vmatprep.subr.bf16.mxu0 0
  %143 = vmatpush2.bf16.msra.mxu0 0
  %144 = vmatprep.subr.bf16.mxu0 0
  %145 = vmatpush2.bf16.msra.mxu0 0
  %146 = vmatprep.subr.bf16.mxu0 0
  %147 = vmatpush2.bf16.msra.mxu0 0
  %148 = vmatprep.subr.bf16.mxu0 0
  %149 = vmatpush2.bf16.msra.mxu0 0
  %150 = vmatprep.mubr.bf16.mxu0 0
  %151 = vmatmul.mubr.bf16.gmra.mxu0 %v116
  %v152 = vpop.f32.mrf.mxu0
  %v153 = vadd.f32 %v101, %v152
  %v154 = vpop.f32.mrf.mxu0
  %v155 = vpop.f32.mrf.mxu0
  %v156 = vadd.f32 %v101, %v155
  %v157 = vpop.f32.mrf.mxu0
  %158 = vdwg.mxu0
  %v159 = vmax.f32 %v153, 0.0
  %v160 = vmax.f32 %v156, 0.0
  %v161 = vpack.c.bf16 %v160, %v159
  %v162 = vld [vmem:[%s5] sm:$0xf]
  %v163 = vld [vmem:[%s5 + $0x4] sm:$0xf]
  %v164 = vld [vmem:[%s5 + $0x8] sm:$0xf]
  %v165 = vld [vmem:[%s5 + $0xc] sm:$0xf]
  %v166 = vld [vmem:[%s5 + $0x10] sm:$0xf]
  %v167 = vld [vmem:[%s5 + $0x14] sm:$0xf]
  %v168 = vld [vmem:[%s5 + $0x18] sm:$0xf]
  %v169 = vld [vmem:[%s5 + $0x1c] sm:$0xf]
  %v170 = vld [vmem:[%s6] sm:$0x1]
  %v172 = vlaneseq
  %v173 = vshrl.u32 %v172, 7
  %v174 = vsub.s32 0, %v173
  %v175 = vrot.slane %v170, %v174
  %v185 = vunpack.c.l.b16 %v162
  %v186 = vunpack.c.l.b16 %v163
  %v187 = vunpack.c.l.b16 %v164
  %v188 = vunpack.c.l.b16 %v165
  %v189 = vunpack.c.l.b16 %v166
  %v190 = vunpack.c.l.b16 %v167
  %v191 = vunpack.c.l.b16 %v168
  %v192 = vunpack.c.l.b16 %v169
  %v193 = vpack.c.b16 %v186, %v185
  %v194 = vpack.c.b16 %v188, %v187
  %v195 = vpack.c.b16 %v190, %v189
  %v196 = vpack.c.b16 %v192, %v191
  %vm201 = vcmask 523264
  %v203 = vsel %vm201, %v161, 0
  %205 = vmatprep.subr.bf16.mxu0 0
  %206 = vmatpush1.bf16.msra.mxu0 0
  %207 = vmatprep.subr.bf16.mxu0 0
  %208 = vmatpush1.bf16.msra.mxu0 0
  %209 = vmatprep.subr.bf16.mxu0 0
  %210 = vmatpush1.bf16.msra.mxu0 0
  %211 = vmatprep.subr.bf16.mxu0 0
  %212 = vmatpush1.bf16.msra.mxu0 0
  %213 = vmatprep.subr.bf16.mxu0 0
  %214 = vmatpush1.bf16.msra.mxu0 %v196
  %215 = vmatprep.subr.bf16.mxu0 0
  %216 = vmatpush1.bf16.msra.mxu0 %v195
  %217 = vmatprep.subr.bf16.mxu0 0
  %218 = vmatpush1.bf16.msra.mxu0 %v194
  %219 = vmatprep.subr.bf16.mxu0 0
  %220 = vmatpush1.bf16.msra.mxu0 %v193
  %221 = vmatprep.subr.bf16.mxu0 0
  %222 = vmatpush2.bf16.msra.mxu0 0
  %223 = vmatprep.subr.bf16.mxu0 0
  %224 = vmatpush2.bf16.msra.mxu0 0
  %225 = vmatprep.subr.bf16.mxu0 0
  %226 = vmatpush2.bf16.msra.mxu0 0
  %227 = vmatprep.subr.bf16.mxu0 0
  %228 = vmatpush2.bf16.msra.mxu0 0
  %229 = vmatprep.subr.bf16.mxu0 0
  %230 = vmatpush2.bf16.msra.mxu0 0
  %231 = vmatprep.subr.bf16.mxu0 0
  %232 = vmatpush2.bf16.msra.mxu0 0
  %233 = vmatprep.subr.bf16.mxu0 0
  %234 = vmatpush2.bf16.msra.mxu0 0
  %235 = vmatprep.subr.bf16.mxu0 0
  %236 = vmatpush2.bf16.msra.mxu0 0
  %237 = vmatprep.mubr.bf16.mxu0 0
  %238 = vmatmul.mubr.bf16.gmra.mxu0 %v203
  %v239 = vpop.f32.mrf.mxu0
  %v240 = vadd.f32 %v175, %v239
  %v241 = vpop.f32.mrf.mxu0
  %v242 = vpop.f32.mrf.mxu0
  %v243 = vadd.f32 %v175, %v242
  %v244 = vpop.f32.mrf.mxu0
  %245 = vdwg.mxu0
  %v246 = vadd.f32 %v27, %v240
  %v247 = vadd.f32 %v28, %v243
  %248 = vst.msk [vmem:[%s7] sm:$0xff] %vm31, %v246
  %249 = vst.msk [vmem:[%s7 + $0x8] sm:$0xff] %vm31, %v247
  // Predicated region
  $region30: #{encoder_decoder_forward.13} parent=0 // pred_check
    _
  $region31: #{encoder_decoder_forward.13} parent=0 // pred_check_branch
    %251 = sbr.rel (0) target = $region33
  $region32: #{encoder_decoder_forward.13} parent=0 // pred_region
    _
  $region33: #{encoder_decoder_forward.13} parent=0 // pred_fallthru
    _
  // Predicated region
  $region34: #{encoder_decoder_forward.13} parent=0 // pred_check
    _
  $region35: #{encoder_decoder_forward.13} parent=0 // pred_check_branch
    %253 = sbr.rel (0) target = $region37
  $region36: #{encoder_decoder_forward.13} parent=0 // pred_region
    _
  $region37: #{encoder_decoder_forward.13} parent=0 // pred_fallthru
    _

// kernel: encoder_decoder_forward.17
$region0: #{encoder_decoder_forward.17}
  #allocation0 [shape = 'u32[]', space=smem, size = 0x4, offset = 0x4, fixed_abs, tag = 'smem constant byte address 0x4 - core index']
  #allocation1 [shape = 'u32[144,128]{1,0:T(1,128)}', space=vmem, size = 0x12000, scoped, tag = 'internal scratch']
  %s0 = inlined_call_operand.vmem [shape: f32[2,8,32], index: 0, kind: input, shape index: {}]
  %s1 = inlined_call_operand.vmem [shape: f32[2,8,8], index: 1, kind: input, shape index: {}]
  %s2 = inlined_call_operand.vmem [shape: f32[1,32], index: 2, kind: input, shape index: {}]
  %s3 = inlined_call_operand.vmem [shape: f32[1,32], index: 3, kind: input, shape index: {}]
  %s4 = inlined_call_operand.vmem [shape: bf16[32,32], index: 4, kind: input, shape index: {}]
  %s5 = inlined_call_operand.vmem [shape: f32[1,32], index: 5, kind: input, shape index: {}]
  %s6 = inlined_call_operand.vmem [shape: bf16[32,64], index: 6, kind: input, shape index: {}]
  %s7 = inlined_call_operand.vmem [shape: f32[1,64], index: 7, kind: input, shape index: {}]
  %s8 = inlined_call_operand.vmem [shape: bf16[32,32], index: 8, kind: input, shape index: {}]
  %s9 = inlined_call_operand.vmem [shape: f32[1,32], index: 9, kind: input, shape index: {}]
  %s10 = inlined_call_operand.vmem [shape: f32[2,8,32], index: 10, kind: output, shape index: {}]
  %s11 = sld [smem:[#allocation0]]
  $region73: #{encoder_decoder_forward.17} parent=0
    _
  %s13 = ssub.s32 1, %s11
  %s14 = scalar_select 0, %s13, %s11
  loop: start=0, step=1, limit=4
  $region2: #{encoder_decoder_forward.17} parent=0 // loop_pre_header
    _
  $region3: #{encoder_decoder_forward.17} parent=0 // loop_header
    %s16 = sphi 0, %s20
    %p17 = scmp.ge.s32.totalorder %s16, 4
    %s26 = sphi 0, %s28
    %s29 = sphi 0, %s26
    %s30 = sphi 0, %s29
    %s46 = sphi 0, %s30
    %s52 = sphi 0, %s54
    %s55 = sphi 0, %s52
    %s56 = sphi 0, %s55
    %s72 = sphi 0, %s56
    %s76 = sphi 0, %s76
    %s78 = sphi 0, %s76
    %s79 = sphi 0, %s78
    %s93 = sphi 0, %s79
    %s97 = sphi 0, %s97
    %s99 = sphi 0, %s97
    %s100 = sphi 0, %s99
    %s114 = sphi 0, %s100
    %s118 = sphi 0, %s118
    %s120 = sphi 0, %s118
    %s121 = sphi 0, %s120
    %s135 = sphi 0, %s121
    %s139 = sphi 0, %s139
    %s141 = sphi 0, %s139
    %s142 = sphi 0, %s141
    %s156 = sphi 0, %s142
    %s160 = sphi 0, %s160
    %s162 = sphi 0, %s160
    %s163 = sphi 0, %s162
    %s177 = sphi 0, %s163
    %s181 = sphi 0, %s181
    %s183 = sphi 0, %s181
    %s184 = sphi 0, %s183
    %s198 = sphi 0, %s184
    %s202 = sphi 0, %s202
    %s204 = sphi 0, %s202
    %s205 = sphi 0, %s204
    %s219 = sphi 0, %s205
    %s223 = sphi 0, %s223
    %s225 = sphi 0, %s223
    %s226 = sphi 0, %s225
    %s240 = sphi 0, %s226
    %s246 = sphi 0, %s248
    %s249 = sphi 0, %s246
    %s250 = sphi 0, %s249
    %s266 = sphi 0, %s250
  $region4: #{encoder_decoder_forward.17} parent=0 // loop_header_branch
    %19 = sbr.rel (%p17) target = $region8
  $region5: #{encoder_decoder_forward.17} parent=0 // loop_body
    %s21 = ssub.s32 %s16, 1
    %s22 = ssub.s32 %s16, 2
    %s23 = sadd.s32 %s16, 1
    %s24 = ssub.s32 %s16, %s23
    %p25 = scmp.eq.s32.totalorder %s24, 0
    %s27 = sadd.s32 %s26, 1
    %s28 = scalar_select %p25, %s26, %s27
    %p31 = pneg %p25
    %p32 = scmp.eq.s32.totalorder %s16, 1
    %p33 = por %p31, %p32
    %p34 = scmp.ne.s32.totalorder %s26, %s29
    %p35 = scmp.eq.s32.totalorder %s16, 0
    %p36 = por %p34, %p35
    %p37 = scmp.ne.s32.totalorder %s26, %s29
    %p38 = scmp.eq.s32.totalorder %s21, 1
    %p39 = por %p37, %p38
    %p40 = scmp.ne.s32.totalorder %s29, %s30
    %p41 = scmp.eq.s32.totalorder %s21, 0
    %p42 = por %p40, %p41
    %p43 = scmp.ne.s32.totalorder %s29, %s30
    %p44 = scmp.eq.s32.totalorder %s22, 1
    %p45 = por %p43, %p44
    %p47 = scmp.ne.s32.totalorder %s30, %s46
    %p48 = scmp.eq.s32.totalorder %s22, 0
    %p49 = por %p47, %p48
    %s50 = ssub.s32 %s16, %s23
    %p51 = scmp.eq.s32.totalorder %s50, 0
    %s53 = sadd.s32 %s52, 1
    %s54 = scalar_select %p51, %s52, %s53
    %p57 = pneg %p51
    %p58 = scmp.eq.s32.totalorder %s16, 1
    %p59 = por %p57, %p58
    %p60 = scmp.ne.s32.totalorder %s52, %s55
    %p61 = scmp.eq.s32.totalorder %s16, 0
    %p62 = por %p60, %p61
    %p63 = scmp.ne.s32.totalorder %s52, %s55
    %p64 = scmp.eq.s32.totalorder %s21, 1
    %p65 = por %p63, %p64
    %p66 = scmp.ne.s32.totalorder %s55, %s56
    %p67 = scmp.eq.s32.totalorder %s21, 0
    %p68 = por %p66, %p67
    %p69 = scmp.ne.s32.totalorder %s55, %s56
    %p70 = scmp.eq.s32.totalorder %s22, 1
    %p71 = por %p69, %p70
    %p73 = scmp.ne.s32.totalorder %s56, %s72
    %p74 = scmp.eq.s32.totalorder %s22, 0
    %p75 = por %p73, %p74
    %s77 = sadd.s32 %s76, 1
    %p80 = scmp.eq.s32.totalorder %s16, 1
    %p81 = scmp.ne.s32.totalorder %s76, %s78
    %p82 = scmp.eq.s32.totalorder %s16, 0
    %p83 = por %p81, %p82
    %p84 = scmp.ne.s32.totalorder %s76, %s78
    %p85 = scmp.eq.s32.totalorder %s21, 1
    %p86 = por %p84, %p85
    %p87 = scmp.ne.s32.totalorder %s78, %s79
    %p88 = scmp.eq.s32.totalorder %s21, 0
    %p89 = por %p87, %p88
    %p90 = scmp.ne.s32.totalorder %s78, %s79
    %p91 = scmp.eq.s32.totalorder %s22, 1
    %p92 = por %p90, %p91
    %p94 = scmp.ne.s32.totalorder %s79, %s93
    %p95 = scmp.eq.s32.totalorder %s22, 0
    %p96 = por %p94, %p95
    %s98 = sadd.s32 %s97, 1
    %p101 = scmp.eq.s32.totalorder %s16, 1
    %p102 = scmp.ne.s32.totalorder %s97, %s99
    %p103 = scmp.eq.s32.totalorder %s16, 0
    %p104 = por %p102, %p103
    %p105 = scmp.ne.s32.totalorder %s97, %s99
    %p106 = scmp.eq.s32.totalorder %s21, 1
    %p107 = por %p105, %p106
    %p108 = scmp.ne.s32.totalorder %s99, %s100
    %p109 = scmp.eq.s32.totalorder %s21, 0
    %p110 = por %p108, %p109
    %p111 = scmp.ne.s32.totalorder %s99, %s100
    %p112 = scmp.eq.s32.totalorder %s22, 1
    %p113 = por %p111, %p112
    %p115 = scmp.ne.s32.totalorder %s100, %s114
    %p116 = scmp.eq.s32.totalorder %s22, 0
    %p117 = por %p115, %p116
    %s119 = sadd.s32 %s118, 1
    %p122 = scmp.eq.s32.totalorder %s16, 1
    %p123 = scmp.ne.s32.totalorder %s118, %s120
    %p124 = scmp.eq.s32.totalorder %s16, 0
    %p125 = por %p123, %p124
    %p126 = scmp.ne.s32.totalorder %s118, %s120
    %p127 = scmp.eq.s32.totalorder %s21, 1
    %p128 = por %p126, %p127
    %p129 = scmp.ne.s32.totalorder %s120, %s121
    %p130 = scmp.eq.s32.totalorder %s21, 0
    %p131 = por %p129, %p130
    %p132 = scmp.ne.s32.totalorder %s120, %s121
    %p133 = scmp.eq.s32.totalorder %s22, 1
    %p134 = por %p132, %p133
    %p136 = scmp.ne.s32.totalorder %s121, %s135
    %p137 = scmp.eq.s32.totalorder %s22, 0
    %p138 = por %p136, %p137
    %s140 = sadd.s32 %s139, 1
    %p143 = scmp.eq.s32.totalorder %s16, 1
    %p144 = scmp.ne.s32.totalorder %s139, %s141
    %p145 = scmp.eq.s32.totalorder %s16, 0
    %p146 = por %p144, %p145
    %p147 = scmp.ne.s32.totalorder %s139, %s141
    %p148 = scmp.eq.s32.totalorder %s21, 1
    %p149 = por %p147, %p148
    %p150 = scmp.ne.s32.totalorder %s141, %s142
    %p151 = scmp.eq.s32.totalorder %s21, 0
    %p152 = por %p150, %p151
    %p153 = scmp.ne.s32.totalorder %s141, %s142
    %p154 = scmp.eq.s32.totalorder %s22, 1
    %p155 = por %p153, %p154
    %p157 = scmp.ne.s32.totalorder %s142, %s156
    %p158 = scmp.eq.s32.totalorder %s22, 0
    %p159 = por %p157, %p158
    %s161 = sadd.s32 %s160, 1
    %p164 = scmp.eq.s32.totalorder %s16, 1
    %p165 = scmp.ne.s32.totalorder %s160, %s162
    %p166 = scmp.eq.s32.totalorder %s16, 0
    %p167 = por %p165, %p166
    %p168 = scmp.ne.s32.totalorder %s160, %s162
    %p169 = scmp.eq.s32.totalorder %s21, 1
    %p170 = por %p168, %p169
    %p171 = scmp.ne.s32.totalorder %s162, %s163
    %p172 = scmp.eq.s32.totalorder %s21, 0
    %p173 = por %p171, %p172
    %p174 = scmp.ne.s32.totalorder %s162, %s163
    %p175 = scmp.eq.s32.totalorder %s22, 1
    %p176 = por %p174, %p175
    %p178 = scmp.ne.s32.totalorder %s163, %s177
    %p179 = scmp.eq.s32.totalorder %s22, 0
    %p180 = por %p178, %p179
    %s182 = sadd.s32 %s181, 1
    %p185 = scmp.eq.s32.totalorder %s16, 1
    %p186 = scmp.ne.s32.totalorder %s181, %s183
    %p187 = scmp.eq.s32.totalorder %s16, 0
    %p188 = por %p186, %p187
    %p189 = scmp.ne.s32.totalorder %s181, %s183
    %p190 = scmp.eq.s32.totalorder %s21, 1
    %p191 = por %p189, %p190
    %p192 = scmp.ne.s32.totalorder %s183, %s184
    %p193 = scmp.eq.s32.totalorder %s21, 0
    %p194 = por %p192, %p193
    %p195 = scmp.ne.s32.totalorder %s183, %s184
    %p196 = scmp.eq.s32.totalorder %s22, 1
    %p197 = por %p195, %p196
    %p199 = scmp.ne.s32.totalorder %s184, %s198
    %p200 = scmp.eq.s32.totalorder %s22, 0
    %p201 = por %p199, %p200
    %s203 = sadd.s32 %s202, 1
    %p206 = scmp.eq.s32.totalorder %s16, 1
    %p207 = scmp.ne.s32.totalorder %s202, %s204
    %p208 = scmp.eq.s32.totalorder %s16, 0
    %p209 = por %p207, %p208
    %p210 = scmp.ne.s32.totalorder %s202, %s204
    %p211 = scmp.eq.s32.totalorder %s21, 1
    %p212 = por %p210, %p211
    %p213 = scmp.ne.s32.totalorder %s204, %s205
    %p214 = scmp.eq.s32.totalorder %s21, 0
    %p215 = por %p213, %p214
    %p216 = scmp.ne.s32.totalorder %s204, %s205
    %p217 = scmp.eq.s32.totalorder %s22, 1
    %p218 = por %p216, %p217
    %p220 = scmp.ne.s32.totalorder %s205, %s219
    %p221 = scmp.eq.s32.totalorder %s22, 0
    %p222 = por %p220, %p221
    %s224 = sadd.s32 %s223, 1
    %p227 = scmp.eq.s32.totalorder %s16, 1
    %p228 = scmp.ne.s32.totalorder %s223, %s225
    %p229 = scmp.eq.s32.totalorder %s16, 0
    %p230 = por %p228, %p229
    %p231 = scmp.ne.s32.totalorder %s223, %s225
    %p232 = scmp.eq.s32.totalorder %s21, 1
    %p233 = por %p231, %p232
    %p234 = scmp.ne.s32.totalorder %s225, %s226
    %p235 = scmp.eq.s32.totalorder %s21, 0
    %p236 = por %p234, %p235
    %p237 = scmp.ne.s32.totalorder %s225, %s226
    %p238 = scmp.eq.s32.totalorder %s22, 1
    %p239 = por %p237, %p238
    %p241 = scmp.ne.s32.totalorder %s226, %s240
    %p242 = scmp.eq.s32.totalorder %s22, 0
    %p243 = por %p241, %p242
    %s244 = ssub.s32 %s16, %s23
    %p245 = scmp.eq.s32.totalorder %s244, 0
    %s247 = sadd.s32 %s246, 1
    %s248 = scalar_select %p245, %s246, %s247
    %p251 = pneg %p245
    %p252 = scmp.eq.s32.totalorder %s16, 1
    %p253 = por %p251, %p252
    %p254 = scmp.ne.s32.totalorder %s246, %s249
    %p255 = scmp.eq.s32.totalorder %s16, 0
    %p256 = por %p254, %p255
    %p257 = scmp.ne.s32.totalorder %s246, %s249
    %p258 = scmp.eq.s32.totalorder %s21, 1
    %p259 = por %p257, %p258
    %p260 = scmp.ne.s32.totalorder %s249, %s250
    %p261 = scmp.eq.s32.totalorder %s21, 0
    %p262 = por %p260, %p261
    %p263 = scmp.ne.s32.totalorder %s249, %s250
    %p264 = scmp.eq.s32.totalorder %s22, 1
    %p265 = por %p263, %p264
    %p267 = scmp.ne.s32.totalorder %s250, %s266
    %p268 = scmp.eq.s32.totalorder %s22, 0
    %p269 = por %p267, %p268
    %p270 = scmp.le.s32.totalorder 1, %s16
    %p271 = scmp.lt.s32.totalorder %s16, 3
    %p272 = pnand %p270, %p271
    %p273 = pneg %p272
    // Predicated region
    $region9: #{encoder_decoder_forward.17} parent=5 // pred_check
      _
    $region10: #{encoder_decoder_forward.17} parent=5 // pred_check_branch
      %275 = sbr.rel (%p272) target = $region12
    $region11: #{encoder_decoder_forward.17} parent=5 // pred_region
      %s276 = ssub.s32 %s16, 1
      // Predicated region
      $region13: #{encoder_decoder_forward.17} parent=11 // pred_check
        %p277 = pneg %p89
      $region14: #{encoder_decoder_forward.17} parent=11 // pred_check_branch
        %279 = sbr.rel (%p277) target = $region16
      $region15: #{encoder_decoder_forward.17} parent=11 // pred_region
        _
      $region16: #{encoder_decoder_forward.17} parent=11 // pred_fallthru
        _
      // Predicated region
      $region17: #{encoder_decoder_forward.17} parent=11 // pred_check
        %p280 = pneg %p110
      $region18: #{encoder_decoder_forward.17} parent=11 // pred_check_branch
        %282 = sbr.rel (%p280) target = $region20
      $region19: #{encoder_decoder_forward.17} parent=11 // pred_region
        _
      $region20: #{encoder_decoder_forward.17} parent=11 // pred_fallthru
        _
      // Predicated region
      $region21: #{encoder_decoder_forward.17} parent=11 // pred_check
        %p283 = pneg %p131
      $region22: #{encoder_decoder_forward.17} parent=11 // pred_check_branch
        %285 = sbr.rel (%p283) target = $region24
      $region23: #{encoder_decoder_forward.17} parent=11 // pred_region
        _
      $region24: #{encoder_decoder_forward.17} parent=11 // pred_fallthru
        _
      // Predicated region
      $region25: #{encoder_decoder_forward.17} parent=11 // pred_check
        %p286 = pneg %p152
      $region26: #{encoder_decoder_forward.17} parent=11 // pred_check_branch
        %288 = sbr.rel (%p286) target = $region28
      $region27: #{encoder_decoder_forward.17} parent=11 // pred_region
        _
      $region28: #{encoder_decoder_forward.17} parent=11 // pred_fallthru
        _
      // Predicated region
      $region29: #{encoder_decoder_forward.17} parent=11 // pred_check
        %p289 = pneg %p173
      $region30: #{encoder_decoder_forward.17} parent=11 // pred_check_branch
        %291 = sbr.rel (%p289) target = $region32
      $region31: #{encoder_decoder_forward.17} parent=11 // pred_region
        _
      $region32: #{encoder_decoder_forward.17} parent=11 // pred_fallthru
        _
      // Predicated region
      $region33: #{encoder_decoder_forward.17} parent=11 // pred_check
        %p292 = pneg %p194
      $region34: #{encoder_decoder_forward.17} parent=11 // pred_check_branch
        %294 = sbr.rel (%p292) target = $region36
      $region35: #{encoder_decoder_forward.17} parent=11 // pred_region
        _
      $region36: #{encoder_decoder_forward.17} parent=11 // pred_fallthru
        _
      // Predicated region
      $region37: #{encoder_decoder_forward.17} parent=11 // pred_check
        %p295 = pneg %p215
      $region38: #{encoder_decoder_forward.17} parent=11 // pred_check_branch
        %297 = sbr.rel (%p295) target = $region40
      $region39: #{encoder_decoder_forward.17} parent=11 // pred_region
        _
      $region40: #{encoder_decoder_forward.17} parent=11 // pred_fallthru
        _
      // Predicated region
      $region41: #{encoder_decoder_forward.17} parent=11 // pred_check
        %p298 = pneg %p236
      $region42: #{encoder_decoder_forward.17} parent=11 // pred_check_branch
        %300 = sbr.rel (%p298) target = $region44
      $region43: #{encoder_decoder_forward.17} parent=11 // pred_region
        _
      $region44: #{encoder_decoder_forward.17} parent=11 // pred_fallthru
        _
    $region12: #{encoder_decoder_forward.17} parent=5 // pred_fallthru
      _
    %p301 = scmp.lt.s32.totalorder %s16, 2
    // Predicated region
    $region45: #{encoder_decoder_forward.17} parent=5 // pred_check
      %p302 = pneg %p301
    $region46: #{encoder_decoder_forward.17} parent=5 // pred_check_branch
      %304 = sbr.rel (%p302) target = $region48
    $region47: #{encoder_decoder_forward.17} parent=5 // pred_region
      // Predicated region
      $region49: #{encoder_decoder_forward.17} parent=47 // pred_check
        %p305 = pneg %p36
      $region50: #{encoder_decoder_forward.17} parent=47 // pred_check_branch
        %307 = sbr.rel (%p305) target = $region52
      $region51: #{encoder_decoder_forward.17} parent=47 // pred_region
        %p308 = scmp.lt.s32.totalorder %s16, 1
        %s309 = scalar_select %p308, %s16, 1
        %s310 = smul.addr %s309, 8
        %s311 = scalar_lea.vmem %s0, %s310
      $region52: #{encoder_decoder_forward.17} parent=47 // pred_fallthru
        _
      // Predicated region
      $region53: #{encoder_decoder_forward.17} parent=47 // pred_check
        %p312 = pneg %p62
      $region54: #{encoder_decoder_forward.17} parent=47 // pred_check_branch
        %314 = sbr.rel (%p312) target = $region56
      $region55: #{encoder_decoder_forward.17} parent=47 // pred_region
        %p315 = scmp.lt.s32.totalorder %s16, 1
        %s316 = scalar_select %p315, %s16, 1
        %s317 = smul.addr %s316, 8
        %s318 = scalar_lea.vmem %s1, %s317
      $region56: #{encoder_decoder_forward.17} parent=47 // pred_fallthru
        _
    $region48: #{encoder_decoder_forward.17} parent=5 // pred_fallthru
      _
    %p319 = scmp.le.s32.totalorder 1, %s16
    %p320 = scmp.lt.s32.totalorder %s16, 3
    %p321 = pnand %p319, %p320
    %p322 = pneg %p321
    // Predicated region
    $region57: #{encoder_decoder_forward.17} parent=5 // pred_check
      _
    $region58: #{encoder_decoder_forward.17} parent=5 // pred_check_branch
      %324 = sbr.rel (%p321) target = $region60
    $region59: #{encoder_decoder_forward.17} parent=5 // pred_region
      %s325 = ssub.s32 %s16, 1
      %p326 = scmp.lt.s32.totalorder %s21, 1
      %s327 = scalar_select %p326, %s21, 1
      %s328 = smul.addr %s327, 8
      %s329 = scalar_lea.vmem %s0, %s328
      %p330 = pneg %p42
      %p331 = pneg %p39
      %p332 = scmp.lt.s32.totalorder %s21, 1
      %s333 = scalar_select %p332, %s21, 1
      %s334 = smul.addr %s333, 8
      %s335 = scalar_lea.vmem %s1, %s334
      %p336 = pneg %p68
      %p337 = pneg %p65
      %p338 = pneg %p89
      %p339 = pneg %p86
      %p340 = pneg %p110
      %p341 = pneg %p107
      %p342 = pneg %p131
      %p343 = pneg %p128
      %p344 = pneg %p152
      %p345 = pneg %p149
      %p346 = pneg %p173
      %p347 = pneg %p170
      %p348 = pneg %p194
      %p349 = pneg %p191
      %p350 = pneg %p215
      %p351 = pneg %p212
      %p352 = pneg %p236
      %p353 = pneg %p233
      %p354 = pneg %p262
      %p355 = pneg %p259
      %p356 = scmp.lt.s32.totalorder %s21, 1
      %s357 = scalar_select %p356, %s21, 1
      %s358 = smul.addr %s357, 8
      %s359 = scalar_lea.vmem %s10, %s358
      %p360 = scmp.lt.s32.totalorder %s21, 1
      %s361 = scalar_select %p360, %s21, 1
      %s362 = smul.addr %s361, 8
      %s363 = scalar_lea.vmem %s0, %s362
      %p364 = scmp.lt.s32.totalorder %s21, 1
      %s365 = scalar_select %p364, %s21, 1
      %s366 = smul.addr %s365, 8
      %s367 = scalar_lea.vmem %s1, %s366
      %p368 = scmp.lt.s32.totalorder %s21, 1
      %s369 = scalar_select %p368, %s21, 1
      %s370 = smul.addr %s369, 8
      %s371 = scalar_lea.vmem %s10, %s370
      %v373 = vld [vmem:[%s363] sm:$0xff]
      %v374 = vld [vmem:[%s2] sm:$0x1]
      %v375 = vld [vmem:[%s3] sm:$0x1]
      %vm376 = vcmask 261120
      %v377 = vsel %vm376, %v373, 0.0
      %378 = vadd.xlane.f32.xlu0 %v377
      %v379 = vpop.xlane.xlu0 %378
      %v380 = vrcp.pop 32.0
      %v381 = vmul.f32 %v379, %v380
      %v382 = vsub.f32 %v373, %v381
      %v383 = vmul.f32 %v382, %v382
      %v384 = vsel %vm376, %v383, 0.0
      %385 = vadd.xlane.f32.xlu0 %v384
      %v386 = vpop.xlane.xlu0 %385
      %v387 = vmul.f32 %v386, 0.032258064
      %v388 = vrsqrt.pop %v387
      %v389 = vmul.f32 %v387, %v388
      %vm390 = vcmp.eq.f32.partialorder %v387, inf
      %v391 = vsel %vm390, %v387, %v389
      %vm392 = vcmp.eq.f32.partialorder %v387, 0.0
      %v393 = vand.u32 %v387, 2147483648
      %v394 = vsel %vm392, %v393, %v391
      %v395 = vadd.f32 %v394, 1e-06
      %v396 = vrcp.pop %v395
      %v397 = vmul.f32 1.0, %v396
      %v399 = vlaneseq
      %v400 = vshrl.u32 %v399, 7
      %v401 = vsub.s32 0, %v400
      %v402 = vrot.slane %v374, %v401
      %v404 = vmul.f32 %v402, %v382
      %v405 = vmul.f32 %v404, %v397
      %v407 = vlaneseq
      %v408 = vshrl.u32 %v407, 7
      %v409 = vsub.s32 0, %v408
      %v410 = vrot.slane %v375, %v409
      %v412 = vadd.f32 %v405, %v410
      %v413 = vpack.c.bf16 %v412, %v412
      %v414 = vld [vmem:[%s4] sm:$0xf]
      %v415 = vld [vmem:[%s4 + $0x4] sm:$0xf]
      %v416 = vld [vmem:[%s4 + $0x8] sm:$0xf]
      %v417 = vld [vmem:[%s4 + $0xc] sm:$0xf]
      %v418 = vld [vmem:[%s5] sm:$0x1]
      %v420 = vlaneseq
      %v421 = vshrl.u32 %v420, 7
      %v422 = vsub.s32 0, %v421
      %v423 = vrot.slane %v418, %v422
      %v429 = vunpack.c.l.b16 %v414
      %v430 = vunpack.c.l.b16 %v415
      %v431 = vunpack.c.l.b16 %v416
      %v432 = vunpack.c.l.b16 %v417
      %v433 = vpack.c.b16 %v430, %v429
      %v434 = vpack.c.b16 %v432, %v431
      %v438 = vsel %vm376, %v413, 0
      %440 = vmatprep.subr.bf16.mxu0 0
      %441 = vmatpush1.bf16.msra.mxu0 0
      %442 = vmatprep.subr.bf16.mxu0 0
      %443 = vmatpush1.bf16.msra.mxu0 0
      %444 = vmatprep.subr.bf16.mxu0 0
      %445 = vmatpush1.bf16.msra.mxu0 0
      %446 = vmatprep.subr.bf16.mxu0 0
      %447 = vmatpush1.bf16.msra.mxu0 0
      %448 = vmatprep.subr.bf16.mxu0 0
      %449 = vmatpush1.bf16.msra.mxu0 0
      %450 = vmatprep.subr.bf16.mxu0 0
      %451 = vmatpush1.bf16.msra.mxu0 0
      %452 = vmatprep.subr.bf16.mxu0 0
      %453 = vmatpush1.bf16.msra.mxu0 %v434
      %454 = vmatprep.subr.bf16.mxu0 0
      %455 = vmatpush1.bf16.msra.mxu0 %v433
      %456 = vmatprep.subr.bf16.mxu0 0
      %457 = vmatpush2.bf16.msra.mxu0 0
      %458 = vmatprep.subr.bf16.mxu0 0
      %459 = vmatpush2.bf16.msra.mxu0 0
      %460 = vmatprep.subr.bf16.mxu0 0
      %461 = vmatpush2.bf16.msra.mxu0 0
      %462 = vmatprep.subr.bf16.mxu0 0
      %463 = vmatpush2.bf16.msra.mxu0 0
      %464 = vmatprep.subr.bf16.mxu0 0
      %465 = vmatpush2.bf16.msra.mxu0 0
      %466 = vmatprep.subr.bf16.mxu0 0
      %467 = vmatpush2.bf16.msra.mxu0 0
      %468 = vmatprep.subr.bf16.mxu0 0
      %469 = vmatpush2.bf16.msra.mxu0 0
      %470 = vmatprep.subr.bf16.mxu0 0
      %471 = vmatpush2.bf16.msra.mxu0 0
      %472 = vmatprep.mubr.bf16.mxu0 0
      %473 = vmatmul.mubr.bf16.gmra.mxu0 %v438
      %v474 = vpop.f32.mrf.mxu0
      %v475 = vadd.f32 %v423, %v474
      %v476 = vpop.f32.mrf.mxu0
      %v477 = vpop.f32.mrf.mxu0
      %v478 = vpop.f32.mrf.mxu0
      %479 = vdwg.mxu0
      %v480 = vld [vmem:[%s6] sm:$0xf]
      %v481 = vld [vmem:[%s6 + $0x4] sm:$0xf]
      %v482 = vld [vmem:[%s6 + $0x8] sm:$0xf]
      %v483 = vld [vmem:[%s6 + $0xc] sm:$0xf]
      %v484 = vld [vmem:[%s7] sm:$0x1]
      %v486 = vlaneseq
      %v487 = vshrl.u32 %v486, 7
      %v488 = vsub.s32 0, %v487
      %v489 = vrot.slane %v484, %v488
      %v495 = vunpack.c.l.b16 %v480
      %v496 = vunpack.c.l.b16 %v481
      %v497 = vunpack.c.l.b16 %v482
      %v498 = vunpack.c.l.b16 %v483
      %v499 = vpack.c.b16 %v496, %v495
      %v500 = vpack.c.b16 %v498, %v497
      %503 = vmatprep.subr.bf16.mxu0 0
      %504 = vmatpush1.bf16.msra.mxu0 0
      %505 = vmatprep.subr.bf16.mxu0 0
      %506 = vmatpush1.bf16.msra.mxu0 0
      %507 = vmatprep.subr.bf16.mxu0 0
      %508 = vmatpush1.bf16.msra.mxu0 0
      %509 = vmatprep.subr.bf16.mxu0 0
      %510 = vmatpush1.bf16.msra.mxu0 0
      %511 = vmatprep.subr.bf16.mxu0 0
      %512 = vmatpush1.bf16.msra.mxu0 0
      %513 = vmatprep.subr.bf16.mxu0 0
      %514 = vmatpush1.bf16.msra.mxu0 0
      %515 = vmatprep.subr.bf16.mxu0 0
      %516 = vmatpush1.bf16.msra.mxu0 %v500
      %517 = vmatprep.subr.bf16.mxu0 0
      %518 = vmatpush1.bf16.msra.mxu0 %v499
      %519 = vmatprep.subr.bf16.mxu0 0
      %520 = vmatpush2.bf16.msra.mxu0 0
      %521 = vmatprep.subr.bf16.mxu0 0
      %522 = vmatpush2.bf16.msra.mxu0 0
      %523 = vmatprep.subr.bf16.mxu0 0
      %524 = vmatpush2.bf16.msra.mxu0 0
      %525 = vmatprep.subr.bf16.mxu0 0
      %526 = vmatpush2.bf16.msra.mxu0 0
      %527 = vmatprep.subr.bf16.mxu0 0
      %528 = vmatpush2.bf16.msra.mxu0 0
      %529 = vmatprep.subr.bf16.mxu0 0
      %530 = vmatpush2.bf16.msra.mxu0 0
      %531 = vmatprep.subr.bf16.mxu0 0
      %532 = vmatpush2.bf16.msra.mxu0 0
      %533 = vmatprep.subr.bf16.mxu0 0
      %534 = vmatpush2.bf16.msra.mxu0 0
      %535 = vmatprep.mubr.bf16.mxu0 0
      %536 = vmatmul.mubr.bf16.gmra.mxu0 %v438
      %v537 = vpop.f32.mrf.mxu0
      %v538 = vadd.f32 %v489, %v537
      %v539 = vpop.f32.mrf.mxu0
      %v540 = vpop.f32.mrf.mxu0
      %v541 = vpop.f32.mrf.mxu0
      %542 = vdwg.mxu0
      %v543 = vmul.f32 %v475, 0.35355338
      %v544 = vpack.c.bf16 %v543, %v543
      %v545 = vpack.c.bf16 %v538, %v538
      %v546 = vld [vmem:[%s367] sm:$0xff]
      %vm547 = vcmp.gt.f32.partialorder %v546, 0.0
      %vm548 = vcmask 64512
      %v550 = vsel %vm548, %v544, 0
      %v553 = vsel %vm548, %v545, 0
      %555 = vmatprep.subr.bf16.mxu0 0
      %556 = vmatpush1.bf16.xpose.msra.mxu0 0
      %557 = vmatprep.subr.bf16.mxu0 0
      %558 = vmatpush1.bf16.xpose.msra.mxu0 0
      %559 = vmatprep.subr.bf16.mxu0 0
      %560 = vmatpush1.bf16.xpose.msra.mxu0 0
      %561 = vmatprep.subr.bf16.mxu0 0
      %562 = vmatpush1.bf16.xpose.msra.mxu0 0
      %563 = vmatprep.subr.bf16.mxu0 0
      %564 = vmatpush1.bf16.xpose.msra.mxu0 0
      %565 = vmatprep.subr.bf16.mxu0 0
      %566 = vmatpush1.bf16.xpose.msra.mxu0 0
      %567 = vmatprep.subr.bf16.mxu0 0
      %568 = vmatpush1.bf16.xpose.msra.mxu0 0
      %569 = vmatprep.subr.bf16.mxu0 0
      %570 = vmatpush1.bf16.xpose.msra.mxu0 %v553
      %571 = vmatprep.subr.bf16.mxu0 0
      %572 = vmatpush2.bf16.xpose.msra.mxu0 0
      %573 = vmatprep.subr.bf16.mxu0 0
      %574 = vmatpush2.bf16.xpose.msra.mxu0 0
      %575 = vmatprep.subr.bf16.mxu0 0
      %576 = vmatpush2.bf16.xpose.msra.mxu0 0
      %577 = vmatprep.subr.bf16.mxu0 0
      %578 = vmatpush2.bf16.xpose.msra.mxu0 0
      %579 = vmatprep.subr.bf16.mxu0 0
      %580 = vmatpush2.bf16.xpose.msra.mxu0 0
      %581 = vmatprep.subr.bf16.mxu0 0
      %582 = vmatpush2.bf16.xpose.msra.mxu0 0
      %583 = vmatprep.subr.bf16.mxu0 0
      %584 = vmatpush2.bf16.xpose.msra.mxu0 0
      %585 = vmatprep.subr.bf16.mxu0 0
      %586 = vmatpush2.bf16.xpose.msra.mxu0 0
      %587 = vmatprep.mubr.bf16.mxu0 0
      %588 = vmatmul.mubr.bf16.gmra.mxu0 %v550
      %v589 = vpop.f32.mrf.mxu0
      %v590 = vadd.f32 0.0, %v589
      %v591 = vpop.f32.mrf.mxu0
      %v592 = vpop.f32.mrf.mxu0
      %v593 = vpop.f32.mrf.mxu0
      %594 = vdwg.mxu0
      %v595 = vsel %vm547, %v590, -1e+09
      %v596 = vsel %vm548, %v595, -inf
      %597 = vmax.xlane.f32.xlu0 %v596
      %v598 = vpop.xlane.xlu0 %597
      %v599 = vsub.f32 %v595, %v598
      %v600 = vmul.f32 %v599, 1.442695
      %v601 = vpow.pop %v600
      %v602 = vsel %vm548, %v601, 0.0
      %603 = vadd.xlane.f32.xlu0 %v602
      %v604 = vpop.xlane.xlu0 %603
      %v605 = vrcp.pop %v604
      %v606 = vmul.f32 %v601, %v605
      %v607 = vpack.c.bf16 %v606, %v606
      %609 = vrot.lane.b32.xlu0 %v545, 96
      %v610 = vpop.permute.xlu0 %609
      %v612 = vsel %vm548, %v607, 0
      %vm614 = vcmask 1043456
      %v616 = vsel %vm614, %v610, 0
      %618 = vmatprep.subr.bf16.mxu0 0
      %619 = vmatpush1.bf16.msra.mxu0 0
      %620 = vmatprep.subr.bf16.mxu0 0
      %621 = vmatpush1.bf16.msra.mxu0 0
      %622 = vmatprep.subr.bf16.mxu0 0
      %623 = vmatpush1.bf16.msra.mxu0 0
      %624 = vmatprep.subr.bf16.mxu0 0
      %625 = vmatpush1.bf16.msra.mxu0 0
      %626 = vmatprep.subr.bf16.mxu0 0
      %627 = vmatpush1.bf16.msra.mxu0 0
      %628 = vmatprep.subr.bf16.mxu0 0
      %629 = vmatpush1.bf16.msra.mxu0 0
      %630 = vmatprep.subr.bf16.mxu0 0
      %631 = vmatpush1.bf16.msra.mxu0 0
      %632 = vmatprep.subr.bf16.mxu0 0
      %633 = vmatpush1.bf16.msra.mxu0 %v616
      %634 = vmatprep.subr.bf16.mxu0 0
      %635 = vmatpush2.bf16.msra.mxu0 0
      %636 = vmatprep.subr.bf16.mxu0 0
      %637 = vmatpush2.bf16.msra.mxu0 0
      %638 = vmatprep.subr.bf16.mxu0 0
      %639 = vmatpush2.bf16.msra.mxu0 0
      %640 = vmatprep.subr.bf16.mxu0 0
      %641 = vmatpush2.bf16.msra.mxu0 0
      %642 = vmatprep.subr.bf16.mxu0 0
      %643 = vmatpush2.bf16.msra.mxu0 0
      %644 = vmatprep.subr.bf16.mxu0 0
      %645 = vmatpush2.bf16.msra.mxu0 0
      %646 = vmatprep.subr.bf16.mxu0 0
      %647 = vmatpush2.bf16.msra.mxu0 0
      %648 = vmatprep.subr.bf16.mxu0 0
      %649 = vmatpush2.bf16.msra.mxu0 0
      %650 = vmatprep.mubr.bf16.mxu0 0
      %651 = vmatmul.mubr.bf16.gmra.mxu0 %v612
      %v652 = vpop.f32.mrf.mxu0
      %v653 = vadd.f32 0.0, %v652
      %v654 = vpop.f32.mrf.mxu0
      %v655 = vpop.f32.mrf.mxu0
      %v656 = vpop.f32.mrf.mxu0
      %657 = vdwg.mxu0
      %659 = vrot.lane.b32.xlu0 %v544, 120
      %v660 = vpop.permute.xlu0 %659
      %661 = vrot.lane.b32.xlu0 %v545, 120
      %v662 = vpop.permute.xlu0 %661
      %v664 = vsel %vm548, %v660, 0
      %v667 = vsel %vm548, %v662, 0
      %669 = vmatprep.subr.bf16.mxu0 0
      %670 = vmatpush1.bf16.xpose.msra.mxu0 0
      %671 = vmatprep.subr.bf16.mxu0 0
      %672 = vmatpush1.bf16.xpose.msra.mxu0 0
      %673 = vmatprep.subr.bf16.mxu0 0
      %674 = vmatpush1.bf16.xpose.msra.mxu0 0
      %675 = vmatprep.subr.bf16.mxu0 0
      %676 = vmatpush1.bf16.xpose.msra.mxu0 0
      %677 = vmatprep.subr.bf16.mxu0 0
      %678 = vmatpush1.bf16.xpose.msra.mxu0 0
      %679 = vmatprep.subr.bf16.mxu0 0
      %680 = vmatpush1.bf16.xpose.msra.mxu0 0
      %681 = vmatprep.subr.bf16.mxu0 0
      %682 = vmatpush1.bf16.xpose.msra.mxu0 0
      %683 = vmatprep.subr.bf16.mxu0 0
      %684 = vmatpush1.bf16.xpose.msra.mxu0 %v667
      %685 = vmatprep.subr.bf16.mxu0 0
      %686 = vmatpush2.bf16.xpose.msra.mxu0 0
      %687 = vmatprep.subr.bf16.mxu0 0
      %688 = vmatpush2.bf16.xpose.msra.mxu0 0
      %689 = vmatprep.subr.bf16.mxu0 0
      %690 = vmatpush2.bf16.xpose.msra.mxu0 0
      %691 = vmatprep.subr.bf16.mxu0 0
      %692 = vmatpush2.bf16.xpose.msra.mxu0 0
      %693 = vmatprep.subr.bf16.mxu0 0
      %694 = vmatpush2.bf16.xpose.msra.mxu0 0
      %695 = vmatprep.subr.bf16.mxu0 0
      %696 = vmatpush2.bf16.xpose.msra.mxu0 0
      %697 = vmatprep.subr.bf16.mxu0 0
      %698 = vmatpush2.bf16.xpose.msra.mxu0 0
      %699 = vmatprep.subr.bf16.mxu0 0
      %700 = vmatpush2.bf16.xpose.msra.mxu0 0
      %701 = vmatprep.mubr.bf16.mxu0 0
      %702 = vmatmul.mubr.bf16.gmra.mxu0 %v664
      %v703 = vpop.f32.mrf.mxu0
      %v704 = vadd.f32 0.0, %v703
      %v705 = vpop.f32.mrf.mxu0
      %v706 = vpop.f32.mrf.mxu0
      %v707 = vpop.f32.mrf.mxu0
      %708 = vdwg.mxu0
      %v709 = vsel %vm547, %v704, -1e+09
      %v710 = vsel %vm548, %v709, -inf
      %711 = vmax.xlane.f32.xlu0 %v710
      %v712 = vpop.xlane.xlu0 %711
      %v713 = vsub.f32 %v709, %v712
      %v714 = vmul.f32 %v713, 1.442695
      %v715 = vpow.pop %v714
      %v716 = vsel %vm548, %v715, 0.0
      %717 = vadd.xlane.f32.xlu0 %v716
      %v718 = vpop.xlane.xlu0 %717
      %v719 = vrcp.pop %v718
      %v720 = vmul.f32 %v715, %v719
      %v721 = vpack.c.bf16 %v720, %v720
      %722 = vrot.lane.b32.xlu0 %v545, 88
      %v723 = vpop.permute.xlu0 %722
      %v725 = vsel %vm548, %v721, 0
      %v728 = vsel %vm614, %v723, 0
      %730 = vmatprep.subr.bf16.mxu0 0
      %731 = vmatpush1.bf16.msra.mxu0 0
      %732 = vmatprep.subr.bf16.mxu0 0
      %733 = vmatpush1.bf16.msra.mxu0 0
      %734 = vmatprep.subr.bf16.mxu0 0
      %735 = vmatpush1.bf16.msra.mxu0 0
      %736 = vmatprep.subr.bf16.mxu0 0
      %737 = vmatpush1.bf16.msra.mxu0 0
      %738 = vmatprep.subr.bf16.mxu0 0
      %739 = vmatpush1.bf16.msra.mxu0 0
      %740 = vmatprep.subr.bf16.mxu0 0
      %741 = vmatpush1.bf16.msra.mxu0 0
      %742 = vmatprep.subr.bf16.mxu0 0
      %743 = vmatpush1.bf16.msra.mxu0 0
      %744 = vmatprep.subr.bf16.mxu0 0
      %745 = vmatpush1.bf16.msra.mxu0 %v728
      %746 = vmatprep.subr.bf16.mxu0 0
      %747 = vmatpush2.bf16.msra.mxu0 0
      %748 = vmatprep.subr.bf16.mxu0 0
      %749 = vmatpush2.bf16.msra.mxu0 0
      %750 = vmatprep.subr.bf16.mxu0 0
      %751 = vmatpush2.bf16.msra.mxu0 0
      %752 = vmatprep.subr.bf16.mxu0 0
      %753 = vmatpush2.bf16.msra.mxu0 0
      %754 = vmatprep.subr.bf16.mxu0 0
      %755 = vmatpush2.bf16.msra.mxu0 0
      %756 = vmatprep.subr.bf16.mxu0 0
      %757 = vmatpush2.bf16.msra.mxu0 0
      %758 = vmatprep.subr.bf16.mxu0 0
      %759 = vmatpush2.bf16.msra.mxu0 0
      %760 = vmatprep.subr.bf16.mxu0 0
      %761 = vmatpush2.bf16.msra.mxu0 0
      %762 = vmatprep.mubr.bf16.mxu0 0
      %763 = vmatmul.mubr.bf16.gmra.mxu0 %v725
      %v764 = vpop.f32.mrf.mxu0
      %v765 = vadd.f32 0.0, %v764
      %v766 = vpop.f32.mrf.mxu0
      %v767 = vpop.f32.mrf.mxu0
      %v768 = vpop.f32.mrf.mxu0
      %769 = vdwg.mxu0
      %770 = vrot.lane.b32.xlu0 %v544, 112
      %v771 = vpop.permute.xlu0 %770
      %772 = vrot.lane.b32.xlu0 %v545, 112
      %v773 = vpop.permute.xlu0 %772
      %v775 = vsel %vm548, %v771, 0
      %v778 = vsel %vm548, %v773, 0
      %780 = vmatprep.subr.bf16.mxu0 0
      %781 = vmatpush1.bf16.xpose.msra.mxu0 0
      %782 = vmatprep.subr.bf16.mxu0 0
      %783 = vmatpush1.bf16.xpose.msra.mxu0 0
      %784 = vmatprep.subr.bf16.mxu0 0
      %785 = vmatpush1.bf16.xpose.msra.mxu0 0
      %786 = vmatprep.subr.bf16.mxu0 0
      %787 = vmatpush1.bf16.xpose.msra.mxu0 0
      %788 = vmatprep.subr.bf16.mxu0 0
      %789 = vmatpush1.bf16.xpose.msra.mxu0 0
      %790 = vmatprep.subr.bf16.mxu0 0
      %791 = vmatpush1.bf16.xpose.msra.mxu0 0
      %792 = vmatprep.subr.bf16.mxu0 0
      %793 = vmatpush1.bf16.xpose.msra.mxu0 0
      %794 = vmatprep.subr.bf16.mxu0 0
      %795 = vmatpush1.bf16.xpose.msra.mxu0 %v778
      %796 = vmatprep.subr.bf16.mxu0 0
      %797 = vmatpush2.bf16.xpose.msra.mxu0 0
      %798 = vmatprep.subr.bf16.mxu0 0
      %799 = vmatpush2.bf16.xpose.msra.mxu0 0
      %800 = vmatprep.subr.bf16.mxu0 0
      %801 = vmatpush2.bf16.xpose.msra.mxu0 0
      %802 = vmatprep.subr.bf16.mxu0 0
      %803 = vmatpush2.bf16.xpose.msra.mxu0 0
      %804 = vmatprep.subr.bf16.mxu0 0
      %805 = vmatpush2.bf16.xpose.msra.mxu0 0
      %806 = vmatprep.subr.bf16.mxu0 0
      %807 = vmatpush2.bf16.xpose.msra.mxu0 0
      %808 = vmatprep.subr.bf16.mxu0 0
      %809 = vmatpush2.bf16.xpose.msra.mxu0 0
      %810 = vmatprep.subr.bf16.mxu0 0
      %811 = vmatpush2.bf16.xpose.msra.mxu0 0
      %812 = vmatprep.mubr.bf16.mxu0 0
      %813 = vmatmul.mubr.bf16.gmra.mxu0 %v775
      %v814 = vpop.f32.mrf.mxu0
      %v815 = vadd.f32 0.0, %v814
      %v816 = vpop.f32.mrf.mxu0
      %v817 = vpop.f32.mrf.mxu0
      %v818 = vpop.f32.mrf.mxu0
      %819 = vdwg.mxu0
      %v820 = vsel %vm547, %v815, -1e+09
      %v821 = vsel %vm548, %v820, -inf
      %822 = vmax.xlane.f32.xlu0 %v821
      %v823 = vpop.xlane.xlu0 %822
      %v824 = vsub.f32 %v820, %v823
      %v825 = vmul.f32 %v824, 1.442695
      %v826 = vpow.pop %v825
      %v827 = vsel %vm548, %v826, 0.0
      %828 = vadd.xlane.f32.xlu0 %v827
      %v829 = vpop.xlane.xlu0 %828
      %v830 = vrcp.pop %v829
      %v831 = vmul.f32 %v826, %v830
      %v832 = vpack.c.bf16 %v831, %v831
      %833 = vrot.lane.b32.xlu0 %v545, 80
      %v834 = vpop.permute.xlu0 %833
      %v836 = vsel %vm548, %v832, 0
      %v839 = vsel %vm614, %v834, 0
      %841 = vmatprep.subr.bf16.mxu0 0
      %842 = vmatpush1.bf16.msra.mxu0 0
      %843 = vmatprep.subr.bf16.mxu0 0
      %844 = vmatpush1.bf16.msra.mxu0 0
      %845 = vmatprep.subr.bf16.mxu0 0
      %846 = vmatpush1.bf16.msra.mxu0 0
      %847 = vmatprep.subr.bf16.mxu0 0
      %848 = vmatpush1.bf16.msra.mxu0 0
      %849 = vmatprep.subr.bf16.mxu0 0
      %850 = vmatpush1.bf16.msra.mxu0 0
      %851 = vmatprep.subr.bf16.mxu0 0
      %852 = vmatpush1.bf16.msra.mxu0 0
      %853 = vmatprep.subr.bf16.mxu0 0
      %854 = vmatpush1.bf16.msra.mxu0 0
      %855 = vmatprep.subr.bf16.mxu0 0
      %856 = vmatpush1.bf16.msra.mxu0 %v839
      %857 = vmatprep.subr.bf16.mxu0 0
      %858 = vmatpush2.bf16.msra.mxu0 0
      %859 = vmatprep.subr.bf16.mxu0 0
      %860 = vmatpush2.bf16.msra.mxu0 0
      %861 = vmatprep.subr.bf16.mxu0 0
      %862 = vmatpush2.bf16.msra.mxu0 0
      %863 = vmatprep.subr.bf16.mxu0 0
      %864 = vmatpush2.bf16.msra.mxu0 0
      %865 = vmatprep.subr.bf16.mxu0 0
      %866 = vmatpush2.bf16.msra.mxu0 0
      %867 = vmatprep.subr.bf16.mxu0 0
      %868 = vmatpush2.bf16.msra.mxu0 0
      %869 = vmatprep.subr.bf16.mxu0 0
      %870 = vmatpush2.bf16.msra.mxu0 0
      %871 = vmatprep.subr.bf16.mxu0 0
      %872 = vmatpush2.bf16.msra.mxu0 0
      %873 = vmatprep.mubr.bf16.mxu0 0
      %874 = vmatmul.mubr.bf16.gmra.mxu0 %v836
      %v875 = vpop.f32.mrf.mxu0
      %v876 = vadd.f32 0.0, %v875
      %v877 = vpop.f32.mrf.mxu0
      %v878 = vpop.f32.mrf.mxu0
      %v879 = vpop.f32.mrf.mxu0
      %880 = vdwg.mxu0
      %881 = vrot.lane.b32.xlu0 %v544, 104
      %v882 = vpop.permute.xlu0 %881
      %883 = vrot.lane.b32.xlu0 %v545, 104
      %v884 = vpop.permute.xlu0 %883
      %v886 = vsel %vm548, %v882, 0
      %v889 = vsel %vm548, %v884, 0
      %891 = vmatprep.subr.bf16.mxu0 0
      %892 = vmatpush1.bf16.xpose.msra.mxu0 0
      %893 = vmatprep.subr.bf16.mxu0 0
      %894 = vmatpush1.bf16.xpose.msra.mxu0 0
      %895 = vmatprep.subr.bf16.mxu0 0
      %896 = vmatpush1.bf16.xpose.msra.mxu0 0
      %897 = vmatprep.subr.bf16.mxu0 0
      %898 = vmatpush1.bf16.xpose.msra.mxu0 0
      %899 = vmatprep.subr.bf16.mxu0 0
      %900 = vmatpush1.bf16.xpose.msra.mxu0 0
      %901 = vmatprep.subr.bf16.mxu0 0
      %902 = vmatpush1.bf16.xpose.msra.mxu0 0
      %903 = vmatprep.subr.bf16.mxu0 0
      %904 = vmatpush1.bf16.xpose.msra.mxu0 0
      %905 = vmatprep.subr.bf16.mxu0 0
      %906 = vmatpush1.bf16.xpose.msra.mxu0 %v889
      %907 = vmatprep.subr.bf16.mxu0 0
      %908 = vmatpush2.bf16.xpose.msra.mxu0 0
      %909 = vmatprep.subr.bf16.mxu0 0
      %910 = vmatpush2.bf16.xpose.msra.mxu0 0
      %911 = vmatprep.subr.bf16.mxu0 0
      %912 = vmatpush2.bf16.xpose.msra.mxu0 0
      %913 = vmatprep.subr.bf16.mxu0 0
      %914 = vmatpush2.bf16.xpose.msra.mxu0 0
      %915 = vmatprep.subr.bf16.mxu0 0
      %916 = vmatpush2.bf16.xpose.msra.mxu0 0
      %917 = vmatprep.subr.bf16.mxu0 0
      %918 = vmatpush2.bf16.xpose.msra.mxu0 0
      %919 = vmatprep.subr.bf16.mxu0 0
      %920 = vmatpush2.bf16.xpose.msra.mxu0 0
      %921 = vmatprep.subr.bf16.mxu0 0
      %922 = vmatpush2.bf16.xpose.msra.mxu0 0
      %923 = vmatprep.mubr.bf16.mxu0 0
      %924 = vmatmul.mubr.bf16.gmra.mxu0 %v886
      %v925 = vpop.f32.mrf.mxu0
      %v926 = vadd.f32 0.0, %v925
      %v927 = vpop.f32.mrf.mxu0
      %v928 = vpop.f32.mrf.mxu0
      %v929 = vpop.f32.mrf.mxu0
      %930 = vdwg.mxu0
      %v931 = vsel %vm547, %v926, -1e+09
      %v932 = vsel %vm548, %v931, -inf
      %933 = vmax.xlane.f32.xlu0 %v932
      %v934 = vpop.xlane.xlu0 %933
      %v935 = vsub.f32 %v931, %v934
      %v936 = vmul.f32 %v935, 1.442695
      %v937 = vpow.pop %v936
      %v938 = vsel %vm548, %v937, 0.0
      %939 = vadd.xlane.f32.xlu0 %v938
      %v940 = vpop.xlane.xlu0 %939
      %v941 = vrcp.pop %v940
      %v942 = vmul.f32 %v937, %v941
      %v943 = vpack.c.bf16 %v942, %v942
      %944 = vrot.lane.b32.xlu0 %v545, 72
      %v945 = vpop.permute.xlu0 %944
      %v947 = vsel %vm548, %v943, 0
      %v950 = vsel %vm614, %v945, 0
      %952 = vmatprep.subr.bf16.mxu0 0
      %953 = vmatpush1.bf16.msra.mxu0 0
      %954 = vmatprep.subr.bf16.mxu0 0
      %955 = vmatpush1.bf16.msra.mxu0 0
      %956 = vmatprep.subr.bf16.mxu0 0
      %957 = vmatpush1.bf16.msra.mxu0 0
      %958 = vmatprep.subr.bf16.mxu0 0
      %959 = vmatpush1.bf16.msra.mxu0 0
      %960 = vmatprep.subr.bf16.mxu0 0
      %961 = vmatpush1.bf16.msra.mxu0 0
      %962 = vmatprep.subr.bf16.mxu0 0
      %963 = vmatpush1.bf16.msra.mxu0 0
      %964 = vmatprep.subr.bf16.mxu0 0
      %965 = vmatpush1.bf16.msra.mxu0 0
      %966 = vmatprep.subr.bf16.mxu0 0
      %967 = vmatpush1.bf16.msra.mxu0 %v950
      %968 = vmatprep.subr.bf16.mxu0 0
      %969 = vmatpush2.bf16.msra.mxu0 0
      %970 = vmatprep.subr.bf16.mxu0 0
      %971 = vmatpush2.bf16.msra.mxu0 0
      %972 = vmatprep.subr.bf16.mxu0 0
      %973 = vmatpush2.bf16.msra.mxu0 0
      %974 = vmatprep.subr.bf16.mxu0 0
      %975 = vmatpush2.bf16.msra.mxu0 0
      %976 = vmatprep.subr.bf16.mxu0 0
      %977 = vmatpush2.bf16.msra.mxu0 0
      %978 = vmatprep.subr.bf16.mxu0 0
      %979 = vmatpush2.bf16.msra.mxu0 0
      %980 = vmatprep.subr.bf16.mxu0 0
      %981 = vmatpush2.bf16.msra.mxu0 0
      %982 = vmatprep.subr.bf16.mxu0 0
      %983 = vmatpush2.bf16.msra.mxu0 0
      %984 = vmatprep.mubr.bf16.mxu0 0
      %985 = vmatmul.mubr.bf16.gmra.mxu0 %v947
      %v986 = vpop.f32.mrf.mxu0
      %v987 = vadd.f32 0.0, %v986
      %v988 = vpop.f32.mrf.mxu0
      %v989 = vpop.f32.mrf.mxu0
      %v990 = vpop.f32.mrf.mxu0
      %991 = vdwg.mxu0
      %993 = vrot.lane.b32.xlu0 %v765, 8
      %v994 = vpop.permute.xlu0 %993
      %997 = vrot.lane.b32.xlu0 %v876, 16
      %v998 = vpop.permute.xlu0 %997
      %1001 = vrot.lane.b32.xlu0 %v987, 24
      %v1002 = vpop.permute.xlu0 %1001
      %v1004 = vsel %vm548, %v653, %v994
      %vm1005 = vcmask 130048
      %v1006 = vsel %vm1005, %v1004, %v998
      %vm1007 = vcmask 195584
      %v1008 = vsel %vm1007, %v1006, %v1002
      %v1009 = vpack.c.bf16 %v1008, %v1008
      %v1010 = vld [vmem:[%s8] sm:$0xf]
      %v1011 = vld [vmem:[%s8 + $0x4] sm:$0xf]
      %v1012 = vld [vmem:[%s8 + $0x8] sm:$0xf]
      %v1013 = vld [vmem:[%s8 + $0xc] sm:$0xf]
      %v1014 = vld [vmem:[%s9] sm:$0x1]
      %v1016 = vlaneseq
      %v1017 = vshrl.u32 %v1016, 7
      %v1018 = vsub.s32 0, %v1017
      %v1019 = vrot.slane %v1014, %v1018
      %v1025 = vunpack.c.l.b16 %v1010
      %v1026 = vunpack.c.l.b16 %v1011
      %v1027 = vunpack.c.l.b16 %v1012
      %v1028 = vunpack.c.l.b16 %v1013
      %v1029 = vpack.c.b16 %v1026, %v1025
      %v1030 = vpack.c.b16 %v1028, %v1027
      %v1034 = vsel %vm376, %v1009, 0
      %1036 = vmatprep.subr.bf16.mxu0 0
      %1037 = vmatpush1.bf16.msra.mxu0 0
      %1038 = vmatprep.subr.bf16.mxu0 0
      %1039 = vmatpush1.bf16.msra.mxu0 0
      %1040 = vmatprep.subr.bf16.mxu0 0
      %1041 = vmatpush1.bf16.msra.mxu0 0
      %1042 = vmatprep.subr.bf16.mxu0 0
      %1043 = vmatpush1.bf16.msra.mxu0 0
      %1044 = vmatprep.subr.bf16.mxu0 0
      %1045 = vmatpush1.bf16.msra.mxu0 0
      %1046 = vmatprep.subr.bf16.mxu0 0
      %1047 = vmatpush1.bf16.msra.mxu0 0
      %1048 = vmatprep.subr.bf16.mxu0 0
      %1049 = vmatpush1.bf16.msra.mxu0 %v1030
      %1050 = vmatprep.subr.bf16.mxu0 0
      %1051 = vmatpush1.bf16.msra.mxu0 %v1029
      %1052 = vmatprep.subr.bf16.mxu0 0
      %1053 = vmatpush2.bf16.msra.mxu0 0
      %1054 = vmatprep.subr.bf16.mxu0 0
      %1055 = vmatpush2.bf16.msra.mxu0 0
      %1056 = vmatprep.subr.bf16.mxu0 0
      %1057 = vmatpush2.bf16.msra.mxu0 0
      %1058 = vmatprep.subr.bf16.mxu0 0
      %1059 = vmatpush2.bf16.msra.mxu0 0
      %1060 = vmatprep.subr.bf16.mxu0 0
      %1061 = vmatpush2.bf16.msra.mxu0 0
      %1062 = vmatprep.subr.bf16.mxu0 0
      %1063 = vmatpush2.bf16.msra.mxu0 0
      %1064 = vmatprep.subr.bf16.mxu0 0
      %1065 = vmatpush2.bf16.msra.mxu0 0
      %1066 = vmatprep.subr.bf16.mxu0 0
      %1067 = vmatpush2.bf16.msra.mxu0 0
      %1068 = vmatprep.mubr.bf16.mxu0 0
      %1069 = vmatmul.mubr.bf16.gmra.mxu0 %v1034
      %v1070 = vpop.f32.mrf.mxu0
      %v1071 = vadd.f32 %v1019, %v1070
      %v1072 = vpop.f32.mrf.mxu0
      %v1073 = vpop.f32.mrf.mxu0
      %v1074 = vpop.f32.mrf.mxu0
      %1075 = vdwg.mxu0
      %v1076 = vadd.f32 %v373, %v1071
      %1077 = vst.msk [vmem:[%s371] sm:$0xff] %vm376, %v1076
      %p1078 = scmp.lt.s32.totalorder %s21, 1
      %s1079 = scalar_select %p1078, %s21, 1
      %s1080 = smul.addr %s1079, 8
      %s1081 = scalar_lea.vmem %s10, %s1080
      // Predicated region
      $region61: #{encoder_decoder_forward.17} parent=59 // pred_check
        %p1082 = pneg %p259
      $region62: #{encoder_decoder_forward.17} parent=59 // pred_check_branch
        %1084 = sbr.rel (%p1082) target = $region64
      $region63: #{encoder_decoder_forward.17} parent=59 // pred_region
        _
      $region64: #{encoder_decoder_forward.17} parent=59 // pred_fallthru
        _
    $region60: #{encoder_decoder_forward.17} parent=5 // pred_fallthru
      _
    %p1085 = scmp.le.s32.totalorder 2, %s16
    // Predicated region
    $region65: #{encoder_decoder_forward.17} parent=5 // pred_check
      %p1086 = pneg %p1085
    $region66: #{encoder_decoder_forward.17} parent=5 // pred_check_branch
      %1088 = sbr.rel (%p1086) target = $region68
    $region67: #{encoder_decoder_forward.17} parent=5 // pred_region
      %s1089 = ssub.s32 %s16, 2
      // Predicated region
      $region69: #{encoder_decoder_forward.17} parent=67 // pred_check
        %p1090 = pneg %p265
      $region70: #{encoder_decoder_forward.17} parent=67 // pred_check_branch
        %1092 = sbr.rel (%p1090) target = $region72
      $region71: #{encoder_decoder_forward.17} parent=67 // pred_region
        %p1093 = scmp.lt.s32.totalorder %s22, 1
        %s1094 = scalar_select %p1093, %s22, 1
        %s1095 = smul.addr %s1094, 8
        %s1096 = scalar_lea.vmem %s10, %s1095
      $region72: #{encoder_decoder_forward.17} parent=67 // pred_fallthru
        _
    $region68: #{encoder_decoder_forward.17} parent=5 // pred_fallthru
      _
  $region6: #{encoder_decoder_forward.17} parent=0 // loop_footer
    %s20 = sadd.s32 1, %s16
  $region7: #{encoder_decoder_forward.17} parent=0 // loop_footer_branch
    %15 = sbr.rel target = $region3
  $region8: #{encoder_decoder_forward.17} parent=0 // loop_exit
    _

// kernel: encoder_decoder_forward.12
$region0: #{encoder_decoder_forward.12}
  #allocation0 [shape = 'u32[]', space=smem, size = 0x4, offset = 0x4, fixed_abs, tag = 'smem constant byte address 0x4 - core index']
  #allocation1 [shape = 'u32[144,128]{1,0:T(1,128)}', space=vmem, size = 0x12000, scoped, tag = 'internal scratch']
  %s0 = inlined_call_operand.vmem [shape: f32[2,8,32], index: 0, kind: input, shape index: {}]
  %s1 = inlined_call_operand.vmem [shape: f32[2,1,8], index: 1, kind: input, shape index: {}]
  %s2 = inlined_call_operand.vmem [shape: f32[1,32], index: 2, kind: input, shape index: {}]
  %s3 = inlined_call_operand.vmem [shape: f32[1,32], index: 3, kind: input, shape index: {}]
  %s4 = inlined_call_operand.vmem [shape: bf16[32,32], index: 4, kind: input, shape index: {}]
  %s5 = inlined_call_operand.vmem [shape: f32[1,32], index: 5, kind: input, shape index: {}]
  %s6 = inlined_call_operand.vmem [shape: bf16[32,64], index: 6, kind: input, shape index: {}]
  %s7 = inlined_call_operand.vmem [shape: f32[1,64], index: 7, kind: input, shape index: {}]
  %s8 = inlined_call_operand.vmem [shape: bf16[32,32], index: 8, kind: input, shape index: {}]
  %s9 = inlined_call_operand.vmem [shape: f32[1,32], index: 9, kind: input, shape index: {}]
  %s10 = inlined_call_operand.vmem [shape: f32[2,8,32], index: 10, kind: output, shape index: {}]
  %s11 = sld [smem:[#allocation0]]
  $region73: #{encoder_decoder_forward.12} parent=0
    _
  %s13 = ssub.s32 1, %s11
  %s14 = scalar_select 0, %s13, %s11
  loop: start=0, step=1, limit=4
  $region2: #{encoder_decoder_forward.12} parent=0 // loop_pre_header
    _
  $region3: #{encoder_decoder_forward.12} parent=0 // loop_header
    %s16 = sphi 0, %s20
    %p17 = scmp.ge.s32.totalorder %s16, 4
    %s26 = sphi 0, %s28
    %s29 = sphi 0, %s26
    %s30 = sphi 0, %s29
    %s46 = sphi 0, %s30
    %s52 = sphi 0, %s54
    %s55 = sphi 0, %s52
    %s56 = sphi 0, %s55
    %s72 = sphi 0, %s56
    %s76 = sphi 0, %s76
    %s78 = sphi 0, %s76
    %s79 = sphi 0, %s78
    %s93 = sphi 0, %s79
    %s97 = sphi 0, %s97
    %s99 = sphi 0, %s97
    %s100 = sphi 0, %s99
    %s114 = sphi 0, %s100
    %s118 = sphi 0, %s118
    %s120 = sphi 0, %s118
    %s121 = sphi 0, %s120
    %s135 = sphi 0, %s121
    %s139 = sphi 0, %s139
    %s141 = sphi 0, %s139
    %s142 = sphi 0, %s141
    %s156 = sphi 0, %s142
    %s160 = sphi 0, %s160
    %s162 = sphi 0, %s160
    %s163 = sphi 0, %s162
    %s177 = sphi 0, %s163
    %s181 = sphi 0, %s181
    %s183 = sphi 0, %s181
    %s184 = sphi 0, %s183
    %s198 = sphi 0, %s184
    %s202 = sphi 0, %s202
    %s204 = sphi 0, %s202
    %s205 = sphi 0, %s204
    %s219 = sphi 0, %s205
    %s223 = sphi 0, %s223
    %s225 = sphi 0, %s223
    %s226 = sphi 0, %s225
    %s240 = sphi 0, %s226
    %s246 = sphi 0, %s248
    %s249 = sphi 0, %s246
    %s250 = sphi 0, %s249
    %s266 = sphi 0, %s250
  $region4: #{encoder_decoder_forward.12} parent=0 // loop_header_branch
    %19 = sbr.rel (%p17) target = $region8
  $region5: #{encoder_decoder_forward.12} parent=0 // loop_body
    %s21 = ssub.s32 %s16, 1
    %s22 = ssub.s32 %s16, 2
    %s23 = sadd.s32 %s16, 1
    %s24 = ssub.s32 %s16, %s23
    %p25 = scmp.eq.s32.totalorder %s24, 0
    %s27 = sadd.s32 %s26, 1
    %s28 = scalar_select %p25, %s26, %s27
    %p31 = pneg %p25
    %p32 = scmp.eq.s32.totalorder %s16, 1
    %p33 = por %p31, %p32
    %p34 = scmp.ne.s32.totalorder %s26, %s29
    %p35 = scmp.eq.s32.totalorder %s16, 0
    %p36 = por %p34, %p35
    %p37 = scmp.ne.s32.totalorder %s26, %s29
    %p38 = scmp.eq.s32.totalorder %s21, 1
    %p39 = por %p37, %p38
    %p40 = scmp.ne.s32.totalorder %s29, %s30
    %p41 = scmp.eq.s32.totalorder %s21, 0
    %p42 = por %p40, %p41
    %p43 = scmp.ne.s32.totalorder %s29, %s30
    %p44 = scmp.eq.s32.totalorder %s22, 1
    %p45 = por %p43, %p44
    %p47 = scmp.ne.s32.totalorder %s30, %s46
    %p48 = scmp.eq.s32.totalorder %s22, 0
    %p49 = por %p47, %p48
    %s50 = ssub.s32 %s16, %s23
    %p51 = scmp.eq.s32.totalorder %s50, 0
    %s53 = sadd.s32 %s52, 1
    %s54 = scalar_select %p51, %s52, %s53
    %p57 = pneg %p51
    %p58 = scmp.eq.s32.totalorder %s16, 1
    %p59 = por %p57, %p58
    %p60 = scmp.ne.s32.totalorder %s52, %s55
    %p61 = scmp.eq.s32.totalorder %s16, 0
    %p62 = por %p60, %p61
    %p63 = scmp.ne.s32.totalorder %s52, %s55
    %p64 = scmp.eq.s32.totalorder %s21, 1
    %p65 = por %p63, %p64
    %p66 = scmp.ne.s32.totalorder %s55, %s56
    %p67 = scmp.eq.s32.totalorder %s21, 0
    %p68 = por %p66, %p67
    %p69 = scmp.ne.s32.totalorder %s55, %s56
    %p70 = scmp.eq.s32.totalorder %s22, 1
    %p71 = por %p69, %p70
    %p73 = scmp.ne.s32.totalorder %s56, %s72
    %p74 = scmp.eq.s32.totalorder %s22, 0
    %p75 = por %p73, %p74
    %s77 = sadd.s32 %s76, 1
    %p80 = scmp.eq.s32.totalorder %s16, 1
    %p81 = scmp.ne.s32.totalorder %s76, %s78
    %p82 = scmp.eq.s32.totalorder %s16, 0
    %p83 = por %p81, %p82
    %p84 = scmp.ne.s32.totalorder %s76, %s78
    %p85 = scmp.eq.s32.totalorder %s21, 1
    %p86 = por %p84, %p85
    %p87 = scmp.ne.s32.totalorder %s78, %s79
    %p88 = scmp.eq.s32.totalorder %s21, 0
    %p89 = por %p87, %p88
    %p90 = scmp.ne.s32.totalorder %s78, %s79
    %p91 = scmp.eq.s32.totalorder %s22, 1
    %p92 = por %p90, %p91
    %p94 = scmp.ne.s32.totalorder %s79, %s93
    %p95 = scmp.eq.s32.totalorder %s22, 0
    %p96 = por %p94, %p95
    %s98 = sadd.s32 %s97, 1
    %p101 = scmp.eq.s32.totalorder %s16, 1
    %p102 = scmp.ne.s32.totalorder %s97, %s99
    %p103 = scmp.eq.s32.totalorder %s16, 0
    %p104 = por %p102, %p103
    %p105 = scmp.ne.s32.totalorder %s97, %s99
    %p106 = scmp.eq.s32.totalorder %s21, 1
    %p107 = por %p105, %p106
    %p108 = scmp.ne.s32.totalorder %s99, %s100
    %p109 = scmp.eq.s32.totalorder %s21, 0
    %p110 = por %p108, %p109
    %p111 = scmp.ne.s32.totalorder %s99, %s100
    %p112 = scmp.eq.s32.totalorder %s22, 1
    %p113 = por %p111, %p112
    %p115 = scmp.ne.s32.totalorder %s100, %s114
    %p116 = scmp.eq.s32.totalorder %s22, 0
    %p117 = por %p115, %p116
    %s119 = sadd.s32 %s118, 1
    %p122 = scmp.eq.s32.totalorder %s16, 1
    %p123 = scmp.ne.s32.totalorder %s118, %s120
    %p124 = scmp.eq.s32.totalorder %s16, 0
    %p125 = por %p123, %p124
    %p126 = scmp.ne.s32.totalorder %s118, %s120
    %p127 = scmp.eq.s32.totalorder %s21, 1
    %p128 = por %p126, %p127
    %p129 = scmp.ne.s32.totalorder %s120, %s121
    %p130 = scmp.eq.s32.totalorder %s21, 0
    %p131 = por %p129, %p130
    %p132 = scmp.ne.s32.totalorder %s120, %s121
    %p133 = scmp.eq.s32.totalorder %s22, 1
    %p134 = por %p132, %p133
    %p136 = scmp.ne.s32.totalorder %s121, %s135
    %p137 = scmp.eq.s32.totalorder %s22, 0
    %p138 = por %p136, %p137
    %s140 = sadd.s32 %s139, 1
    %p143 = scmp.eq.s32.totalorder %s16, 1
    %p144 = scmp.ne.s32.totalorder %s139, %s141
    %p145 = scmp.eq.s32.totalorder %s16, 0
    %p146 = por %p144, %p145
    %p147 = scmp.ne.s32.totalorder %s139, %s141
    %p148 = scmp.eq.s32.totalorder %s21, 1
    %p149 = por %p147, %p148
    %p150 = scmp.ne.s32.totalorder %s141, %s142
    %p151 = scmp.eq.s32.totalorder %s21, 0
    %p152 = por %p150, %p151
    %p153 = scmp.ne.s32.totalorder %s141, %s142
    %p154 = scmp.eq.s32.totalorder %s22, 1
    %p155 = por %p153, %p154
    %p157 = scmp.ne.s32.totalorder %s142, %s156
    %p158 = scmp.eq.s32.totalorder %s22, 0
    %p159 = por %p157, %p158
    %s161 = sadd.s32 %s160, 1
    %p164 = scmp.eq.s32.totalorder %s16, 1
    %p165 = scmp.ne.s32.totalorder %s160, %s162
    %p166 = scmp.eq.s32.totalorder %s16, 0
    %p167 = por %p165, %p166
    %p168 = scmp.ne.s32.totalorder %s160, %s162
    %p169 = scmp.eq.s32.totalorder %s21, 1
    %p170 = por %p168, %p169
    %p171 = scmp.ne.s32.totalorder %s162, %s163
    %p172 = scmp.eq.s32.totalorder %s21, 0
    %p173 = por %p171, %p172
    %p174 = scmp.ne.s32.totalorder %s162, %s163
    %p175 = scmp.eq.s32.totalorder %s22, 1
    %p176 = por %p174, %p175
    %p178 = scmp.ne.s32.totalorder %s163, %s177
    %p179 = scmp.eq.s32.totalorder %s22, 0
    %p180 = por %p178, %p179
    %s182 = sadd.s32 %s181, 1
    %p185 = scmp.eq.s32.totalorder %s16, 1
    %p186 = scmp.ne.s32.totalorder %s181, %s183
    %p187 = scmp.eq.s32.totalorder %s16, 0
    %p188 = por %p186, %p187
    %p189 = scmp.ne.s32.totalorder %s181, %s183
    %p190 = scmp.eq.s32.totalorder %s21, 1
    %p191 = por %p189, %p190
    %p192 = scmp.ne.s32.totalorder %s183, %s184
    %p193 = scmp.eq.s32.totalorder %s21, 0
    %p194 = por %p192, %p193
    %p195 = scmp.ne.s32.totalorder %s183, %s184
    %p196 = scmp.eq.s32.totalorder %s22, 1
    %p197 = por %p195, %p196
    %p199 = scmp.ne.s32.totalorder %s184, %s198
    %p200 = scmp.eq.s32.totalorder %s22, 0
    %p201 = por %p199, %p200
    %s203 = sadd.s32 %s202, 1
    %p206 = scmp.eq.s32.totalorder %s16, 1
    %p207 = scmp.ne.s32.totalorder %s202, %s204
    %p208 = scmp.eq.s32.totalorder %s16, 0
    %p209 = por %p207, %p208
    %p210 = scmp.ne.s32.totalorder %s202, %s204
    %p211 = scmp.eq.s32.totalorder %s21, 1
    %p212 = por %p210, %p211
    %p213 = scmp.ne.s32.totalorder %s204, %s205
    %p214 = scmp.eq.s32.totalorder %s21, 0
    %p215 = por %p213, %p214
    %p216 = scmp.ne.s32.totalorder %s204, %s205
    %p217 = scmp.eq.s32.totalorder %s22, 1
    %p218 = por %p216, %p217
    %p220 = scmp.ne.s32.totalorder %s205, %s219
    %p221 = scmp.eq.s32.totalorder %s22, 0
    %p222 = por %p220, %p221
    %s224 = sadd.s32 %s223, 1
    %p227 = scmp.eq.s32.totalorder %s16, 1
    %p228 = scmp.ne.s32.totalorder %s223, %s225
    %p229 = scmp.eq.s32.totalorder %s16, 0
    %p230 = por %p228, %p229
    %p231 = scmp.ne.s32.totalorder %s223, %s225
    %p232 = scmp.eq.s32.totalorder %s21, 1
    %p233 = por %p231, %p232
    %p234 = scmp.ne.s32.totalorder %s225, %s226
    %p235 = scmp.eq.s32.totalorder %s21, 0
    %p236 = por %p234, %p235
    %p237 = scmp.ne.s32.totalorder %s225, %s226
    %p238 = scmp.eq.s32.totalorder %s22, 1
    %p239 = por %p237, %p238
    %p241 = scmp.ne.s32.totalorder %s226, %s240
    %p242 = scmp.eq.s32.totalorder %s22, 0
    %p243 = por %p241, %p242
    %s244 = ssub.s32 %s16, %s23
    %p245 = scmp.eq.s32.totalorder %s244, 0
    %s247 = sadd.s32 %s246, 1
    %s248 = scalar_select %p245, %s246, %s247
    %p251 = pneg %p245
    %p252 = scmp.eq.s32.totalorder %s16, 1
    %p253 = por %p251, %p252
    %p254 = scmp.ne.s32.totalorder %s246, %s249
    %p255 = scmp.eq.s32.totalorder %s16, 0
    %p256 = por %p254, %p255
    %p257 = scmp.ne.s32.totalorder %s246, %s249
    %p258 = scmp.eq.s32.totalorder %s21, 1
    %p259 = por %p257, %p258
    %p260 = scmp.ne.s32.totalorder %s249, %s250
    %p261 = scmp.eq.s32.totalorder %s21, 0
    %p262 = por %p260, %p261
    %p263 = scmp.ne.s32.totalorder %s249, %s250
    %p264 = scmp.eq.s32.totalorder %s22, 1
    %p265 = por %p263, %p264
    %p267 = scmp.ne.s32.totalorder %s250, %s266
    %p268 = scmp.eq.s32.totalorder %s22, 0
    %p269 = por %p267, %p268
    %p270 = scmp.le.s32.totalorder 1, %s16
    %p271 = scmp.lt.s32.totalorder %s16, 3
    %p272 = pnand %p270, %p271
    %p273 = pneg %p272
    // Predicated region
    $region9: #{encoder_decoder_forward.12} parent=5 // pred_check
      _
    $region10: #{encoder_decoder_forward.12} parent=5 // pred_check_branch
      %275 = sbr.rel (%p272) target = $region12
    $region11: #{encoder_decoder_forward.12} parent=5 // pred_region
      %s276 = ssub.s32 %s16, 1
      // Predicated region
      $region13: #{encoder_decoder_forward.12} parent=11 // pred_check
        %p277 = pneg %p89
      $region14: #{encoder_decoder_forward.12} parent=11 // pred_check_branch
        %279 = sbr.rel (%p277) target = $region16
      $region15: #{encoder_decoder_forward.12} parent=11 // pred_region
        _
      $region16: #{encoder_decoder_forward.12} parent=11 // pred_fallthru
        _
      // Predicated region
      $region17: #{encoder_decoder_forward.12} parent=11 // pred_check
        %p280 = pneg %p110
      $region18: #{encoder_decoder_forward.12} parent=11 // pred_check_branch
        %282 = sbr.rel (%p280) target = $region20
      $region19: #{encoder_decoder_forward.12} parent=11 // pred_region
        _
      $region20: #{encoder_decoder_forward.12} parent=11 // pred_fallthru
        _
      // Predicated region
      $region21: #{encoder_decoder_forward.12} parent=11 // pred_check
        %p283 = pneg %p131
      $region22: #{encoder_decoder_forward.12} parent=11 // pred_check_branch
        %285 = sbr.rel (%p283) target = $region24
      $region23: #{encoder_decoder_forward.12} parent=11 // pred_region
        _
      $region24: #{encoder_decoder_forward.12} parent=11 // pred_fallthru
        _
      // Predicated region
      $region25: #{encoder_decoder_forward.12} parent=11 // pred_check
        %p286 = pneg %p152
      $region26: #{encoder_decoder_forward.12} parent=11 // pred_check_branch
        %288 = sbr.rel (%p286) target = $region28
      $region27: #{encoder_decoder_forward.12} parent=11 // pred_region
        _
      $region28: #{encoder_decoder_forward.12} parent=11 // pred_fallthru
        _
      // Predicated region
      $region29: #{encoder_decoder_forward.12} parent=11 // pred_check
        %p289 = pneg %p173
      $region30: #{encoder_decoder_forward.12} parent=11 // pred_check_branch
        %291 = sbr.rel (%p289) target = $region32
      $region31: #{encoder_decoder_forward.12} parent=11 // pred_region
        _
      $region32: #{encoder_decoder_forward.12} parent=11 // pred_fallthru
        _
      // Predicated region
      $region33: #{encoder_decoder_forward.12} parent=11 // pred_check
        %p292 = pneg %p194
      $region34: #{encoder_decoder_forward.12} parent=11 // pred_check_branch
        %294 = sbr.rel (%p292) target = $region36
      $region35: #{encoder_decoder_forward.12} parent=11 // pred_region
        _
      $region36: #{encoder_decoder_forward.12} parent=11 // pred_fallthru
        _
      // Predicated region
      $region37: #{encoder_decoder_forward.12} parent=11 // pred_check
        %p295 = pneg %p215
      $region38: #{encoder_decoder_forward.12} parent=11 // pred_check_branch
        %297 = sbr.rel (%p295) target = $region40
      $region39: #{encoder_decoder_forward.12} parent=11 // pred_region
        _
      $region40: #{encoder_decoder_forward.12} parent=11 // pred_fallthru
        _
      // Predicated region
      $region41: #{encoder_decoder_forward.12} parent=11 // pred_check
        %p298 = pneg %p236
      $region42: #{encoder_decoder_forward.12} parent=11 // pred_check_branch
        %300 = sbr.rel (%p298) target = $region44
      $region43: #{encoder_decoder_forward.12} parent=11 // pred_region
        _
      $region44: #{encoder_decoder_forward.12} parent=11 // pred_fallthru
        _
    $region12: #{encoder_decoder_forward.12} parent=5 // pred_fallthru
      _
    %p301 = scmp.lt.s32.totalorder %s16, 2
    // Predicated region
    $region45: #{encoder_decoder_forward.12} parent=5 // pred_check
      %p302 = pneg %p301
    $region46: #{encoder_decoder_forward.12} parent=5 // pred_check_branch
      %304 = sbr.rel (%p302) target = $region48
    $region47: #{encoder_decoder_forward.12} parent=5 // pred_region
      // Predicated region
      $region49: #{encoder_decoder_forward.12} parent=47 // pred_check
        %p305 = pneg %p36
      $region50: #{encoder_decoder_forward.12} parent=47 // pred_check_branch
        %307 = sbr.rel (%p305) target = $region52
      $region51: #{encoder_decoder_forward.12} parent=47 // pred_region
        %p308 = scmp.lt.s32.totalorder %s16, 1
        %s309 = scalar_select %p308, %s16, 1
        %s310 = smul.addr %s309, 8
        %s311 = scalar_lea.vmem %s0, %s310
      $region52: #{encoder_decoder_forward.12} parent=47 // pred_fallthru
        _
      // Predicated region
      $region53: #{encoder_decoder_forward.12} parent=47 // pred_check
        %p312 = pneg %p62
      $region54: #{encoder_decoder_forward.12} parent=47 // pred_check_branch
        %314 = sbr.rel (%p312) target = $region56
      $region55: #{encoder_decoder_forward.12} parent=47 // pred_region
        %p315 = scmp.lt.s32.totalorder %s16, 1
        %s316 = scalar_select %p315, %s16, 1
        %s317 = scalar_lea.vmem %s1, %s316
      $region56: #{encoder_decoder_forward.12} parent=47 // pred_fallthru
        _
    $region48: #{encoder_decoder_forward.12} parent=5 // pred_fallthru
      _
    %p318 = scmp.le.s32.totalorder 1, %s16
    %p319 = scmp.lt.s32.totalorder %s16, 3
    %p320 = pnand %p318, %p319
    %p321 = pneg %p320
    // Predicated region
    $region57: #{encoder_decoder_forward.12} parent=5 // pred_check
      _
    $region58: #{encoder_decoder_forward.12} parent=5 // pred_check_branch
      %323 = sbr.rel (%p320) target = $region60
    $region59: #{encoder_decoder_forward.12} parent=5 // pred_region
      %s324 = ssub.s32 %s16, 1
      %p325 = scmp.lt.s32.totalorder %s21, 1
      %s326 = scalar_select %p325, %s21, 1
      %s327 = smul.addr %s326, 8
      %s328 = scalar_lea.vmem %s0, %s327
      %p329 = pneg %p42
      %p330 = pneg %p39
      %p331 = scmp.lt.s32.totalorder %s21, 1
      %s332 = scalar_select %p331, %s21, 1
      %s333 = scalar_lea.vmem %s1, %s332
      %p334 = pneg %p68
      %p335 = pneg %p65
      %p336 = pneg %p89
      %p337 = pneg %p86
      %p338 = pneg %p110
      %p339 = pneg %p107
      %p340 = pneg %p131
      %p341 = pneg %p128
      %p342 = pneg %p152
      %p343 = pneg %p149
      %p344 = pneg %p173
      %p345 = pneg %p170
      %p346 = pneg %p194
      %p347 = pneg %p191
      %p348 = pneg %p215
      %p349 = pneg %p212
      %p350 = pneg %p236
      %p351 = pneg %p233
      %p352 = pneg %p262
      %p353 = pneg %p259
      %p354 = scmp.lt.s32.totalorder %s21, 1
      %s355 = scalar_select %p354, %s21, 1
      %s356 = smul.addr %s355, 8
      %s357 = scalar_lea.vmem %s10, %s356
      %p358 = scmp.lt.s32.totalorder %s21, 1
      %s359 = scalar_select %p358, %s21, 1
      %s360 = smul.addr %s359, 8
      %s361 = scalar_lea.vmem %s0, %s360
      %p362 = scmp.lt.s32.totalorder %s21, 1
      %s363 = scalar_select %p362, %s21, 1
      %s364 = scalar_lea.vmem %s1, %s363
      %p365 = scmp.lt.s32.totalorder %s21, 1
      %s366 = scalar_select %p365, %s21, 1
      %s367 = smul.addr %s366, 8
      %s368 = scalar_lea.vmem %s10, %s367
      %v370 = vld [vmem:[%s361] sm:$0xff]
      %v371 = vld [vmem:[%s2] sm:$0x1]
      %v372 = vld [vmem:[%s3] sm:$0x1]
      %vm373 = vcmask 261120
      %v374 = vsel %vm373, %v370, 0.0
      %375 = vadd.xlane.f32.xlu0 %v374
      %v376 = vpop.xlane.xlu0 %375
      %v377 = vrcp.pop 32.0
      %v378 = vmul.f32 %v376, %v377
      %v379 = vsub.f32 %v370, %v378
      %v380 = vmul.f32 %v379, %v379
      %v381 = vsel %vm373, %v380, 0.0
      %382 = vadd.xlane.f32.xlu0 %v381
      %v383 = vpop.xlane.xlu0 %382
      %v384 = vmul.f32 %v383, 0.032258064
      %v385 = vrsqrt.pop %v384
      %v386 = vmul.f32 %v384, %v385
      %vm387 = vcmp.eq.f32.partialorder %v384, inf
      %v388 = vsel %vm387, %v384, %v386
      %vm389 = vcmp.eq.f32.partialorder %v384, 0.0
      %v390 = vand.u32 %v384, 2147483648
      %v391 = vsel %vm389, %v390, %v388
      %v392 = vadd.f32 %v391, 1e-06
      %v393 = vrcp.pop %v392
      %v394 = vmul.f32 1.0, %v393
      %v396 = vlaneseq
      %v397 = vshrl.u32 %v396, 7
      %v398 = vsub.s32 0, %v397
      %v399 = vrot.slane %v371, %v398
      %v401 = vmul.f32 %v399, %v379
      %v402 = vmul.f32 %v401, %v394
      %v404 = vlaneseq
      %v405 = vshrl.u32 %v404, 7
      %v406 = vsub.s32 0, %v405
      %v407 = vrot.slane %v372, %v406
      %v409 = vadd.f32 %v402, %v407
      %v410 = vpack.c.bf16 %v409, %v409
      %v411 = vld [vmem:[%s4] sm:$0xf]
      %v412 = vld [vmem:[%s4 + $0x4] sm:$0xf]
      %v413 = vld [vmem:[%s4 + $0x8] sm:$0xf]
      %v414 = vld [vmem:[%s4 + $0xc] sm:$0xf]
      %v415 = vld [vmem:[%s5] sm:$0x1]
      %v417 = vlaneseq
      %v418 = vshrl.u32 %v417, 7
      %v419 = vsub.s32 0, %v418
      %v420 = vrot.slane %v415, %v419
      %v426 = vunpack.c.l.b16 %v411
      %v427 = vunpack.c.l.b16 %v412
      %v428 = vunpack.c.l.b16 %v413
      %v429 = vunpack.c.l.b16 %v414
      %v430 = vpack.c.b16 %v427, %v426
      %v431 = vpack.c.b16 %v429, %v428
      %v435 = vsel %vm373, %v410, 0
      %437 = vmatprep.subr.bf16.mxu0 0
      %438 = vmatpush1.bf16.msra.mxu0 0
      %439 = vmatprep.subr.bf16.mxu0 0
      %440 = vmatpush1.bf16.msra.mxu0 0
      %441 = vmatprep.subr.bf16.mxu0 0
      %442 = vmatpush1.bf16.msra.mxu0 0
      %443 = vmatprep.subr.bf16.mxu0 0
      %444 = vmatpush1.bf16.msra.mxu0 0
      %445 = vmatprep.subr.bf16.mxu0 0
      %446 = vmatpush1.bf16.msra.mxu0 0
      %447 = vmatprep.subr.bf16.mxu0 0
      %448 = vmatpush1.bf16.msra.mxu0 0
      %449 = vmatprep.subr.bf16.mxu0 0
      %450 = vmatpush1.bf16.msra.mxu0 %v431
      %451 = vmatprep.subr.bf16.mxu0 0
      %452 = vmatpush1.bf16.msra.mxu0 %v430
      %453 = vmatprep.subr.bf16.mxu0 0
      %454 = vmatpush2.bf16.msra.mxu0 0
      %455 = vmatprep.subr.bf16.mxu0 0
      %456 = vmatpush2.bf16.msra.mxu0 0
      %457 = vmatprep.subr.bf16.mxu0 0
      %458 = vmatpush2.bf16.msra.mxu0 0
      %459 = vmatprep.subr.bf16.mxu0 0
      %460 = vmatpush2.bf16.msra.mxu0 0
      %461 = vmatprep.subr.bf16.mxu0 0
      %462 = vmatpush2.bf16.msra.mxu0 0
      %463 = vmatprep.subr.bf16.mxu0 0
      %464 = vmatpush2.bf16.msra.mxu0 0
      %465 = vmatprep.subr.bf16.mxu0 0
      %466 = vmatpush2.bf16.msra.mxu0 0
      %467 = vmatprep.subr.bf16.mxu0 0
      %468 = vmatpush2.bf16.msra.mxu0 0
      %469 = vmatprep.mubr.bf16.mxu0 0
      %470 = vmatmul.mubr.bf16.gmra.mxu0 %v435
      %v471 = vpop.f32.mrf.mxu0
      %v472 = vadd.f32 %v420, %v471
      %v473 = vpop.f32.mrf.mxu0
      %v474 = vpop.f32.mrf.mxu0
      %v475 = vpop.f32.mrf.mxu0
      %476 = vdwg.mxu0
      %v477 = vld [vmem:[%s6] sm:$0xf]
      %v478 = vld [vmem:[%s6 + $0x4] sm:$0xf]
      %v479 = vld [vmem:[%s6 + $0x8] sm:$0xf]
      %v480 = vld [vmem:[%s6 + $0xc] sm:$0xf]
      %v481 = vld [vmem:[%s7] sm:$0x1]
      %v483 = vlaneseq
      %v484 = vshrl.u32 %v483, 7
      %v485 = vsub.s32 0, %v484
      %v486 = vrot.slane %v481, %v485
      %v492 = vunpack.c.l.b16 %v477
      %v493 = vunpack.c.l.b16 %v478
      %v494 = vunpack.c.l.b16 %v479
      %v495 = vunpack.c.l.b16 %v480
      %v496 = vpack.c.b16 %v493, %v492
      %v497 = vpack.c.b16 %v495, %v494
      %500 = vmatprep.subr.bf16.mxu0 0
      %501 = vmatpush1.bf16.msra.mxu0 0
      %502 = vmatprep.subr.bf16.mxu0 0
      %503 = vmatpush1.bf16.msra.mxu0 0
      %504 = vmatprep.subr.bf16.mxu0 0
      %505 = vmatpush1.bf16.msra.mxu0 0
      %506 = vmatprep.subr.bf16.mxu0 0
      %507 = vmatpush1.bf16.msra.mxu0 0
      %508 = vmatprep.subr.bf16.mxu0 0
      %509 = vmatpush1.bf16.msra.mxu0 0
      %510 = vmatprep.subr.bf16.mxu0 0
      %511 = vmatpush1.bf16.msra.mxu0 0
      %512 = vmatprep.subr.bf16.mxu0 0
      %513 = vmatpush1.bf16.msra.mxu0 %v497
      %514 = vmatprep.subr.bf16.mxu0 0
      %515 = vmatpush1.bf16.msra.mxu0 %v496
      %516 = vmatprep.subr.bf16.mxu0 0
      %517 = vmatpush2.bf16.msra.mxu0 0
      %518 = vmatprep.subr.bf16.mxu0 0
      %519 = vmatpush2.bf16.msra.mxu0 0
      %520 = vmatprep.subr.bf16.mxu0 0
      %521 = vmatpush2.bf16.msra.mxu0 0
      %522 = vmatprep.subr.bf16.mxu0 0
      %523 = vmatpush2.bf16.msra.mxu0 0
      %524 = vmatprep.subr.bf16.mxu0 0
      %525 = vmatpush2.bf16.msra.mxu0 0
      %526 = vmatprep.subr.bf16.mxu0 0
      %527 = vmatpush2.bf16.msra.mxu0 0
      %528 = vmatprep.subr.bf16.mxu0 0
      %529 = vmatpush2.bf16.msra.mxu0 0
      %530 = vmatprep.subr.bf16.mxu0 0
      %531 = vmatpush2.bf16.msra.mxu0 0
      %532 = vmatprep.mubr.bf16.mxu0 0
      %533 = vmatmul.mubr.bf16.gmra.mxu0 %v435
      %v534 = vpop.f32.mrf.mxu0
      %v535 = vadd.f32 %v486, %v534
      %v536 = vpop.f32.mrf.mxu0
      %v537 = vpop.f32.mrf.mxu0
      %v538 = vpop.f32.mrf.mxu0
      %539 = vdwg.mxu0
      %v540 = vmul.f32 %v472, 0.35355338
      %v541 = vpack.c.bf16 %v540, %v540
      %v542 = vpack.c.bf16 %v535, %v535
      %v543 = vld [vmem:[%s364] sm:$0x1]
      %v545 = vlaneseq
      %v546 = vshrl.u32 %v545, 7
      %v547 = vsub.s32 0, %v546
      %v548 = vrot.slane %v543, %v547
      %vm550 = vcmp.gt.f32.partialorder %v548, 0.0
      %vm551 = vcmask 64512
      %v553 = vsel %vm551, %v541, 0
      %v556 = vsel %vm551, %v542, 0
      %558 = vmatprep.subr.bf16.mxu0 0
      %559 = vmatpush1.bf16.xpose.msra.mxu0 0
      %560 = vmatprep.subr.bf16.mxu0 0
      %561 = vmatpush1.bf16.xpose.msra.mxu0 0
      %562 = vmatprep.subr.bf16.mxu0 0
      %563 = vmatpush1.bf16.xpose.msra.mxu0 0
      %564 = vmatprep.subr.bf16.mxu0 0
      %565 = vmatpush1.bf16.xpose.msra.mxu0 0
      %566 = vmatprep.subr.bf16.mxu0 0
      %567 = vmatpush1.bf16.xpose.msra.mxu0 0
      %568 = vmatprep.subr.bf16.mxu0 0
      %569 = vmatpush1.bf16.xpose.msra.mxu0 0
      %570 = vmatprep.subr.bf16.mxu0 0
      %571 = vmatpush1.bf16.xpose.msra.mxu0 0
      %572 = vmatprep.subr.bf16.mxu0 0
      %573 = vmatpush1.bf16.xpose.msra.mxu0 %v556
      %574 = vmatprep.subr.bf16.mxu0 0
      %575 = vmatpush2.bf16.xpose.msra.mxu0 0
      %576 = vmatprep.subr.bf16.mxu0 0
      %577 = vmatpush2.bf16.xpose.msra.mxu0 0
      %578 = vmatprep.subr.bf16.mxu0 0
      %579 = vmatpush2.bf16.xpose.msra.mxu0 0
      %580 = vmatprep.subr.bf16.mxu0 0
      %581 = vmatpush2.bf16.xpose.msra.mxu0 0
      %582 = vmatprep.subr.bf16.mxu0 0
      %583 = vmatpush2.bf16.xpose.msra.mxu0 0
      %584 = vmatprep.subr.bf16.mxu0 0
      %585 = vmatpush2.bf16.xpose.msra.mxu0 0
      %586 = vmatprep.subr.bf16.mxu0 0
      %587 = vmatpush2.bf16.xpose.msra.mxu0 0
      %588 = vmatprep.subr.bf16.mxu0 0
      %589 = vmatpush2.bf16.xpose.msra.mxu0 0
      %590 = vmatprep.mubr.bf16.mxu0 0
      %591 = vmatmul.mubr.bf16.gmra.mxu0 %v553
      %v592 = vpop.f32.mrf.mxu0
      %v593 = vadd.f32 0.0, %v592
      %v594 = vpop.f32.mrf.mxu0
      %v595 = vpop.f32.mrf.mxu0
      %v596 = vpop.f32.mrf.mxu0
      %597 = vdwg.mxu0
      %v598 = vsel %vm550, %v593, -1e+09
      %v599 = vsel %vm551, %v598, -inf
      %600 = vmax.xlane.f32.xlu0 %v599
      %v601 = vpop.xlane.xlu0 %600
      %v602 = vsub.f32 %v598, %v601
      %v603 = vmul.f32 %v602, 1.442695
      %v604 = vpow.pop %v603
      %v605 = vsel %vm551, %v604, 0.0
      %606 = vadd.xlane.f32.xlu0 %v605
      %v607 = vpop.xlane.xlu0 %606
      %v608 = vrcp.pop %v607
      %v609 = vmul.f32 %v604, %v608
      %v610 = vpack.c.bf16 %v609, %v609
      %612 = vrot.lane.b32.xlu0 %v542, 96
      %v613 = vpop.permute.xlu0 %612
      %v615 = vsel %vm551, %v610, 0
      %vm617 = vcmask 1043456
      %v619 = vsel %vm617, %v613, 0
      %621 = vmatprep.subr.bf16.mxu0 0
      %622 = vmatpush1.bf16.msra.mxu0 0
      %623 = vmatprep.subr.bf16.mxu0 0
      %624 = vmatpush1.bf16.msra.mxu0 0
      %625 = vmatprep.subr.bf16.mxu0 0
      %626 = vmatpush1.bf16.msra.mxu0 0
      %627 = vmatprep.subr.bf16.mxu0 0
      %628 = vmatpush1.bf16.msra.mxu0 0
      %629 = vmatprep.subr.bf16.mxu0 0
      %630 = vmatpush1.bf16.msra.mxu0 0
      %631 = vmatprep.subr.bf16.mxu0 0
      %632 = vmatpush1.bf16.msra.mxu0 0
      %633 = vmatprep.subr.bf16.mxu0 0
      %634 = vmatpush1.bf16.msra.mxu0 0
      %635 = vmatprep.subr.bf16.mxu0 0
      %636 = vmatpush1.bf16.msra.mxu0 %v619
      %637 = vmatprep.subr.bf16.mxu0 0
      %638 = vmatpush2.bf16.msra.mxu0 0
      %639 = vmatprep.subr.bf16.mxu0 0
      %640 = vmatpush2.bf16.msra.mxu0 0
      %641 = vmatprep.subr.bf16.mxu0 0
      %642 = vmatpush2.bf16.msra.mxu0 0
      %643 = vmatprep.subr.bf16.mxu0 0
      %644 = vmatpush2.bf16.msra.mxu0 0
      %645 = vmatprep.subr.bf16.mxu0 0
      %646 = vmatpush2.bf16.msra.mxu0 0
      %647 = vmatprep.subr.bf16.mxu0 0
      %648 = vmatpush2.bf16.msra.mxu0 0
      %649 = vmatprep.subr.bf16.mxu0 0
      %650 = vmatpush2.bf16.msra.mxu0 0
      %651 = vmatprep.subr.bf16.mxu0 0
      %652 = vmatpush2.bf16.msra.mxu0 0
      %653 = vmatprep.mubr.bf16.mxu0 0
      %654 = vmatmul.mubr.bf16.gmra.mxu0 %v615
      %v655 = vpop.f32.mrf.mxu0
      %v656 = vadd.f32 0.0, %v655
      %v657 = vpop.f32.mrf.mxu0
      %v658 = vpop.f32.mrf.mxu0
      %v659 = vpop.f32.mrf.mxu0
      %660 = vdwg.mxu0
      %662 = vrot.lane.b32.xlu0 %v541, 120
      %v663 = vpop.permute.xlu0 %662
      %664 = vrot.lane.b32.xlu0 %v542, 120
      %v665 = vpop.permute.xlu0 %664
      %v667 = vsel %vm551, %v663, 0
      %v670 = vsel %vm551, %v665, 0
      %672 = vmatprep.subr.bf16.mxu0 0
      %673 = vmatpush1.bf16.xpose.msra.mxu0 0
      %674 = vmatprep.subr.bf16.mxu0 0
      %675 = vmatpush1.bf16.xpose.msra.mxu0 0
      %676 = vmatprep.subr.bf16.mxu0 0
      %677 = vmatpush1.bf16.xpose.msra.mxu0 0
      %678 = vmatprep.subr.bf16.mxu0 0
      %679 = vmatpush1.bf16.xpose.msra.mxu0 0
      %680 = vmatprep.subr.bf16.mxu0 0
      %681 = vmatpush1.bf16.xpose.msra.mxu0 0
      %682 = vmatprep.subr.bf16.mxu0 0
      %683 = vmatpush1.bf16.xpose.msra.mxu0 0
      %684 = vmatprep.subr.bf16.mxu0 0
      %685 = vmatpush1.bf16.xpose.msra.mxu0 0
      %686 = vmatprep.subr.bf16.mxu0 0
      %687 = vmatpush1.bf16.xpose.msra.mxu0 %v670
      %688 = vmatprep.subr.bf16.mxu0 0
      %689 = vmatpush2.bf16.xpose.msra.mxu0 0
      %690 = vmatprep.subr.bf16.mxu0 0
      %691 = vmatpush2.bf16.xpose.msra.mxu0 0
      %692 = vmatprep.subr.bf16.mxu0 0
      %693 = vmatpush2.bf16.xpose.msra.mxu0 0
      %694 = vmatprep.subr.bf16.mxu0 0
      %695 = vmatpush2.bf16.xpose.msra.mxu0 0
      %696 = vmatprep.subr.bf16.mxu0 0
      %697 = vmatpush2.bf16.xpose.msra.mxu0 0
      %698 = vmatprep.subr.bf16.mxu0 0
      %699 = vmatpush2.bf16.xpose.msra.mxu0 0
      %700 = vmatprep.subr.bf16.mxu0 0
      %701 = vmatpush2.bf16.xpose.msra.mxu0 0
      %702 = vmatprep.subr.bf16.mxu0 0
      %703 = vmatpush2.bf16.xpose.msra.mxu0 0
      %704 = vmatprep.mubr.bf16.mxu0 0
      %705 = vmatmul.mubr.bf16.gmra.mxu0 %v667
      %v706 = vpop.f32.mrf.mxu0
      %v707 = vadd.f32 0.0, %v706
      %v708 = vpop.f32.mrf.mxu0
      %v709 = vpop.f32.mrf.mxu0
      %v710 = vpop.f32.mrf.mxu0
      %711 = vdwg.mxu0
      %v712 = vsel %vm550, %v707, -1e+09
      %v713 = vsel %vm551, %v712, -inf
      %714 = vmax.xlane.f32.xlu0 %v713
      %v715 = vpop.xlane.xlu0 %714
      %v716 = vsub.f32 %v712, %v715
      %v717 = vmul.f32 %v716, 1.442695
      %v718 = vpow.pop %v717
      %v719 = vsel %vm551, %v718, 0.0
      %720 = vadd.xlane.f32.xlu0 %v719
      %v721 = vpop.xlane.xlu0 %720
      %v722 = vrcp.pop %v721
      %v723 = vmul.f32 %v718, %v722
      %v724 = vpack.c.bf16 %v723, %v723
      %725 = vrot.lane.b32.xlu0 %v542, 88
      %v726 = vpop.permute.xlu0 %725
      %v728 = vsel %vm551, %v724, 0
      %v731 = vsel %vm617, %v726, 0
      %733 = vmatprep.subr.bf16.mxu0 0
      %734 = vmatpush1.bf16.msra.mxu0 0
      %735 = vmatprep.subr.bf16.mxu0 0
      %736 = vmatpush1.bf16.msra.mxu0 0
      %737 = vmatprep.subr.bf16.mxu0 0
      %738 = vmatpush1.bf16.msra.mxu0 0
      %739 = vmatprep.subr.bf16.mxu0 0
      %740 = vmatpush1.bf16.msra.mxu0 0
      %741 = vmatprep.subr.bf16.mxu0 0
      %742 = vmatpush1.bf16.msra.mxu0 0
      %743 = vmatprep.subr.bf16.mxu0 0
      %744 = vmatpush1.bf16.msra.mxu0 0
      %745 = vmatprep.subr.bf16.mxu0 0
      %746 = vmatpush1.bf16.msra.mxu0 0
      %747 = vmatprep.subr.bf16.mxu0 0
      %748 = vmatpush1.bf16.msra.mxu0 %v731
      %749 = vmatprep.subr.bf16.mxu0 0
      %750 = vmatpush2.bf16.msra.mxu0 0
      %751 = vmatprep.subr.bf16.mxu0 0
      %752 = vmatpush2.bf16.msra.mxu0 0
      %753 = vmatprep.subr.bf16.mxu0 0
      %754 = vmatpush2.bf16.msra.mxu0 0
      %755 = vmatprep.subr.bf16.mxu0 0
      %756 = vmatpush2.bf16.msra.mxu0 0
      %757 = vmatprep.subr.bf16.mxu0 0
      %758 = vmatpush2.bf16.msra.mxu0 0
      %759 = vmatprep.subr.bf16.mxu0 0
      %760 = vmatpush2.bf16.msra.mxu0 0
      %761 = vmatprep.subr.bf16.mxu0 0
      %762 = vmatpush2.bf16.msra.mxu0 0
      %763 = vmatprep.subr.bf16.mxu0 0
      %764 = vmatpush2.bf16.msra.mxu0 0
      %765 = vmatprep.mubr.bf16.mxu0 0
      %766 = vmatmul.mubr.bf16.gmra.mxu0 %v728
      %v767 = vpop.f32.mrf.mxu0
      %v768 = vadd.f32 0.0, %v767
      %v769 = vpop.f32.mrf.mxu0
      %v770 = vpop.f32.mrf.mxu0
      %v771 = vpop.f32.mrf.mxu0
      %772 = vdwg.mxu0
      %773 = vrot.lane.b32.xlu0 %v541, 112
      %v774 = vpop.permute.xlu0 %773
      %775 = vrot.lane.b32.xlu0 %v542, 112
      %v776 = vpop.permute.xlu0 %775
      %v778 = vsel %vm551, %v774, 0
      %v781 = vsel %vm551, %v776, 0
      %783 = vmatprep.subr.bf16.mxu0 0
      %784 = vmatpush1.bf16.xpose.msra.mxu0 0
      %785 = vmatprep.subr.bf16.mxu0 0
      %786 = vmatpush1.bf16.xpose.msra.mxu0 0
      %787 = vmatprep.subr.bf16.mxu0 0
      %788 = vmatpush1.bf16.xpose.msra.mxu0 0
      %789 = vmatprep.subr.bf16.mxu0 0
      %790 = vmatpush1.bf16.xpose.msra.mxu0 0
      %791 = vmatprep.subr.bf16.mxu0 0
      %792 = vmatpush1.bf16.xpose.msra.mxu0 0
      %793 = vmatprep.subr.bf16.mxu0 0
      %794 = vmatpush1.bf16.xpose.msra.mxu0 0
      %795 = vmatprep.subr.bf16.mxu0 0
      %796 = vmatpush1.bf16.xpose.msra.mxu0 0
      %797 = vmatprep.subr.bf16.mxu0 0
      %798 = vmatpush1.bf16.xpose.msra.mxu0 %v781
      %799 = vmatprep.subr.bf16.mxu0 0
      %800 = vmatpush2.bf16.xpose.msra.mxu0 0
      %801 = vmatprep.subr.bf16.mxu0 0
      %802 = vmatpush2.bf16.xpose.msra.mxu0 0
      %803 = vmatprep.subr.bf16.mxu0 0
      %804 = vmatpush2.bf16.xpose.msra.mxu0 0
      %805 = vmatprep.subr.bf16.mxu0 0
      %806 = vmatpush2.bf16.xpose.msra.mxu0 0
      %807 = vmatprep.subr.bf16.mxu0 0
      %808 = vmatpush2.bf16.xpose.msra.mxu0 0
      %809 = vmatprep.subr.bf16.mxu0 0
      %810 = vmatpush2.bf16.xpose.msra.mxu0 0
      %811 = vmatprep.subr.bf16.mxu0 0
      %812 = vmatpush2.bf16.xpose.msra.mxu0 0
      %813 = vmatprep.subr.bf16.mxu0 0
      %814 = vmatpush2.bf16.xpose.msra.mxu0 0
      %815 = vmatprep.mubr.bf16.mxu0 0
      %816 = vmatmul.mubr.bf16.gmra.mxu0 %v778
      %v817 = vpop.f32.mrf.mxu0
      %v818 = vadd.f32 0.0, %v817
      %v819 = vpop.f32.mrf.mxu0
      %v820 = vpop.f32.mrf.mxu0
      %v821 = vpop.f32.mrf.mxu0
      %822 = vdwg.mxu0
      %v823 = vsel %vm550, %v818, -1e+09
      %v824 = vsel %vm551, %v823, -inf
      %825 = vmax.xlane.f32.xlu0 %v824
      %v826 = vpop.xlane.xlu0 %825
      %v827 = vsub.f32 %v823, %v826
      %v828 = vmul.f32 %v827, 1.442695
      %v829 = vpow.pop %v828
      %v830 = vsel %vm551, %v829, 0.0
      %831 = vadd.xlane.f32.xlu0 %v830
      %v832 = vpop.xlane.xlu0 %831
      %v833 = vrcp.pop %v832
      %v834 = vmul.f32 %v829, %v833
      %v835 = vpack.c.bf16 %v834, %v834
      %836 = vrot.lane.b32.xlu0 %v542, 80
      %v837 = vpop.permute.xlu0 %836
      %v839 = vsel %vm551, %v835, 0
      %v842 = vsel %vm617, %v837, 0
      %844 = vmatprep.subr.bf16.mxu0 0
      %845 = vmatpush1.bf16.msra.mxu0 0
      %846 = vmatprep.subr.bf16.mxu0 0
      %847 = vmatpush1.bf16.msra.mxu0 0
      %848 = vmatprep.subr.bf16.mxu0 0
      %849 = vmatpush1.bf16.msra.mxu0 0
      %850 = vmatprep.subr.bf16.mxu0 0
      %851 = vmatpush1.bf16.msra.mxu0 0
      %852 = vmatprep.subr.bf16.mxu0 0
      %853 = vmatpush1.bf16.msra.mxu0 0
      %854 = vmatprep.subr.bf16.mxu0 0
      %855 = vmatpush1.bf16.msra.mxu0 0
      %856 = vmatprep.subr.bf16.mxu0 0
      %857 = vmatpush1.bf16.msra.mxu0 0
      %858 = vmatprep.subr.bf16.mxu0 0
      %859 = vmatpush1.bf16.msra.mxu0 %v842
      %860 = vmatprep.subr.bf16.mxu0 0
      %861 = vmatpush2.bf16.msra.mxu0 0
      %862 = vmatprep.subr.bf16.mxu0 0
      %863 = vmatpush2.bf16.msra.mxu0 0
      %864 = vmatprep.subr.bf16.mxu0 0
      %865 = vmatpush2.bf16.msra.mxu0 0
      %866 = vmatprep.subr.bf16.mxu0 0
      %867 = vmatpush2.bf16.msra.mxu0 0
      %868 = vmatprep.subr.bf16.mxu0 0
      %869 = vmatpush2.bf16.msra.mxu0 0
      %870 = vmatprep.subr.bf16.mxu0 0
      %871 = vmatpush2.bf16.msra.mxu0 0
      %872 = vmatprep.subr.bf16.mxu0 0
      %873 = vmatpush2.bf16.msra.mxu0 0
      %874 = vmatprep.subr.bf16.mxu0 0
      %875 = vmatpush2.bf16.msra.mxu0 0
      %876 = vmatprep.mubr.bf16.mxu0 0
      %877 = vmatmul.mubr.bf16.gmra.mxu0 %v839
      %v878 = vpop.f32.mrf.mxu0
      %v879 = vadd.f32 0.0, %v878
      %v880 = vpop.f32.mrf.mxu0
      %v881 = vpop.f32.mrf.mxu0
      %v882 = vpop.f32.mrf.mxu0
      %883 = vdwg.mxu0
      %884 = vrot.lane.b32.xlu0 %v541, 104
      %v885 = vpop.permute.xlu0 %884
      %886 = vrot.lane.b32.xlu0 %v542, 104
      %v887 = vpop.permute.xlu0 %886
      %v889 = vsel %vm551, %v885, 0
      %v892 = vsel %vm551, %v887, 0
      %894 = vmatprep.subr.bf16.mxu0 0
      %895 = vmatpush1.bf16.xpose.msra.mxu0 0
      %896 = vmatprep.subr.bf16.mxu0 0
      %897 = vmatpush1.bf16.xpose.msra.mxu0 0
      %898 = vmatprep.subr.bf16.mxu0 0
      %899 = vmatpush1.bf16.xpose.msra.mxu0 0
      %900 = vmatprep.subr.bf16.mxu0 0
      %901 = vmatpush1.bf16.xpose.msra.mxu0 0
      %902 = vmatprep.subr.bf16.mxu0 0
      %903 = vmatpush1.bf16.xpose.msra.mxu0 0
      %904 = vmatprep.subr.bf16.mxu0 0
      %905 = vmatpush1.bf16.xpose.msra.mxu0 0
      %906 = vmatprep.subr.bf16.mxu0 0
      %907 = vmatpush1.bf16.xpose.msra.mxu0 0
      %908 = vmatprep.subr.bf16.mxu0 0
      %909 = vmatpush1.bf16.xpose.msra.mxu0 %v892
      %910 = vmatprep.subr.bf16.mxu0 0
      %911 = vmatpush2.bf16.xpose.msra.mxu0 0
      %912 = vmatprep.subr.bf16.mxu0 0
      %913 = vmatpush2.bf16.xpose.msra.mxu0 0
      %914 = vmatprep.subr.bf16.mxu0 0
      %915 = vmatpush2.bf16.xpose.msra.mxu0 0
      %916 = vmatprep.subr.bf16.mxu0 0
      %917 = vmatpush2.bf16.xpose.msra.mxu0 0
      %918 = vmatprep.subr.bf16.mxu0 0
      %919 = vmatpush2.bf16.xpose.msra.mxu0 0
      %920 = vmatprep.subr.bf16.mxu0 0
      %921 = vmatpush2.bf16.xpose.msra.mxu0 0
      %922 = vmatprep.subr.bf16.mxu0 0
      %923 = vmatpush2.bf16.xpose.msra.mxu0 0
      %924 = vmatprep.subr.bf16.mxu0 0
      %925 = vmatpush2.bf16.xpose.msra.mxu0 0
      %926 = vmatprep.mubr.bf16.mxu0 0
      %927 = vmatmul.mubr.bf16.gmra.mxu0 %v889
      %v928 = vpop.f32.mrf.mxu0
      %v929 = vadd.f32 0.0, %v928
      %v930 = vpop.f32.mrf.mxu0
      %v931 = vpop.f32.mrf.mxu0
      %v932 = vpop.f32.mrf.mxu0
      %933 = vdwg.mxu0
      %v934 = vsel %vm550, %v929, -1e+09
      %v935 = vsel %vm551, %v934, -inf
      %936 = vmax.xlane.f32.xlu0 %v935
      %v937 = vpop.xlane.xlu0 %936
      %v938 = vsub.f32 %v934, %v937
      %v939 = vmul.f32 %v938, 1.442695
      %v940 = vpow.pop %v939
      %v941 = vsel %vm551, %v940, 0.0
      %942 = vadd.xlane.f32.xlu0 %v941
      %v943 = vpop.xlane.xlu0 %942
      %v944 = vrcp.pop %v943
      %v945 = vmul.f32 %v940, %v944
      %v946 = vpack.c.bf16 %v945, %v945
      %947 = vrot.lane.b32.xlu0 %v542, 72
      %v948 = vpop.permute.xlu0 %947
      %v950 = vsel %vm551, %v946, 0
      %v953 = vsel %vm617, %v948, 0
      %955 = vmatprep.subr.bf16.mxu0 0
      %956 = vmatpush1.bf16.msra.mxu0 0
      %957 = vmatprep.subr.bf16.mxu0 0
      %958 = vmatpush1.bf16.msra.mxu0 0
      %959 = vmatprep.subr.bf16.mxu0 0
      %960 = vmatpush1.bf16.msra.mxu0 0
      %961 = vmatprep.subr.bf16.mxu0 0
      %962 = vmatpush1.bf16.msra.mxu0 0
      %963 = vmatprep.subr.bf16.mxu0 0
      %964 = vmatpush1.bf16.msra.mxu0 0
      %965 = vmatprep.subr.bf16.mxu0 0
      %966 = vmatpush1.bf16.msra.mxu0 0
      %967 = vmatprep.subr.bf16.mxu0 0
      %968 = vmatpush1.bf16.msra.mxu0 0
      %969 = vmatprep.subr.bf16.mxu0 0
      %970 = vmatpush1.bf16.msra.mxu0 %v953
      %971 = vmatprep.subr.bf16.mxu0 0
      %972 = vmatpush2.bf16.msra.mxu0 0
      %973 = vmatprep.subr.bf16.mxu0 0
      %974 = vmatpush2.bf16.msra.mxu0 0
      %975 = vmatprep.subr.bf16.mxu0 0
      %976 = vmatpush2.bf16.msra.mxu0 0
      %977 = vmatprep.subr.bf16.mxu0 0
      %978 = vmatpush2.bf16.msra.mxu0 0
      %979 = vmatprep.subr.bf16.mxu0 0
      %980 = vmatpush2.bf16.msra.mxu0 0
      %981 = vmatprep.subr.bf16.mxu0 0
      %982 = vmatpush2.bf16.msra.mxu0 0
      %983 = vmatprep.subr.bf16.mxu0 0
      %984 = vmatpush2.bf16.msra.mxu0 0
      %985 = vmatprep.subr.bf16.mxu0 0
      %986 = vmatpush2.bf16.msra.mxu0 0
      %987 = vmatprep.mubr.bf16.mxu0 0
      %988 = vmatmul.mubr.bf16.gmra.mxu0 %v950
      %v989 = vpop.f32.mrf.mxu0
      %v990 = vadd.f32 0.0, %v989
      %v991 = vpop.f32.mrf.mxu0
      %v992 = vpop.f32.mrf.mxu0
      %v993 = vpop.f32.mrf.mxu0
      %994 = vdwg.mxu0
      %996 = vrot.lane.b32.xlu0 %v768, 8
      %v997 = vpop.permute.xlu0 %996
      %1000 = vrot.lane.b32.xlu0 %v879, 16
      %v1001 = vpop.permute.xlu0 %1000
      %1004 = vrot.lane.b32.xlu0 %v990, 24
      %v1005 = vpop.permute.xlu0 %1004
      %v1007 = vsel %vm551, %v656, %v997
      %vm1008 = vcmask 130048
      %v1009 = vsel %vm1008, %v1007, %v1001
      %vm1010 = vcmask 195584
      %v1011 = vsel %vm1010, %v1009, %v1005
      %v1012 = vpack.c.bf16 %v1011, %v1011
      %v1013 = vld [vmem:[%s8] sm:$0xf]
      %v1014 = vld [vmem:[%s8 + $0x4] sm:$0xf]
      %v1015 = vld [vmem:[%s8 + $0x8] sm:$0xf]
      %v1016 = vld [vmem:[%s8 + $0xc] sm:$0xf]
      %v1017 = vld [vmem:[%s9] sm:$0x1]
      %v1019 = vlaneseq
      %v1020 = vshrl.u32 %v1019, 7
      %v1021 = vsub.s32 0, %v1020
      %v1022 = vrot.slane %v1017, %v1021
      %v1028 = vunpack.c.l.b16 %v1013
      %v1029 = vunpack.c.l.b16 %v1014
      %v1030 = vunpack.c.l.b16 %v1015
      %v1031 = vunpack.c.l.b16 %v1016
      %v1032 = vpack.c.b16 %v1029, %v1028
      %v1033 = vpack.c.b16 %v1031, %v1030
      %v1037 = vsel %vm373, %v1012, 0
      %1039 = vmatprep.subr.bf16.mxu0 0
      %1040 = vmatpush1.bf16.msra.mxu0 0
      %1041 = vmatprep.subr.bf16.mxu0 0
      %1042 = vmatpush1.bf16.msra.mxu0 0
      %1043 = vmatprep.subr.bf16.mxu0 0
      %1044 = vmatpush1.bf16.msra.mxu0 0
      %1045 = vmatprep.subr.bf16.mxu0 0
      %1046 = vmatpush1.bf16.msra.mxu0 0
      %1047 = vmatprep.subr.bf16.mxu0 0
      %1048 = vmatpush1.bf16.msra.mxu0 0
      %1049 = vmatprep.subr.bf16.mxu0 0
      %1050 = vmatpush1.bf16.msra.mxu0 0
      %1051 = vmatprep.subr.bf16.mxu0 0
      %1052 = vmatpush1.bf16.msra.mxu0 %v1033
      %1053 = vmatprep.subr.bf16.mxu0 0
      %1054 = vmatpush1.bf16.msra.mxu0 %v1032
      %1055 = vmatprep.subr.bf16.mxu0 0
      %1056 = vmatpush2.bf16.msra.mxu0 0
      %1057 = vmatprep.subr.bf16.mxu0 0
      %1058 = vmatpush2.bf16.msra.mxu0 0
      %1059 = vmatprep.subr.bf16.mxu0 0
      %1060 = vmatpush2.bf16.msra.mxu0 0
      %1061 = vmatprep.subr.bf16.mxu0 0
      %1062 = vmatpush2.bf16.msra.mxu0 0
      %1063 = vmatprep.subr.bf16.mxu0 0
      %1064 = vmatpush2.bf16.msra.mxu0 0
      %1065 = vmatprep.subr.bf16.mxu0 0
      %1066 = vmatpush2.bf16.msra.mxu0 0
      %1067 = vmatprep.subr.bf16.mxu0 0
      %1068 = vmatpush2.bf16.msra.mxu0 0
      %1069 = vmatprep.subr.bf16.mxu0 0
      %1070 = vmatpush2.bf16.msra.mxu0 0
      %1071 = vmatprep.mubr.bf16.mxu0 0
      %1072 = vmatmul.mubr.bf16.gmra.mxu0 %v1037
      %v1073 = vpop.f32.mrf.mxu0
      %v1074 = vadd.f32 %v1022, %v1073
      %v1075 = vpop.f32.mrf.mxu0
      %v1076 = vpop.f32.mrf.mxu0
      %v1077 = vpop.f32.mrf.mxu0
      %1078 = vdwg.mxu0
      %v1079 = vadd.f32 %v370, %v1074
      %1080 = vst.msk [vmem:[%s368] sm:$0xff] %vm373, %v1079
      %p1081 = scmp.lt.s32.totalorder %s21, 1
      %s1082 = scalar_select %p1081, %s21, 1
      %s1083 = smul.addr %s1082, 8
      %s1084 = scalar_lea.vmem %s10, %s1083
      // Predicated region
      $region61: #{encoder_decoder_forward.12} parent=59 // pred_check
        %p1085 = pneg %p259
      $region62: #{encoder_decoder_forward.12} parent=59 // pred_check_branch
        %1087 = sbr.rel (%p1085) target = $region64
      $region63: #{encoder_decoder_forward.12} parent=59 // pred_region
        _
      $region64: #{encoder_decoder_forward.12} parent=59 // pred_fallthru
        _
    $region60: #{encoder_decoder_forward.12} parent=5 // pred_fallthru
      _
    %p1088 = scmp.le.s32.totalorder 2, %s16
    // Predicated region
    $region65: #{encoder_decoder_forward.12} parent=5 // pred_check
      %p1089 = pneg %p1088
    $region66: #{encoder_decoder_forward.12} parent=5 // pred_check_branch
      %1091 = sbr.rel (%p1089) target = $region68
    $region67: #{encoder_decoder_forward.12} parent=5 // pred_region
      %s1092 = ssub.s32 %s16, 2
      // Predicated region
      $region69: #{encoder_decoder_forward.12} parent=67 // pred_check
        %p1093 = pneg %p265
      $region70: #{encoder_decoder_forward.12} parent=67 // pred_check_branch
        %1095 = sbr.rel (%p1093) target = $region72
      $region71: #{encoder_decoder_forward.12} parent=67 // pred_region
        %p1096 = scmp.lt.s32.totalorder %s22, 1
        %s1097 = scalar_select %p1096, %s22, 1
        %s1098 = smul.addr %s1097, 8
        %s1099 = scalar_lea.vmem %s10, %s1098
      $region72: #{encoder_decoder_forward.12} parent=67 // pred_fallthru
        _
    $region68: #{encoder_decoder_forward.12} parent=5 // pred_fallthru
      _
  $region6: #{encoder_decoder_forward.12} parent=0 // loop_footer
    %s20 = sadd.s32 1, %s16
  $region7: #{encoder_decoder_forward.12} parent=0 // loop_footer_branch
    %15 = sbr.rel target = $region3
  $region8: #{encoder_decoder_forward.12} parent=0 // loop_exit
    _

// kernel: encoder_decoder_forward.23
$region0: #{encoder_decoder_forward.23}
  #allocation0 [shape = 'u32[]', space=smem, size = 0x4, offset = 0x4, fixed_abs, tag = 'smem constant byte address 0x4 - core index']
  #allocation1 [shape = 'u32[144,128]{1,0:T(1,128)}', space=vmem, size = 0x12000, scoped, tag = 'internal scratch']
  %s0 = inlined_call_operand.vmem [shape: f32[16,32], index: 0, kind: input, shape index: {}]
  %s1 = inlined_call_operand.vmem [shape: f32[1,32], index: 1, kind: input, shape index: {}]
  %s2 = inlined_call_operand.vmem [shape: f32[1,32], index: 2, kind: input, shape index: {}]
  %s3 = inlined_call_operand.hbm [shape: f32[16,32], index: 3, kind: output, shape index: {}]
  %s4 = sld [smem:[#allocation0]]
  $region22: #{encoder_decoder_forward.23} parent=0
    _
  %s6 = ssub.s32 1, %s4
  %s7 = scalar_select 0, %s6, %s4
  $region1: #{encoder_decoder_forward.23} parent=0
    #allocation2 [shape = 'u8[8192]{0}', space=vmem, size = 0x2000, scoped, tag = 'output window, operand 0, single buffered']
    #allocation3 [shape = 's32[1]{0}', space=sflag, size = 0x4, scoped, tag = 'scoped memory for encoder_decoder_forward.23']
    %8 = vsyncpa [#allocation3], 0
    // Predicated region
    $region2: #{encoder_decoder_forward.23} parent=1 // pred_check
      _
    $region3: #{encoder_decoder_forward.23} parent=1 // pred_check_branch
      %10 = sbr.rel (0) target = $region5
    $region4: #{encoder_decoder_forward.23} parent=1 // pred_region
      _
    $region5: #{encoder_decoder_forward.23} parent=1 // pred_fallthru
      _
    // Predicated region
    $region6: #{encoder_decoder_forward.23} parent=1 // pred_check
      _
    $region7: #{encoder_decoder_forward.23} parent=1 // pred_check_branch
      %12 = sbr.rel (0) target = $region9
    $region8: #{encoder_decoder_forward.23} parent=1 // pred_region
      _
    $region9: #{encoder_decoder_forward.23} parent=1 // pred_fallthru
      _
    // Predicated region
    $region10: #{encoder_decoder_forward.23} parent=1 // pred_check
      _
    $region11: #{encoder_decoder_forward.23} parent=1 // pred_check_branch
      %14 = sbr.rel (0) target = $region13
    $region12: #{encoder_decoder_forward.23} parent=1 // pred_region
      _
    $region13: #{encoder_decoder_forward.23} parent=1 // pred_fallthru
      _
    %v15 = vld [vmem:[%s0] sm:$0xff]
    %v16 = vld [vmem:[%s0 + $0x8] sm:$0xff]
    %v17 = vld [vmem:[%s1] sm:$0x1]
    %v18 = vld [vmem:[%s2] sm:$0x1]
    %vm19 = vcmask 261120
    %v20 = vsel %vm19, %v15, 0.0
    %21 = vadd.xlane.f32.xlu0 %v20
    %v22 = vpop.xlane.xlu0 %21
    %v23 = vsel %vm19, %v16, 0.0
    %24 = vadd.xlane.f32.xlu0 %v23
    %v25 = vpop.xlane.xlu0 %24
    %v26 = vrcp.pop 32.0
    %v27 = vmul.f32 %v22, %v26
    %v28 = vmul.f32 %v25, %v26
    %v29 = vsub.f32 %v15, %v27
    %v30 = vsub.f32 %v16, %v28
    %v31 = vmul.f32 %v29, %v29
    %v32 = vmul.f32 %v30, %v30
    %v33 = vsel %vm19, %v31, 0.0
    %34 = vadd.xlane.f32.xlu0 %v33
    %v35 = vpop.xlane.xlu0 %34
    %v36 = vsel %vm19, %v32, 0.0
    %37 = vadd.xlane.f32.xlu0 %v36
    %v38 = vpop.xlane.xlu0 %37
    %v39 = vmul.f32 %v35, 0.032258064
    %v40 = vmul.f32 %v38, 0.032258064
    %v41 = vrsqrt.pop %v39
    %v42 = vmul.f32 %v39, %v41
    %vm43 = vcmp.eq.f32.partialorder %v39, inf
    %v44 = vsel %vm43, %v39, %v42
    %vm45 = vcmp.eq.f32.partialorder %v39, 0.0
    %v46 = vand.u32 %v39, 2147483648
    %v47 = vsel %vm45, %v46, %v44
    %v48 = vrsqrt.pop %v40
    %v49 = vmul.f32 %v40, %v48
    %vm50 = vcmp.eq.f32.partialorder %v40, inf
    %v51 = vsel %vm50, %v40, %v49
    %vm52 = vcmp.eq.f32.partialorder %v40, 0.0
    %v53 = vand.u32 %v40, 2147483648
    %v54 = vsel %vm52, %v53, %v51
    %v55 = vadd.f32 %v47, 1e-06
    %v56 = vadd.f32 %v54, 1e-06
    %v57 = vrcp.pop %v55
    %v58 = vmul.f32 1.0, %v57
    %v59 = vrcp.pop %v56
    %v60 = vmul.f32 1.0, %v59
    %v62 = vlaneseq
    %v63 = vshrl.u32 %v62, 7
    %v64 = vsub.s32 0, %v63
    %v65 = vrot.slane %v17, %v64
    %v67 = vmul.f32 %v65, %v29
    %v68 = vmul.f32 %v65, %v30
    %v69 = vmul.f32 %v67, %v58
    %v70 = vmul.f32 %v68, %v60
    %v72 = vlaneseq
    %v73 = vshrl.u32 %v72, 7
    %v74 = vsub.s32 0, %v73
    %v75 = vrot.slane %v18, %v74
    %v77 = vadd.f32 %v69, %v75
    %v78 = vadd.f32 %v70, %v75
    %79 = vst.msk [vmem:[#allocation2] sm:$0xff] %vm19, %v77
    %80 = vst.msk [vmem:[#allocation2 + $0x8] sm:$0xff] %vm19, %v78
    // Predicated region
    $region14: #{encoder_decoder_forward.23} parent=1 // pred_check
      _
    $region15: #{encoder_decoder_forward.23} parent=1 // pred_check_branch
      %82 = sbr.rel (0) target = $region17
    $region16: #{encoder_decoder_forward.23} parent=1 // pred_region
      %s84 = ssub.s32 256, 256
      %85 = vsyncadd [#allocation3], %s84
      %s86 = sshll.u32 [#allocation2], 4
      %s87 = int_to_ptr.vmem [resolvable:$true] %s86
      %92 = dma.vmem_to_hbm [thread:$0]  %s87, 256, %s3, [#allocation3], 128, 128, 8
    $region17: #{encoder_decoder_forward.23} parent=1 // pred_fallthru
      _
    // Predicated region
    $region18: #{encoder_decoder_forward.23} parent=1 // pred_check
      _
    $region19: #{encoder_decoder_forward.23} parent=1 // pred_check_branch
      %94 = sbr.rel (0) target = $region21
    $region20: #{encoder_decoder_forward.23} parent=1 // pred_region
      %95 = dma.done [#allocation3], 256
    $region21: #{encoder_decoder_forward.23} parent=1 // pred_fallthru
      _
    %96 = vsyncpa [#allocation3], 1

// kernel: encoder_decoder_forward.18
$region0: #{encoder_decoder_forward.18}
  #allocation0 [shape = 'u32[]', space=smem, size = 0x4, offset = 0x4, fixed_abs, tag = 'smem constant byte address 0x4 - core index']
  #allocation1 [shape = 'u32[144,128]{1,0:T(1,128)}', space=vmem, size = 0x12000, scoped, tag = 'internal scratch']
  %s0 = inlined_call_operand.vmem [shape: f32[2,8,32], index: 0, kind: input, shape index: {}]
  %s1 = inlined_call_operand.vmem [shape: f32[2,8,32], index: 1, kind: input, shape index: {}]
  %s2 = inlined_call_operand.vmem [shape: f32[2,1,8], index: 2, kind: input, shape index: {}]
  %s3 = inlined_call_operand.vmem [shape: f32[1,32], index: 3, kind: input, shape index: {}]
  %s4 = inlined_call_operand.vmem [shape: f32[1,32], index: 4, kind: input, shape index: {}]
  %s5 = inlined_call_operand.vmem [shape: bf16[32,32], index: 5, kind: input, shape index: {}]
  %s6 = inlined_call_operand.vmem [shape: f32[1,32], index: 6, kind: input, shape index: {}]
  %s7 = inlined_call_operand.vmem [shape: bf16[32,64], index: 7, kind: input, shape index: {}]
  %s8 = inlined_call_operand.vmem [shape: f32[1,64], index: 8, kind: input, shape index: {}]
  %s9 = inlined_call_operand.vmem [shape: bf16[32,32], index: 9, kind: input, shape index: {}]
  %s10 = inlined_call_operand.vmem [shape: f32[1,32], index: 10, kind: input, shape index: {}]
  %s11 = inlined_call_operand.vmem [shape: f32[2,8,32], index: 11, kind: output, shape index: {}]
  %s12 = sld [smem:[#allocation0]]
  $region77: #{encoder_decoder_forward.18} parent=0
    _
  %s14 = ssub.s32 1, %s12
  %s15 = scalar_select 0, %s14, %s12
  loop: start=0, step=1, limit=4
  $region2: #{encoder_decoder_forward.18} parent=0 // loop_pre_header
    _
  $region3: #{encoder_decoder_forward.18} parent=0 // loop_header
    %s17 = sphi 0, %s21
    %p18 = scmp.ge.s32.totalorder %s17, 4
    %s27 = sphi 0, %s29
    %s30 = sphi 0, %s27
    %s31 = sphi 0, %s30
    %s47 = sphi 0, %s31
    %s53 = sphi 0, %s55
    %s56 = sphi 0, %s53
    %s57 = sphi 0, %s56
    %s73 = sphi 0, %s57
    %s79 = sphi 0, %s81
    %s82 = sphi 0, %s79
    %s83 = sphi 0, %s82
    %s99 = sphi 0, %s83
    %s103 = sphi 0, %s103
    %s105 = sphi 0, %s103
    %s106 = sphi 0, %s105
    %s120 = sphi 0, %s106
    %s124 = sphi 0, %s124
    %s126 = sphi 0, %s124
    %s127 = sphi 0, %s126
    %s141 = sphi 0, %s127
    %s145 = sphi 0, %s145
    %s147 = sphi 0, %s145
    %s148 = sphi 0, %s147
    %s162 = sphi 0, %s148
    %s166 = sphi 0, %s166
    %s168 = sphi 0, %s166
    %s169 = sphi 0, %s168
    %s183 = sphi 0, %s169
    %s187 = sphi 0, %s187
    %s189 = sphi 0, %s187
    %s190 = sphi 0, %s189
    %s204 = sphi 0, %s190
    %s208 = sphi 0, %s208
    %s210 = sphi 0, %s208
    %s211 = sphi 0, %s210
    %s225 = sphi 0, %s211
    %s229 = sphi 0, %s229
    %s231 = sphi 0, %s229
    %s232 = sphi 0, %s231
    %s246 = sphi 0, %s232
    %s250 = sphi 0, %s250
    %s252 = sphi 0, %s250
    %s253 = sphi 0, %s252
    %s267 = sphi 0, %s253
    %s273 = sphi 0, %s275
    %s276 = sphi 0, %s273
    %s277 = sphi 0, %s276
    %s293 = sphi 0, %s277
  $region4: #{encoder_decoder_forward.18} parent=0 // loop_header_branch
    %20 = sbr.rel (%p18) target = $region8
  $region5: #{encoder_decoder_forward.18} parent=0 // loop_body
    %s22 = ssub.s32 %s17, 1
    %s23 = ssub.s32 %s17, 2
    %s24 = sadd.s32 %s17, 1
    %s25 = ssub.s32 %s17, %s24
    %p26 = scmp.eq.s32.totalorder %s25, 0
    %s28 = sadd.s32 %s27, 1
    %s29 = scalar_select %p26, %s27, %s28
    %p32 = pneg %p26
    %p33 = scmp.eq.s32.totalorder %s17, 1
    %p34 = por %p32, %p33
    %p35 = scmp.ne.s32.totalorder %s27, %s30
    %p36 = scmp.eq.s32.totalorder %s17, 0
    %p37 = por %p35, %p36
    %p38 = scmp.ne.s32.totalorder %s27, %s30
    %p39 = scmp.eq.s32.totalorder %s22, 1
    %p40 = por %p38, %p39
    %p41 = scmp.ne.s32.totalorder %s30, %s31
    %p42 = scmp.eq.s32.totalorder %s22, 0
    %p43 = por %p41, %p42
    %p44 = scmp.ne.s32.totalorder %s30, %s31
    %p45 = scmp.eq.s32.totalorder %s23, 1
    %p46 = por %p44, %p45
    %p48 = scmp.ne.s32.totalorder %s31, %s47
    %p49 = scmp.eq.s32.totalorder %s23, 0
    %p50 = por %p48, %p49
    %s51 = ssub.s32 %s17, %s24
    %p52 = scmp.eq.s32.totalorder %s51, 0
    %s54 = sadd.s32 %s53, 1
    %s55 = scalar_select %p52, %s53, %s54
    %p58 = pneg %p52
    %p59 = scmp.eq.s32.totalorder %s17, 1
    %p60 = por %p58, %p59
    %p61 = scmp.ne.s32.totalorder %s53, %s56
    %p62 = scmp.eq.s32.totalorder %s17, 0
    %p63 = por %p61, %p62
    %p64 = scmp.ne.s32.totalorder %s53, %s56
    %p65 = scmp.eq.s32.totalorder %s22, 1
    %p66 = por %p64, %p65
    %p67 = scmp.ne.s32.totalorder %s56, %s57
    %p68 = scmp.eq.s32.totalorder %s22, 0
    %p69 = por %p67, %p68
    %p70 = scmp.ne.s32.totalorder %s56, %s57
    %p71 = scmp.eq.s32.totalorder %s23, 1
    %p72 = por %p70, %p71
    %p74 = scmp.ne.s32.totalorder %s57, %s73
    %p75 = scmp.eq.s32.totalorder %s23, 0
    %p76 = por %p74, %p75
    %s77 = ssub.s32 %s17, %s24
    %p78 = scmp.eq.s32.totalorder %s77, 0
    %s80 = sadd.s32 %s79, 1
    %s81 = scalar_select %p78, %s79, %s80
    %p84 = pneg %p78
    %p85 = scmp.eq.s32.totalorder %s17, 1
    %p86 = por %p84, %p85
    %p87 = scmp.ne.s32.totalorder %s79, %s82
    %p88 = scmp.eq.s32.totalorder %s17, 0
    %p89 = por %p87, %p88
    %p90 = scmp.ne.s32.totalorder %s79, %s82
    %p91 = scmp.eq.s32.totalorder %s22, 1
    %p92 = por %p90, %p91
    %p93 = scmp.ne.s32.totalorder %s82, %s83
    %p94 = scmp.eq.s32.totalorder %s22, 0
    %p95 = por %p93, %p94
    %p96 = scmp.ne.s32.totalorder %s82, %s83
    %p97 = scmp.eq.s32.totalorder %s23, 1
    %p98 = por %p96, %p97
    %p100 = scmp.ne.s32.totalorder %s83, %s99
    %p101 = scmp.eq.s32.totalorder %s23, 0
    %p102 = por %p100, %p101
    %s104 = sadd.s32 %s103, 1
    %p107 = scmp.eq.s32.totalorder %s17, 1
    %p108 = scmp.ne.s32.totalorder %s103, %s105
    %p109 = scmp.eq.s32.totalorder %s17, 0
    %p110 = por %p108, %p109
    %p111 = scmp.ne.s32.totalorder %s103, %s105
    %p112 = scmp.eq.s32.totalorder %s22, 1
    %p113 = por %p111, %p112
    %p114 = scmp.ne.s32.totalorder %s105, %s106
    %p115 = scmp.eq.s32.totalorder %s22, 0
    %p116 = por %p114, %p115
    %p117 = scmp.ne.s32.totalorder %s105, %s106
    %p118 = scmp.eq.s32.totalorder %s23, 1
    %p119 = por %p117, %p118
    %p121 = scmp.ne.s32.totalorder %s106, %s120
    %p122 = scmp.eq.s32.totalorder %s23, 0
    %p123 = por %p121, %p122
    %s125 = sadd.s32 %s124, 1
    %p128 = scmp.eq.s32.totalorder %s17, 1
    %p129 = scmp.ne.s32.totalorder %s124, %s126
    %p130 = scmp.eq.s32.totalorder %s17, 0
    %p131 = por %p129, %p130
    %p132 = scmp.ne.s32.totalorder %s124, %s126
    %p133 = scmp.eq.s32.totalorder %s22, 1
    %p134 = por %p132, %p133
    %p135 = scmp.ne.s32.totalorder %s126, %s127
    %p136 = scmp.eq.s32.totalorder %s22, 0
    %p137 = por %p135, %p136
    %p138 = scmp.ne.s32.totalorder %s126, %s127
    %p139 = scmp.eq.s32.totalorder %s23, 1
    %p140 = por %p138, %p139
    %p142 = scmp.ne.s32.totalorder %s127, %s141
    %p143 = scmp.eq.s32.totalorder %s23, 0
    %p144 = por %p142, %p143
    %s146 = sadd.s32 %s145, 1
    %p149 = scmp.eq.s32.totalorder %s17, 1
    %p150 = scmp.ne.s32.totalorder %s145, %s147
    %p151 = scmp.eq.s32.totalorder %s17, 0
    %p152 = por %p150, %p151
    %p153 = scmp.ne.s32.totalorder %s145, %s147
    %p154 = scmp.eq.s32.totalorder %s22, 1
    %p155 = por %p153, %p154
    %p156 = scmp.ne.s32.totalorder %s147, %s148
    %p157 = scmp.eq.s32.totalorder %s22, 0
    %p158 = por %p156, %p157
    %p159 = scmp.ne.s32.totalorder %s147, %s148
    %p160 = scmp.eq.s32.totalorder %s23, 1
    %p161 = por %p159, %p160
    %p163 = scmp.ne.s32.totalorder %s148, %s162
    %p164 = scmp.eq.s32.totalorder %s23, 0
    %p165 = por %p163, %p164
    %s167 = sadd.s32 %s166, 1
    %p170 = scmp.eq.s32.totalorder %s17, 1
    %p171 = scmp.ne.s32.totalorder %s166, %s168
    %p172 = scmp.eq.s32.totalorder %s17, 0
    %p173 = por %p171, %p172
    %p174 = scmp.ne.s32.totalorder %s166, %s168
    %p175 = scmp.eq.s32.totalorder %s22, 1
    %p176 = por %p174, %p175
    %p177 = scmp.ne.s32.totalorder %s168, %s169
    %p178 = scmp.eq.s32.totalorder %s22, 0
    %p179 = por %p177, %p178
    %p180 = scmp.ne.s32.totalorder %s168, %s169
    %p181 = scmp.eq.s32.totalorder %s23, 1
    %p182 = por %p180, %p181
    %p184 = scmp.ne.s32.totalorder %s169, %s183
    %p185 = scmp.eq.s32.totalorder %s23, 0
    %p186 = por %p184, %p185
    %s188 = sadd.s32 %s187, 1
    %p191 = scmp.eq.s32.totalorder %s17, 1
    %p192 = scmp.ne.s32.totalorder %s187, %s189
    %p193 = scmp.eq.s32.totalorder %s17, 0
    %p194 = por %p192, %p193
    %p195 = scmp.ne.s32.totalorder %s187, %s189
    %p196 = scmp.eq.s32.totalorder %s22, 1
    %p197 = por %p195, %p196
    %p198 = scmp.ne.s32.totalorder %s189, %s190
    %p199 = scmp.eq.s32.totalorder %s22, 0
    %p200 = por %p198, %p199
    %p201 = scmp.ne.s32.totalorder %s189, %s190
    %p202 = scmp.eq.s32.totalorder %s23, 1
    %p203 = por %p201, %p202
    %p205 = scmp.ne.s32.totalorder %s190, %s204
    %p206 = scmp.eq.s32.totalorder %s23, 0
    %p207 = por %p205, %p206
    %s209 = sadd.s32 %s208, 1
    %p212 = scmp.eq.s32.totalorder %s17, 1
    %p213 = scmp.ne.s32.totalorder %s208, %s210
    %p214 = scmp.eq.s32.totalorder %s17, 0
    %p215 = por %p213, %p214
    %p216 = scmp.ne.s32.totalorder %s208, %s210
    %p217 = scmp.eq.s32.totalorder %s22, 1
    %p218 = por %p216, %p217
    %p219 = scmp.ne.s32.totalorder %s210, %s211
    %p220 = scmp.eq.s32.totalorder %s22, 0
    %p221 = por %p219, %p220
    %p222 = scmp.ne.s32.totalorder %s210, %s211
    %p223 = scmp.eq.s32.totalorder %s23, 1
    %p224 = por %p222, %p223
    %p226 = scmp.ne.s32.totalorder %s211, %s225
    %p227 = scmp.eq.s32.totalorder %s23, 0
    %p228 = por %p226, %p227
    %s230 = sadd.s32 %s229, 1
    %p233 = scmp.eq.s32.totalorder %s17, 1
    %p234 = scmp.ne.s32.totalorder %s229, %s231
    %p235 = scmp.eq.s32.totalorder %s17, 0
    %p236 = por %p234, %p235
    %p237 = scmp.ne.s32.totalorder %s229, %s231
    %p238 = scmp.eq.s32.totalorder %s22, 1
    %p239 = por %p237, %p238
    %p240 = scmp.ne.s32.totalorder %s231, %s232
    %p241 = scmp.eq.s32.totalorder %s22, 0
    %p242 = por %p240, %p241
    %p243 = scmp.ne.s32.totalorder %s231, %s232
    %p244 = scmp.eq.s32.totalorder %s23, 1
    %p245 = por %p243, %p244
    %p247 = scmp.ne.s32.totalorder %s232, %s246
    %p248 = scmp.eq.s32.totalorder %s23, 0
    %p249 = por %p247, %p248
    %s251 = sadd.s32 %s250, 1
    %p254 = scmp.eq.s32.totalorder %s17, 1
    %p255 = scmp.ne.s32.totalorder %s250, %s252
    %p256 = scmp.eq.s32.totalorder %s17, 0
    %p257 = por %p255, %p256
    %p258 = scmp.ne.s32.totalorder %s250, %s252
    %p259 = scmp.eq.s32.totalorder %s22, 1
    %p260 = por %p258, %p259
    %p261 = scmp.ne.s32.totalorder %s252, %s253
    %p262 = scmp.eq.s32.totalorder %s22, 0
    %p263 = por %p261, %p262
    %p264 = scmp.ne.s32.totalorder %s252, %s253
    %p265 = scmp.eq.s32.totalorder %s23, 1
    %p266 = por %p264, %p265
    %p268 = scmp.ne.s32.totalorder %s253, %s267
    %p269 = scmp.eq.s32.totalorder %s23, 0
    %p270 = por %p268, %p269
    %s271 = ssub.s32 %s17, %s24
    %p272 = scmp.eq.s32.totalorder %s271, 0
    %s274 = sadd.s32 %s273, 1
    %s275 = scalar_select %p272, %s273, %s274
    %p278 = pneg %p272
    %p279 = scmp.eq.s32.totalorder %s17, 1
    %p280 = por %p278, %p279
    %p281 = scmp.ne.s32.totalorder %s273, %s276
    %p282 = scmp.eq.s32.totalorder %s17, 0
    %p283 = por %p281, %p282
    %p284 = scmp.ne.s32.totalorder %s273, %s276
    %p285 = scmp.eq.s32.totalorder %s22, 1
    %p286 = por %p284, %p285
    %p287 = scmp.ne.s32.totalorder %s276, %s277
    %p288 = scmp.eq.s32.totalorder %s22, 0
    %p289 = por %p287, %p288
    %p290 = scmp.ne.s32.totalorder %s276, %s277
    %p291 = scmp.eq.s32.totalorder %s23, 1
    %p292 = por %p290, %p291
    %p294 = scmp.ne.s32.totalorder %s277, %s293
    %p295 = scmp.eq.s32.totalorder %s23, 0
    %p296 = por %p294, %p295
    %p297 = scmp.le.s32.totalorder 1, %s17
    %p298 = scmp.lt.s32.totalorder %s17, 3
    %p299 = pnand %p297, %p298
    %p300 = pneg %p299
    // Predicated region
    $region9: #{encoder_decoder_forward.18} parent=5 // pred_check
      _
    $region10: #{encoder_decoder_forward.18} parent=5 // pred_check_branch
      %302 = sbr.rel (%p299) target = $region12
    $region11: #{encoder_decoder_forward.18} parent=5 // pred_region
      %s303 = ssub.s32 %s17, 1
      // Predicated region
      $region13: #{encoder_decoder_forward.18} parent=11 // pred_check
        %p304 = pneg %p116
      $region14: #{encoder_decoder_forward.18} parent=11 // pred_check_branch
        %306 = sbr.rel (%p304) target = $region16
      $region15: #{encoder_decoder_forward.18} parent=11 // pred_region
        _
      $region16: #{encoder_decoder_forward.18} parent=11 // pred_fallthru
        _
      // Predicated region
      $region17: #{encoder_decoder_forward.18} parent=11 // pred_check
        %p307 = pneg %p137
      $region18: #{encoder_decoder_forward.18} parent=11 // pred_check_branch
        %309 = sbr.rel (%p307) target = $region20
      $region19: #{encoder_decoder_forward.18} parent=11 // pred_region
        _
      $region20: #{encoder_decoder_forward.18} parent=11 // pred_fallthru
        _
      // Predicated region
      $region21: #{encoder_decoder_forward.18} parent=11 // pred_check
        %p310 = pneg %p158
      $region22: #{encoder_decoder_forward.18} parent=11 // pred_check_branch
        %312 = sbr.rel (%p310) target = $region24
      $region23: #{encoder_decoder_forward.18} parent=11 // pred_region
        _
      $region24: #{encoder_decoder_forward.18} parent=11 // pred_fallthru
        _
      // Predicated region
      $region25: #{encoder_decoder_forward.18} parent=11 // pred_check
        %p313 = pneg %p179
      $region26: #{encoder_decoder_forward.18} parent=11 // pred_check_branch
        %315 = sbr.rel (%p313) target = $region28
      $region27: #{encoder_decoder_forward.18} parent=11 // pred_region
        _
      $region28: #{encoder_decoder_forward.18} parent=11 // pred_fallthru
        _
      // Predicated region
      $region29: #{encoder_decoder_forward.18} parent=11 // pred_check
        %p316 = pneg %p200
      $region30: #{encoder_decoder_forward.18} parent=11 // pred_check_branch
        %318 = sbr.rel (%p316) target = $region32
      $region31: #{encoder_decoder_forward.18} parent=11 // pred_region
        _
      $region32: #{encoder_decoder_forward.18} parent=11 // pred_fallthru
        _
      // Predicated region
      $region33: #{encoder_decoder_forward.18} parent=11 // pred_check
        %p319 = pneg %p221
      $region34: #{encoder_decoder_forward.18} parent=11 // pred_check_branch
        %321 = sbr.rel (%p319) target = $region36
      $region35: #{encoder_decoder_forward.18} parent=11 // pred_region
        _
      $region36: #{encoder_decoder_forward.18} parent=11 // pred_fallthru
        _
      // Predicated region
      $region37: #{encoder_decoder_forward.18} parent=11 // pred_check
        %p322 = pneg %p242
      $region38: #{encoder_decoder_forward.18} parent=11 // pred_check_branch
        %324 = sbr.rel (%p322) target = $region40
      $region39: #{encoder_decoder_forward.18} parent=11 // pred_region
        _
      $region40: #{encoder_decoder_forward.18} parent=11 // pred_fallthru
        _
      // Predicated region
      $region41: #{encoder_decoder_forward.18} parent=11 // pred_check
        %p325 = pneg %p263
      $region42: #{encoder_decoder_forward.18} parent=11 // pred_check_branch
        %327 = sbr.rel (%p325) target = $region44
      $region43: #{encoder_decoder_forward.18} parent=11 // pred_region
        _
      $region44: #{encoder_decoder_forward.18} parent=11 // pred_fallthru
        _
    $region12: #{encoder_decoder_forward.18} parent=5 // pred_fallthru
      _
    %p328 = scmp.lt.s32.totalorder %s17, 2
    // Predicated region
    $region45: #{encoder_decoder_forward.18} parent=5 // pred_check
      %p329 = pneg %p328
    $region46: #{encoder_decoder_forward.18} parent=5 // pred_check_branch
      %331 = sbr.rel (%p329) target = $region48
    $region47: #{encoder_decoder_forward.18} parent=5 // pred_region
      // Predicated region
      $region49: #{encoder_decoder_forward.18} parent=47 // pred_check
        %p332 = pneg %p37
      $region50: #{encoder_decoder_forward.18} parent=47 // pred_check_branch
        %334 = sbr.rel (%p332) target = $region52
      $region51: #{encoder_decoder_forward.18} parent=47 // pred_region
        %p335 = scmp.lt.s32.totalorder %s17, 1
        %s336 = scalar_select %p335, %s17, 1
        %s337 = smul.addr %s336, 8
        %s338 = scalar_lea.vmem %s0, %s337
      $region52: #{encoder_decoder_forward.18} parent=47 // pred_fallthru
        _
      // Predicated region
      $region53: #{encoder_decoder_forward.18} parent=47 // pred_check
        %p339 = pneg %p63
      $region54: #{encoder_decoder_forward.18} parent=47 // pred_check_branch
        %341 = sbr.rel (%p339) target = $region56
      $region55: #{encoder_decoder_forward.18} parent=47 // pred_region
        %p342 = scmp.lt.s32.totalorder %s17, 1
        %s343 = scalar_select %p342, %s17, 1
        %s344 = smul.addr %s343, 8
        %s345 = scalar_lea.vmem %s1, %s344
      $region56: #{encoder_decoder_forward.18} parent=47 // pred_fallthru
        _
      // Predicated region
      $region57: #{encoder_decoder_forward.18} parent=47 // pred_check
        %p346 = pneg %p89
      $region58: #{encoder_decoder_forward.18} parent=47 // pred_check_branch
        %348 = sbr.rel (%p346) target = $region60
      $region59: #{encoder_decoder_forward.18} parent=47 // pred_region
        %p349 = scmp.lt.s32.totalorder %s17, 1
        %s350 = scalar_select %p349, %s17, 1
        %s351 = scalar_lea.vmem %s2, %s350
      $region60: #{encoder_decoder_forward.18} parent=47 // pred_fallthru
        _
    $region48: #{encoder_decoder_forward.18} parent=5 // pred_fallthru
      _
    %p352 = scmp.le.s32.totalorder 1, %s17
    %p353 = scmp.lt.s32.totalorder %s17, 3
    %p354 = pnand %p352, %p353
    %p355 = pneg %p354
    // Predicated region
    $region61: #{encoder_decoder_forward.18} parent=5 // pred_check
      _
    $region62: #{encoder_decoder_forward.18} parent=5 // pred_check_branch
      %357 = sbr.rel (%p354) target = $region64
    $region63: #{encoder_decoder_forward.18} parent=5 // pred_region
      %s358 = ssub.s32 %s17, 1
      %p359 = scmp.lt.s32.totalorder %s22, 1
      %s360 = scalar_select %p359, %s22, 1
      %s361 = smul.addr %s360, 8
      %s362 = scalar_lea.vmem %s0, %s361
      %p363 = pneg %p43
      %p364 = pneg %p40
      %p365 = scmp.lt.s32.totalorder %s22, 1
      %s366 = scalar_select %p365, %s22, 1
      %s367 = smul.addr %s366, 8
      %s368 = scalar_lea.vmem %s1, %s367
      %p369 = pneg %p69
      %p370 = pneg %p66
      %p371 = scmp.lt.s32.totalorder %s22, 1
      %s372 = scalar_select %p371, %s22, 1
      %s373 = scalar_lea.vmem %s2, %s372
      %p374 = pneg %p95
      %p375 = pneg %p92
      %p376 = pneg %p116
      %p377 = pneg %p113
      %p378 = pneg %p137
      %p379 = pneg %p134
      %p380 = pneg %p158
      %p381 = pneg %p155
      %p382 = pneg %p179
      %p383 = pneg %p176
      %p384 = pneg %p200
      %p385 = pneg %p197
      %p386 = pneg %p221
      %p387 = pneg %p218
      %p388 = pneg %p242
      %p389 = pneg %p239
      %p390 = pneg %p263
      %p391 = pneg %p260
      %p392 = pneg %p289
      %p393 = pneg %p286
      %p394 = scmp.lt.s32.totalorder %s22, 1
      %s395 = scalar_select %p394, %s22, 1
      %s396 = smul.addr %s395, 8
      %s397 = scalar_lea.vmem %s11, %s396
      %p398 = scmp.lt.s32.totalorder %s22, 1
      %s399 = scalar_select %p398, %s22, 1
      %s400 = smul.addr %s399, 8
      %s401 = scalar_lea.vmem %s0, %s400
      %p402 = scmp.lt.s32.totalorder %s22, 1
      %s403 = scalar_select %p402, %s22, 1
      %s404 = smul.addr %s403, 8
      %s405 = scalar_lea.vmem %s1, %s404
      %p406 = scmp.lt.s32.totalorder %s22, 1
      %s407 = scalar_select %p406, %s22, 1
      %s408 = scalar_lea.vmem %s2, %s407
      %p409 = scmp.lt.s32.totalorder %s22, 1
      %s410 = scalar_select %p409, %s22, 1
      %s411 = smul.addr %s410, 8
      %s412 = scalar_lea.vmem %s11, %s411
      %v414 = vld [vmem:[%s401] sm:$0xff]
      %v415 = vld [vmem:[%s3] sm:$0x1]
      %v416 = vld [vmem:[%s4] sm:$0x1]
      %vm417 = vcmask 261120
      %v418 = vsel %vm417, %v414, 0.0
      %419 = vadd.xlane.f32.xlu0 %v418
      %v420 = vpop.xlane.xlu0 %419
      %v421 = vrcp.pop 32.0
      %v422 = vmul.f32 %v420, %v421
      %v423 = vsub.f32 %v414, %v422
      %v424 = vmul.f32 %v423, %v423
      %v425 = vsel %vm417, %v424, 0.0
      %426 = vadd.xlane.f32.xlu0 %v425
      %v427 = vpop.xlane.xlu0 %426
      %v428 = vmul.f32 %v427, 0.032258064
      %v429 = vrsqrt.pop %v428
      %v430 = vmul.f32 %v428, %v429
      %vm431 = vcmp.eq.f32.partialorder %v428, inf
      %v432 = vsel %vm431, %v428, %v430
      %vm433 = vcmp.eq.f32.partialorder %v428, 0.0
      %v434 = vand.u32 %v428, 2147483648
      %v435 = vsel %vm433, %v434, %v432
      %v436 = vadd.f32 %v435, 1e-06
      %v437 = vrcp.pop %v436
      %v438 = vmul.f32 1.0, %v437
      %v440 = vlaneseq
      %v441 = vshrl.u32 %v440, 7
      %v442 = vsub.s32 0, %v441
      %v443 = vrot.slane %v415, %v442
      %v445 = vmul.f32 %v443, %v423
      %v446 = vmul.f32 %v445, %v438
      %v448 = vlaneseq
      %v449 = vshrl.u32 %v448, 7
      %v450 = vsub.s32 0, %v449
      %v451 = vrot.slane %v416, %v450
      %v453 = vadd.f32 %v446, %v451
      %v454 = vld [vmem:[%s405] sm:$0xff]
      %v455 = vpack.c.bf16 %v453, %v453
      %v456 = vld [vmem:[%s5] sm:$0xf]
      %v457 = vld [vmem:[%s5 + $0x4] sm:$0xf]
      %v458 = vld [vmem:[%s5 + $0x8] sm:$0xf]
      %v459 = vld [vmem:[%s5 + $0xc] sm:$0xf]
      %v460 = vld [vmem:[%s6] sm:$0x1]
      %v462 = vlaneseq
      %v463 = vshrl.u32 %v462, 7
      %v464 = vsub.s32 0, %v463
      %v465 = vrot.slane %v460, %v464
      %v471 = vunpack.c.l.b16 %v456
      %v472 = vunpack.c.l.b16 %v457
      %v473 = vunpack.c.l.b16 %v458
      %v474 = vunpack.c.l.b16 %v459
      %v475 = vpack.c.b16 %v472, %v471
      %v476 = vpack.c.b16 %v474, %v473
      %v480 = vsel %vm417, %v455, 0
      %482 = vmatprep.subr.bf16.mxu0 0
      %483 = vmatpush1.bf16.msra.mxu0 0
      %484 = vmatprep.subr.bf16.mxu0 0
      %485 = vmatpush1.bf16.msra.mxu0 0
      %486 = vmatprep.subr.bf16.mxu0 0
      %487 = vmatpush1.bf16.msra.mxu0 0
      %488 = vmatprep.subr.bf16.mxu0 0
      %489 = vmatpush1.bf16.msra.mxu0 0
      %490 = vmatprep.subr.bf16.mxu0 0
      %491 = vmatpush1.bf16.msra.mxu0 0
      %492 = vmatprep.subr.bf16.mxu0 0
      %493 = vmatpush1.bf16.msra.mxu0 0
      %494 = vmatprep.subr.bf16.mxu0 0
      %495 = vmatpush1.bf16.msra.mxu0 %v476
      %496 = vmatprep.subr.bf16.mxu0 0
      %497 = vmatpush1.bf16.msra.mxu0 %v475
      %498 = vmatprep.subr.bf16.mxu0 0
      %499 = vmatpush2.bf16.msra.mxu0 0
      %500 = vmatprep.subr.bf16.mxu0 0
      %501 = vmatpush2.bf16.msra.mxu0 0
      %502 = vmatprep.subr.bf16.mxu0 0
      %503 = vmatpush2.bf16.msra.mxu0 0
      %504 = vmatprep.subr.bf16.mxu0 0
      %505 = vmatpush2.bf16.msra.mxu0 0
      %506 = vmatprep.subr.bf16.mxu0 0
      %507 = vmatpush2.bf16.msra.mxu0 0
      %508 = vmatprep.subr.bf16.mxu0 0
      %509 = vmatpush2.bf16.msra.mxu0 0
      %510 = vmatprep.subr.bf16.mxu0 0
      %511 = vmatpush2.bf16.msra.mxu0 0
      %512 = vmatprep.subr.bf16.mxu0 0
      %513 = vmatpush2.bf16.msra.mxu0 0
      %514 = vmatprep.mubr.bf16.mxu0 0
      %515 = vmatmul.mubr.bf16.gmra.mxu0 %v480
      %v516 = vpop.f32.mrf.mxu0
      %v517 = vadd.f32 %v465, %v516
      %v518 = vpop.f32.mrf.mxu0
      %v519 = vpop.f32.mrf.mxu0
      %v520 = vpop.f32.mrf.mxu0
      %521 = vdwg.mxu0
      %v522 = vpack.c.bf16 %v454, %v454
      %v523 = vld [vmem:[%s7] sm:$0xf]
      %v524 = vld [vmem:[%s7 + $0x4] sm:$0xf]
      %v525 = vld [vmem:[%s7 + $0x8] sm:$0xf]
      %v526 = vld [vmem:[%s7 + $0xc] sm:$0xf]
      %v527 = vld [vmem:[%s8] sm:$0x1]
      %v529 = vlaneseq
      %v530 = vshrl.u32 %v529, 7
      %v531 = vsub.s32 0, %v530
      %v532 = vrot.slane %v527, %v531
      %v538 = vunpack.c.l.b16 %v523
      %v539 = vunpack.c.l.b16 %v524
      %v540 = vunpack.c.l.b16 %v525
      %v541 = vunpack.c.l.b16 %v526
      %v542 = vpack.c.b16 %v539, %v538
      %v543 = vpack.c.b16 %v541, %v540
      %v547 = vsel %vm417, %v522, 0
      %549 = vmatprep.subr.bf16.mxu0 0
      %550 = vmatpush1.bf16.msra.mxu0 0
      %551 = vmatprep.subr.bf16.mxu0 0
      %552 = vmatpush1.bf16.msra.mxu0 0
      %553 = vmatprep.subr.bf16.mxu0 0
      %554 = vmatpush1.bf16.msra.mxu0 0
      %555 = vmatprep.subr.bf16.mxu0 0
      %556 = vmatpush1.bf16.msra.mxu0 0
      %557 = vmatprep.subr.bf16.mxu0 0
      %558 = vmatpush1.bf16.msra.mxu0 0
      %559 = vmatprep.subr.bf16.mxu0 0
      %560 = vmatpush1.bf16.msra.mxu0 0
      %561 = vmatprep.subr.bf16.mxu0 0
      %562 = vmatpush1.bf16.msra.mxu0 %v543
      %563 = vmatprep.subr.bf16.mxu0 0
      %564 = vmatpush1.bf16.msra.mxu0 %v542
      %565 = vmatprep.subr.bf16.mxu0 0
      %566 = vmatpush2.bf16.msra.mxu0 0
      %567 = vmatprep.subr.bf16.mxu0 0
      %568 = vmatpush2.bf16.msra.mxu0 0
      %569 = vmatprep.subr.bf16.mxu0 0
      %570 = vmatpush2.bf16.msra.mxu0 0
      %571 = vmatprep.subr.bf16.mxu0 0
      %572 = vmatpush2.bf16.msra.mxu0 0
      %573 = vmatprep.subr.bf16.mxu0 0
      %574 = vmatpush2.bf16.msra.mxu0 0
      %575 = vmatprep.subr.bf16.mxu0 0
      %576 = vmatpush2.bf16.msra.mxu0 0
      %577 = vmatprep.subr.bf16.mxu0 0
      %578 = vmatpush2.bf16.msra.mxu0 0
      %579 = vmatprep.subr.bf16.mxu0 0
      %580 = vmatpush2.bf16.msra.mxu0 0
      %581 = vmatprep.mubr.bf16.mxu0 0
      %582 = vmatmul.mubr.bf16.gmra.mxu0 %v547
      %v583 = vpop.f32.mrf.mxu0
      %v584 = vadd.f32 %v532, %v583
      %v585 = vpop.f32.mrf.mxu0
      %v586 = vpop.f32.mrf.mxu0
      %v587 = vpop.f32.mrf.mxu0
      %588 = vdwg.mxu0
      %v589 = vmul.f32 %v517, 0.35355338
      %v590 = vpack.c.bf16 %v589, %v589
      %v591 = vpack.c.bf16 %v584, %v584
      %v592 = vld [vmem:[%s408] sm:$0x1]
      %v594 = vlaneseq
      %v595 = vshrl.u32 %v594, 7
      %v596 = vsub.s32 0, %v595
      %v597 = vrot.slane %v592, %v596
      %vm599 = vcmp.gt.f32.partialorder %v597, 0.0
      %vm600 = vcmask 64512
      %v602 = vsel %vm600, %v590, 0
      %v605 = vsel %vm600, %v591, 0
      %607 = vmatprep.subr.bf16.mxu0 0
      %608 = vmatpush1.bf16.xpose.msra.mxu0 0
      %609 = vmatprep.subr.bf16.mxu0 0
      %610 = vmatpush1.bf16.xpose.msra.mxu0 0
      %611 = vmatprep.subr.bf16.mxu0 0
      %612 = vmatpush1.bf16.xpose.msra.mxu0 0
      %613 = vmatprep.subr.bf16.mxu0 0
      %614 = vmatpush1.bf16.xpose.msra.mxu0 0
      %615 = vmatprep.subr.bf16.mxu0 0
      %616 = vmatpush1.bf16.xpose.msra.mxu0 0
      %617 = vmatprep.subr.bf16.mxu0 0
      %618 = vmatpush1.bf16.xpose.msra.mxu0 0
      %619 = vmatprep.subr.bf16.mxu0 0
      %620 = vmatpush1.bf16.xpose.msra.mxu0 0
      %621 = vmatprep.subr.bf16.mxu0 0
      %622 = vmatpush1.bf16.xpose.msra.mxu0 %v605
      %623 = vmatprep.subr.bf16.mxu0 0
      %624 = vmatpush2.bf16.xpose.msra.mxu0 0
      %625 = vmatprep.subr.bf16.mxu0 0
      %626 = vmatpush2.bf16.xpose.msra.mxu0 0
      %627 = vmatprep.subr.bf16.mxu0 0
      %628 = vmatpush2.bf16.xpose.msra.mxu0 0
      %629 = vmatprep.subr.bf16.mxu0 0
      %630 = vmatpush2.bf16.xpose.msra.mxu0 0
      %631 = vmatprep.subr.bf16.mxu0 0
      %632 = vmatpush2.bf16.xpose.msra.mxu0 0
      %633 = vmatprep.subr.bf16.mxu0 0
      %634 = vmatpush2.bf16.xpose.msra.mxu0 0
      %635 = vmatprep.subr.bf16.mxu0 0
      %636 = vmatpush2.bf16.xpose.msra.mxu0 0
      %637 = vmatprep.subr.bf16.mxu0 0
      %638 = vmatpush2.bf16.xpose.msra.mxu0 0
      %639 = vmatprep.mubr.bf16.mxu0 0
      %640 = vmatmul.mubr.bf16.gmra.mxu0 %v602
      %v641 = vpop.f32.mrf.mxu0
      %v642 = vadd.f32 0.0, %v641
      %v643 = vpop.f32.mrf.mxu0
      %v644 = vpop.f32.mrf.mxu0
      %v645 = vpop.f32.mrf.mxu0
      %646 = vdwg.mxu0
      %v647 = vsel %vm599, %v642, -1e+09
      %v648 = vsel %vm600, %v647, -inf
      %649 = vmax.xlane.f32.xlu0 %v648
      %v650 = vpop.xlane.xlu0 %649
      %v651 = vsub.f32 %v647, %v650
      %v652 = vmul.f32 %v651, 1.442695
      %v653 = vpow.pop %v652
      %v654 = vsel %vm600, %v653, 0.0
      %655 = vadd.xlane.f32.xlu0 %v654
      %v656 = vpop.xlane.xlu0 %655
      %v657 = vrcp.pop %v656
      %v658 = vmul.f32 %v653, %v657
      %v659 = vpack.c.bf16 %v658, %v658
      %661 = vrot.lane.b32.xlu0 %v591, 96
      %v662 = vpop.permute.xlu0 %661
      %v664 = vsel %vm600, %v659, 0
      %vm666 = vcmask 1043456
      %v668 = vsel %vm666, %v662, 0
      %670 = vmatprep.subr.bf16.mxu0 0
      %671 = vmatpush1.bf16.msra.mxu0 0
      %672 = vmatprep.subr.bf16.mxu0 0
      %673 = vmatpush1.bf16.msra.mxu0 0
      %674 = vmatprep.subr.bf16.mxu0 0
      %675 = vmatpush1.bf16.msra.mxu0 0
      %676 = vmatprep.subr.bf16.mxu0 0
      %677 = vmatpush1.bf16.msra.mxu0 0
      %678 = vmatprep.subr.bf16.mxu0 0
      %679 = vmatpush1.bf16.msra.mxu0 0
      %680 = vmatprep.subr.bf16.mxu0 0
      %681 = vmatpush1.bf16.msra.mxu0 0
      %682 = vmatprep.subr.bf16.mxu0 0
      %683 = vmatpush1.bf16.msra.mxu0 0
      %684 = vmatprep.subr.bf16.mxu0 0
      %685 = vmatpush1.bf16.msra.mxu0 %v668
      %686 = vmatprep.subr.bf16.mxu0 0
      %687 = vmatpush2.bf16.msra.mxu0 0
      %688 = vmatprep.subr.bf16.mxu0 0
      %689 = vmatpush2.bf16.msra.mxu0 0
      %690 = vmatprep.subr.bf16.mxu0 0
      %691 = vmatpush2.bf16.msra.mxu0 0
      %692 = vmatprep.subr.bf16.mxu0 0
      %693 = vmatpush2.bf16.msra.mxu0 0
      %694 = vmatprep.subr.bf16.mxu0 0
      %695 = vmatpush2.bf16.msra.mxu0 0
      %696 = vmatprep.subr.bf16.mxu0 0
      %697 = vmatpush2.bf16.msra.mxu0 0
      %698 = vmatprep.subr.bf16.mxu0 0
      %699 = vmatpush2.bf16.msra.mxu0 0
      %700 = vmatprep.subr.bf16.mxu0 0
      %701 = vmatpush2.bf16.msra.mxu0 0
      %702 = vmatprep.mubr.bf16.mxu0 0
      %703 = vmatmul.mubr.bf16.gmra.mxu0 %v664
      %v704 = vpop.f32.mrf.mxu0
      %v705 = vadd.f32 0.0, %v704
      %v706 = vpop.f32.mrf.mxu0
      %v707 = vpop.f32.mrf.mxu0
      %v708 = vpop.f32.mrf.mxu0
      %709 = vdwg.mxu0
      %711 = vrot.lane.b32.xlu0 %v590, 120
      %v712 = vpop.permute.xlu0 %711
      %713 = vrot.lane.b32.xlu0 %v591, 120
      %v714 = vpop.permute.xlu0 %713
      %v716 = vsel %vm600, %v712, 0
      %v719 = vsel %vm600, %v714, 0
      %721 = vmatprep.subr.bf16.mxu0 0
      %722 = vmatpush1.bf16.xpose.msra.mxu0 0
      %723 = vmatprep.subr.bf16.mxu0 0
      %724 = vmatpush1.bf16.xpose.msra.mxu0 0
      %725 = vmatprep.subr.bf16.mxu0 0
      %726 = vmatpush1.bf16.xpose.msra.mxu0 0
      %727 = vmatprep.subr.bf16.mxu0 0
      %728 = vmatpush1.bf16.xpose.msra.mxu0 0
      %729 = vmatprep.subr.bf16.mxu0 0
      %730 = vmatpush1.bf16.xpose.msra.mxu0 0
      %731 = vmatprep.subr.bf16.mxu0 0
      %732 = vmatpush1.bf16.xpose.msra.mxu0 0
      %733 = vmatprep.subr.bf16.mxu0 0
      %734 = vmatpush1.bf16.xpose.msra.mxu0 0
      %735 = vmatprep.subr.bf16.mxu0 0
      %736 = vmatpush1.bf16.xpose.msra.mxu0 %v719
      %737 = vmatprep.subr.bf16.mxu0 0
      %738 = vmatpush2.bf16.xpose.msra.mxu0 0
      %739 = vmatprep.subr.bf16.mxu0 0
      %740 = vmatpush2.bf16.xpose.msra.mxu0 0
      %741 = vmatprep.subr.bf16.mxu0 0
      %742 = vmatpush2.bf16.xpose.msra.mxu0 0
      %743 = vmatprep.subr.bf16.mxu0 0
      %744 = vmatpush2.bf16.xpose.msra.mxu0 0
      %745 = vmatprep.subr.bf16.mxu0 0
      %746 = vmatpush2.bf16.xpose.msra.mxu0 0
      %747 = vmatprep.subr.bf16.mxu0 0
      %748 = vmatpush2.bf16.xpose.msra.mxu0 0
      %749 = vmatprep.subr.bf16.mxu0 0
      %750 = vmatpush2.bf16.xpose.msra.mxu0 0
      %751 = vmatprep.subr.bf16.mxu0 0
      %752 = vmatpush2.bf16.xpose.msra.mxu0 0
      %753 = vmatprep.mubr.bf16.mxu0 0
      %754 = vmatmul.mubr.bf16.gmra.mxu0 %v716
      %v755 = vpop.f32.mrf.mxu0
      %v756 = vadd.f32 0.0, %v755
      %v757 = vpop.f32.mrf.mxu0
      %v758 = vpop.f32.mrf.mxu0
      %v759 = vpop.f32.mrf.mxu0
      %760 = vdwg.mxu0
      %v761 = vsel %vm599, %v756, -1e+09
      %v762 = vsel %vm600, %v761, -inf
      %763 = vmax.xlane.f32.xlu0 %v762
      %v764 = vpop.xlane.xlu0 %763
      %v765 = vsub.f32 %v761, %v764
      %v766 = vmul.f32 %v765, 1.442695
      %v767 = vpow.pop %v766
      %v768 = vsel %vm600, %v767, 0.0
      %769 = vadd.xlane.f32.xlu0 %v768
      %v770 = vpop.xlane.xlu0 %769
      %v771 = vrcp.pop %v770
      %v772 = vmul.f32 %v767, %v771
      %v773 = vpack.c.bf16 %v772, %v772
      %774 = vrot.lane.b32.xlu0 %v591, 88
      %v775 = vpop.permute.xlu0 %774
      %v777 = vsel %vm600, %v773, 0
      %v780 = vsel %vm666, %v775, 0
      %782 = vmatprep.subr.bf16.mxu0 0
      %783 = vmatpush1.bf16.msra.mxu0 0
      %784 = vmatprep.subr.bf16.mxu0 0
      %785 = vmatpush1.bf16.msra.mxu0 0
      %786 = vmatprep.subr.bf16.mxu0 0
      %787 = vmatpush1.bf16.msra.mxu0 0
      %788 = vmatprep.subr.bf16.mxu0 0
      %789 = vmatpush1.bf16.msra.mxu0 0
      %790 = vmatprep.subr.bf16.mxu0 0
      %791 = vmatpush1.bf16.msra.mxu0 0
      %792 = vmatprep.subr.bf16.mxu0 0
      %793 = vmatpush1.bf16.msra.mxu0 0
      %794 = vmatprep.subr.bf16.mxu0 0
      %795 = vmatpush1.bf16.msra.mxu0 0
      %796 = vmatprep.subr.bf16.mxu0 0
      %797 = vmatpush1.bf16.msra.mxu0 %v780
      %798 = vmatprep.subr.bf16.mxu0 0
      %799 = vmatpush2.bf16.msra.mxu0 0
      %800 = vmatprep.subr.bf16.mxu0 0
      %801 = vmatpush2.bf16.msra.mxu0 0
      %802 = vmatprep.subr.bf16.mxu0 0
      %803 = vmatpush2.bf16.msra.mxu0 0
      %804 = vmatprep.subr.bf16.mxu0 0
      %805 = vmatpush2.bf16.msra.mxu0 0
      %806 = vmatprep.subr.bf16.mxu0 0
      %807 = vmatpush2.bf16.msra.mxu0 0
      %808 = vmatprep.subr.bf16.mxu0 0
      %809 = vmatpush2.bf16.msra.mxu0 0
      %810 = vmatprep.subr.bf16.mxu0 0
      %811 = vmatpush2.bf16.msra.mxu0 0
      %812 = vmatprep.subr.bf16.mxu0 0
      %813 = vmatpush2.bf16.msra.mxu0 0
      %814 = vmatprep.mubr.bf16.mxu0 0
      %815 = vmatmul.mubr.bf16.gmra.mxu0 %v777
      %v816 = vpop.f32.mrf.mxu0
      %v817 = vadd.f32 0.0, %v816
      %v818 = vpop.f32.mrf.mxu0
      %v819 = vpop.f32.mrf.mxu0
      %v820 = vpop.f32.mrf.mxu0
      %821 = vdwg.mxu0
      %822 = vrot.lane.b32.xlu0 %v590, 112
      %v823 = vpop.permute.xlu0 %822
      %824 = vrot.lane.b32.xlu0 %v591, 112
      %v825 = vpop.permute.xlu0 %824
      %v827 = vsel %vm600, %v823, 0
      %v830 = vsel %vm600, %v825, 0
      %832 = vmatprep.subr.bf16.mxu0 0
      %833 = vmatpush1.bf16.xpose.msra.mxu0 0
      %834 = vmatprep.subr.bf16.mxu0 0
      %835 = vmatpush1.bf16.xpose.msra.mxu0 0
      %836 = vmatprep.subr.bf16.mxu0 0
      %837 = vmatpush1.bf16.xpose.msra.mxu0 0
      %838 = vmatprep.subr.bf16.mxu0 0
      %839 = vmatpush1.bf16.xpose.msra.mxu0 0
      %840 = vmatprep.subr.bf16.mxu0 0
      %841 = vmatpush1.bf16.xpose.msra.mxu0 0
      %842 = vmatprep.subr.bf16.mxu0 0
      %843 = vmatpush1.bf16.xpose.msra.mxu0 0
      %844 = vmatprep.subr.bf16.mxu0 0
      %845 = vmatpush1.bf16.xpose.msra.mxu0 0
      %846 = vmatprep.subr.bf16.mxu0 0
      %847 = vmatpush1.bf16.xpose.msra.mxu0 %v830
      %848 = vmatprep.subr.bf16.mxu0 0
      %849 = vmatpush2.bf16.xpose.msra.mxu0 0
      %850 = vmatprep.subr.bf16.mxu0 0
      %851 = vmatpush2.bf16.xpose.msra.mxu0 0
      %852 = vmatprep.subr.bf16.mxu0 0
      %853 = vmatpush2.bf16.xpose.msra.mxu0 0
      %854 = vmatprep.subr.bf16.mxu0 0
      %855 = vmatpush2.bf16.xpose.msra.mxu0 0
      %856 = vmatprep.subr.bf16.mxu0 0
      %857 = vmatpush2.bf16.xpose.msra.mxu0 0
      %858 = vmatprep.subr.bf16.mxu0 0
      %859 = vmatpush2.bf16.xpose.msra.mxu0 0
      %860 = vmatprep.subr.bf16.mxu0 0
      %861 = vmatpush2.bf16.xpose.msra.mxu0 0
      %862 = vmatprep.subr.bf16.mxu0 0
      %863 = vmatpush2.bf16.xpose.msra.mxu0 0
      %864 = vmatprep.mubr.bf16.mxu0 0
      %865 = vmatmul.mubr.bf16.gmra.mxu0 %v827
      %v866 = vpop.f32.mrf.mxu0
      %v867 = vadd.f32 0.0, %v866
      %v868 = vpop.f32.mrf.mxu0
      %v869 = vpop.f32.mrf.mxu0
      %v870 = vpop.f32.mrf.mxu0
      %871 = vdwg.mxu0
      %v872 = vsel %vm599, %v867, -1e+09
      %v873 = vsel %vm600, %v872, -inf
      %874 = vmax.xlane.f32.xlu0 %v873
      %v875 = vpop.xlane.xlu0 %874
      %v876 = vsub.f32 %v872, %v875
      %v877 = vmul.f32 %v876, 1.442695
      %v878 = vpow.pop %v877
      %v879 = vsel %vm600, %v878, 0.0
      %880 = vadd.xlane.f32.xlu0 %v879
      %v881 = vpop.xlane.xlu0 %880
      %v882 = vrcp.pop %v881
      %v883 = vmul.f32 %v878, %v882
      %v884 = vpack.c.bf16 %v883, %v883
      %885 = vrot.lane.b32.xlu0 %v591, 80
      %v886 = vpop.permute.xlu0 %885
      %v888 = vsel %vm600, %v884, 0
      %v891 = vsel %vm666, %v886, 0
      %893 = vmatprep.subr.bf16.mxu0 0
      %894 = vmatpush1.bf16.msra.mxu0 0
      %895 = vmatprep.subr.bf16.mxu0 0
      %896 = vmatpush1.bf16.msra.mxu0 0
      %897 = vmatprep.subr.bf16.mxu0 0
      %898 = vmatpush1.bf16.msra.mxu0 0
      %899 = vmatprep.subr.bf16.mxu0 0
      %900 = vmatpush1.bf16.msra.mxu0 0
      %901 = vmatprep.subr.bf16.mxu0 0
      %902 = vmatpush1.bf16.msra.mxu0 0
      %903 = vmatprep.subr.bf16.mxu0 0
      %904 = vmatpush1.bf16.msra.mxu0 0
      %905 = vmatprep.subr.bf16.mxu0 0
      %906 = vmatpush1.bf16.msra.mxu0 0
      %907 = vmatprep.subr.bf16.mxu0 0
      %908 = vmatpush1.bf16.msra.mxu0 %v891
      %909 = vmatprep.subr.bf16.mxu0 0
      %910 = vmatpush2.bf16.msra.mxu0 0
      %911 = vmatprep.subr.bf16.mxu0 0
      %912 = vmatpush2.bf16.msra.mxu0 0
      %913 = vmatprep.subr.bf16.mxu0 0
      %914 = vmatpush2.bf16.msra.mxu0 0
      %915 = vmatprep.subr.bf16.mxu0 0
      %916 = vmatpush2.bf16.msra.mxu0 0
      %917 = vmatprep.subr.bf16.mxu0 0
      %918 = vmatpush2.bf16.msra.mxu0 0
      %919 = vmatprep.subr.bf16.mxu0 0
      %920 = vmatpush2.bf16.msra.mxu0 0
      %921 = vmatprep.subr.bf16.mxu0 0
      %922 = vmatpush2.bf16.msra.mxu0 0
      %923 = vmatprep.subr.bf16.mxu0 0
      %924 = vmatpush2.bf16.msra.mxu0 0
      %925 = vmatprep.mubr.bf16.mxu0 0
      %926 = vmatmul.mubr.bf16.gmra.mxu0 %v888
      %v927 = vpop.f32.mrf.mxu0
      %v928 = vadd.f32 0.0, %v927
      %v929 = vpop.f32.mrf.mxu0
      %v930 = vpop.f32.mrf.mxu0
      %v931 = vpop.f32.mrf.mxu0
      %932 = vdwg.mxu0
      %933 = vrot.lane.b32.xlu0 %v590, 104
      %v934 = vpop.permute.xlu0 %933
      %935 = vrot.lane.b32.xlu0 %v591, 104
      %v936 = vpop.permute.xlu0 %935
      %v938 = vsel %vm600, %v934, 0
      %v941 = vsel %vm600, %v936, 0
      %943 = vmatprep.subr.bf16.mxu0 0
      %944 = vmatpush1.bf16.xpose.msra.mxu0 0
      %945 = vmatprep.subr.bf16.mxu0 0
      %946 = vmatpush1.bf16.xpose.msra.mxu0 0
      %947 = vmatprep.subr.bf16.mxu0 0
      %948 = vmatpush1.bf16.xpose.msra.mxu0 0
      %949 = vmatprep.subr.bf16.mxu0 0
      %950 = vmatpush1.bf16.xpose.msra.mxu0 0
      %951 = vmatprep.subr.bf16.mxu0 0
      %952 = vmatpush1.bf16.xpose.msra.mxu0 0
      %953 = vmatprep.subr.bf16.mxu0 0
      %954 = vmatpush1.bf16.xpose.msra.mxu0 0
      %955 = vmatprep.subr.bf16.mxu0 0
      %956 = vmatpush1.bf16.xpose.msra.mxu0 0
      %957 = vmatprep.subr.bf16.mxu0 0
      %958 = vmatpush1.bf16.xpose.msra.mxu0 %v941
      %959 = vmatprep.subr.bf16.mxu0 0
      %960 = vmatpush2.bf16.xpose.msra.mxu0 0
      %961 = vmatprep.subr.bf16.mxu0 0
      %962 = vmatpush2.bf16.xpose.msra.mxu0 0
      %963 = vmatprep.subr.bf16.mxu0 0
      %964 = vmatpush2.bf16.xpose.msra.mxu0 0
      %965 = vmatprep.subr.bf16.mxu0 0
      %966 = vmatpush2.bf16.xpose.msra.mxu0 0
      %967 = vmatprep.subr.bf16.mxu0 0
      %968 = vmatpush2.bf16.xpose.msra.mxu0 0
      %969 = vmatprep.subr.bf16.mxu0 0
      %970 = vmatpush2.bf16.xpose.msra.mxu0 0
      %971 = vmatprep.subr.bf16.mxu0 0
      %972 = vmatpush2.bf16.xpose.msra.mxu0 0
      %973 = vmatprep.subr.bf16.mxu0 0
      %974 = vmatpush2.bf16.xpose.msra.mxu0 0
      %975 = vmatprep.mubr.bf16.mxu0 0
      %976 = vmatmul.mubr.bf16.gmra.mxu0 %v938
      %v977 = vpop.f32.mrf.mxu0
      %v978 = vadd.f32 0.0, %v977
      %v979 = vpop.f32.mrf.mxu0
      %v980 = vpop.f32.mrf.mxu0
      %v981 = vpop.f32.mrf.mxu0
      %982 = vdwg.mxu0
      %v983 = vsel %vm599, %v978, -1e+09
      %v984 = vsel %vm600, %v983, -inf
      %985 = vmax.xlane.f32.xlu0 %v984
      %v986 = vpop.xlane.xlu0 %985
      %v987 = vsub.f32 %v983, %v986
      %v988 = vmul.f32 %v987, 1.442695
      %v989 = vpow.pop %v988
      %v990 = vsel %vm600, %v989, 0.0
      %991 = vadd.xlane.f32.xlu0 %v990
      %v992 = vpop.xlane.xlu0 %991
      %v993 = vrcp.pop %v992
      %v994 = vmul.f32 %v989, %v993
      %v995 = vpack.c.bf16 %v994, %v994
      %996 = vrot.lane.b32.xlu0 %v591, 72
      %v997 = vpop.permute.xlu0 %996
      %v999 = vsel %vm600, %v995, 0
      %v1002 = vsel %vm666, %v997, 0
      %1004 = vmatprep.subr.bf16.mxu0 0
      %1005 = vmatpush1.bf16.msra.mxu0 0
      %1006 = vmatprep.subr.bf16.mxu0 0
      %1007 = vmatpush1.bf16.msra.mxu0 0
      %1008 = vmatprep.subr.bf16.mxu0 0
      %1009 = vmatpush1.bf16.msra.mxu0 0
      %1010 = vmatprep.subr.bf16.mxu0 0
      %1011 = vmatpush1.bf16.msra.mxu0 0
      %1012 = vmatprep.subr.bf16.mxu0 0
      %1013 = vmatpush1.bf16.msra.mxu0 0
      %1014 = vmatprep.subr.bf16.mxu0 0
      %1015 = vmatpush1.bf16.msra.mxu0 0
      %1016 = vmatprep.subr.bf16.mxu0 0
      %1017 = vmatpush1.bf16.msra.mxu0 0
      %1018 = vmatprep.subr.bf16.mxu0 0
      %1019 = vmatpush1.bf16.msra.mxu0 %v1002
      %1020 = vmatprep.subr.bf16.mxu0 0
      %1021 = vmatpush2.bf16.msra.mxu0 0
      %1022 = vmatprep.subr.bf16.mxu0 0
      %1023 = vmatpush2.bf16.msra.mxu0 0
      %1024 = vmatprep.subr.bf16.mxu0 0
      %1025 = vmatpush2.bf16.msra.mxu0 0
      %1026 = vmatprep.subr.bf16.mxu0 0
      %1027 = vmatpush2.bf16.msra.mxu0 0
      %1028 = vmatprep.subr.bf16.mxu0 0
      %1029 = vmatpush2.bf16.msra.mxu0 0
      %1030 = vmatprep.subr.bf16.mxu0 0
      %1031 = vmatpush2.bf16.msra.mxu0 0
      %1032 = vmatprep.subr.bf16.mxu0 0
      %1033 = vmatpush2.bf16.msra.mxu0 0
      %1034 = vmatprep.subr.bf16.mxu0 0
      %1035 = vmatpush2.bf16.msra.mxu0 0
      %1036 = vmatprep.mubr.bf16.mxu0 0
      %1037 = vmatmul.mubr.bf16.gmra.mxu0 %v999
      %v1038 = vpop.f32.mrf.mxu0
      %v1039 = vadd.f32 0.0, %v1038
      %v1040 = vpop.f32.mrf.mxu0
      %v1041 = vpop.f32.mrf.mxu0
      %v1042 = vpop.f32.mrf.mxu0
      %1043 = vdwg.mxu0
      %1045 = vrot.lane.b32.xlu0 %v817, 8
      %v1046 = vpop.permute.xlu0 %1045
      %1049 = vrot.lane.b32.xlu0 %v928, 16
      %v1050 = vpop.permute.xlu0 %1049
      %1053 = vrot.lane.b32.xlu0 %v1039, 24
      %v1054 = vpop.permute.xlu0 %1053
      %v1056 = vsel %vm600, %v705, %v1046
      %vm1057 = vcmask 130048
      %v1058 = vsel %vm1057, %v1056, %v1050
      %vm1059 = vcmask 195584
      %v1060 = vsel %vm1059, %v1058, %v1054
      %v1061 = vpack.c.bf16 %v1060, %v1060
      %v1062 = vld [vmem:[%s9] sm:$0xf]
      %v1063 = vld [vmem:[%s9 + $0x4] sm:$0xf]
      %v1064 = vld [vmem:[%s9 + $0x8] sm:$0xf]
      %v1065 = vld [vmem:[%s9 + $0xc] sm:$0xf]
      %v1066 = vld [vmem:[%s10] sm:$0x1]
      %v1068 = vlaneseq
      %v1069 = vshrl.u32 %v1068, 7
      %v1070 = vsub.s32 0, %v1069
      %v1071 = vrot.slane %v1066, %v1070
      %v1077 = vunpack.c.l.b16 %v1062
      %v1078 = vunpack.c.l.b16 %v1063
      %v1079 = vunpack.c.l.b16 %v1064
      %v1080 = vunpack.c.l.b16 %v1065
      %v1081 = vpack.c.b16 %v1078, %v1077
      %v1082 = vpack.c.b16 %v1080, %v1079
      %v1086 = vsel %vm417, %v1061, 0
      %1088 = vmatprep.subr.bf16.mxu0 0
      %1089 = vmatpush1.bf16.msra.mxu0 0
      %1090 = vmatprep.subr.bf16.mxu0 0
      %1091 = vmatpush1.bf16.msra.mxu0 0
      %1092 = vmatprep.subr.bf16.mxu0 0
      %1093 = vmatpush1.bf16.msra.mxu0 0
      %1094 = vmatprep.subr.bf16.mxu0 0
      %1095 = vmatpush1.bf16.msra.mxu0 0
      %1096 = vmatprep.subr.bf16.mxu0 0
      %1097 = vmatpush1.bf16.msra.mxu0 0
      %1098 = vmatprep.subr.bf16.mxu0 0
      %1099 = vmatpush1.bf16.msra.mxu0 0
      %1100 = vmatprep.subr.bf16.mxu0 0
      %1101 = vmatpush1.bf16.msra.mxu0 %v1082
      %1102 = vmatprep.subr.bf16.mxu0 0
      %1103 = vmatpush1.bf16.msra.mxu0 %v1081
      %1104 = vmatprep.subr.bf16.mxu0 0
      %1105 = vmatpush2.bf16.msra.mxu0 0
      %1106 = vmatprep.subr.bf16.mxu0 0
      %1107 = vmatpush2.bf16.msra.mxu0 0
      %1108 = vmatprep.subr.bf16.mxu0 0
      %1109 = vmatpush2.bf16.msra.mxu0 0
      %1110 = vmatprep.subr.bf16.mxu0 0
      %1111 = vmatpush2.bf16.msra.mxu0 0
      %1112 = vmatprep.subr.bf16.mxu0 0
      %1113 = vmatpush2.bf16.msra.mxu0 0
      %1114 = vmatprep.subr.bf16.mxu0 0
      %1115 = vmatpush2.bf16.msra.mxu0 0
      %1116 = vmatprep.subr.bf16.mxu0 0
      %1117 = vmatpush2.bf16.msra.mxu0 0
      %1118 = vmatprep.subr.bf16.mxu0 0
      %1119 = vmatpush2.bf16.msra.mxu0 0
      %1120 = vmatprep.mubr.bf16.mxu0 0
      %1121 = vmatmul.mubr.bf16.gmra.mxu0 %v1086
      %v1122 = vpop.f32.mrf.mxu0
      %v1123 = vadd.f32 %v1071, %v1122
      %v1124 = vpop.f32.mrf.mxu0
      %v1125 = vpop.f32.mrf.mxu0
      %v1126 = vpop.f32.mrf.mxu0
      %1127 = vdwg.mxu0
      %v1128 = vadd.f32 %v414, %v1123
      %1129 = vst.msk [vmem:[%s412] sm:$0xff] %vm417, %v1128
      %p1130 = scmp.lt.s32.totalorder %s22, 1
      %s1131 = scalar_select %p1130, %s22, 1
      %s1132 = smul.addr %s1131, 8
      %s1133 = scalar_lea.vmem %s11, %s1132
      // Predicated region
      $region65: #{encoder_decoder_forward.18} parent=63 // pred_check
        %p1134 = pneg %p286
      $region66: #{encoder_decoder_forward.18} parent=63 // pred_check_branch
        %1136 = sbr.rel (%p1134) target = $region68
      $region67: #{encoder_decoder_forward.18} parent=63 // pred_region
        _
      $region68: #{encoder_decoder_forward.18} parent=63 // pred_fallthru
        _
    $region64: #{encoder_decoder_forward.18} parent=5 // pred_fallthru
      _
    %p1137 = scmp.le.s32.totalorder 2, %s17
    // Predicated region
    $region69: #{encoder_decoder_forward.18} parent=5 // pred_check
      %p1138 = pneg %p1137
    $region70: #{encoder_decoder_forward.18} parent=5 // pred_check_branch
      %1140 = sbr.rel (%p1138) target = $region72
    $region71: #{encoder_decoder_forward.18} parent=5 // pred_region
      %s1141 = ssub.s32 %s17, 2
      // Predicated region
      $region73: #{encoder_decoder_forward.18} parent=71 // pred_check
        %p1142 = pneg %p292
      $region74: #{encoder_decoder_forward.18} parent=71 // pred_check_branch
        %1144 = sbr.rel (%p1142) target = $region76
      $region75: #{encoder_decoder_forward.18} parent=71 // pred_region
        %p1145 = scmp.lt.s32.totalorder %s23, 1
        %s1146 = scalar_select %p1145, %s23, 1
        %s1147 = smul.addr %s1146, 8
        %s1148 = scalar_lea.vmem %s11, %s1147
      $region76: #{encoder_decoder_forward.18} parent=71 // pred_fallthru
        _
    $region72: #{encoder_decoder_forward.18} parent=5 // pred_fallthru
      _
  $region6: #{encoder_decoder_forward.18} parent=0 // loop_footer
    %s21 = sadd.s32 1, %s17
  $region7: #{encoder_decoder_forward.18} parent=0 // loop_footer_branch
    %16 = sbr.rel target = $region3
  $region8: #{encoder_decoder_forward.18} parent=0 // loop_exit
    _

</llo_original>
